<compile_context>
chip_gen: v7x
topology: tpu7x:2x2x1
jax: 0.10.0
libtpu: 0.0.40
codegen_flags: <defaults>
</compile_context>

<pallas_src>
import jax
import jax.numpy as jnp
import numpy as np
from jax.experimental import pallas as pl
from jax.experimental.pallas import tpu as pltpu

START_TAG = "START"
STOP_TAG = "STOP"

TAG_PAD = 8            # tag dim padded to the next sublane multiple (>= tag_size)
NEG_INF = -1e9


# ----------------------------------------------------------------------------
# Fused Pallas kernel: BiLSTM -> tag projection -> batched Viterbi recursion
# ----------------------------------------------------------------------------
def bilstm_crf_kernel(x_ref, wih_ref, whh_ref, b_ref, h0_ref, c0_ref,
                      wt_ref, bt_ref, transT_ref,
                      logits_ref, trellis_ref, bp_ref,
                      hf_scr, hb_scr):
    """Single grid step; everything lives in VMEM; T is small/static so all
    loops are fully unrolled.

    x_ref:      (T*B, E)        time-major flattened embeddings (row = t*B + b)
    wih_ref:    (E, 2*4*H2)     fused input weights, cols [fwd i|f|o|g, bwd i|f|o|g]
    whh_ref:    (2, H2, 4*H2)   recurrent weights per direction, gate-fused [i|f|o|g]
    b_ref:      (2, 1, 4*H2)    b_ih + b_hh per direction, gate-fused
    h0_ref:     (2, B, H2)      initial hidden (dir 0 = fwd, 1 = bwd)
    c0_ref:     (2, B, H2)      initial cell
    wt_ref:     (2, H2, TP)     hidden2tag weight split into fwd/bwd halves
    bt_ref:     (1, TP)         hidden2tag bias (padded cols = -1e9)
    transT_ref: (TP, TP)        transposed transitions: transT[j,i] = T[i,j]
    outputs:    logits / trellis (f32) and backpointers (int32), (T, B, TP)
    hf_scr/hb_scr: (T*B, H2)    VMEM scratch holding all hidden states
    """
    T, B, TP = logits_ref.shape
    H2 = h0_ref.shape[-1]
    G = 4 * H2

    # ---- hoisted input projection: ONE dense (T*B, E) @ (E, 2*4*H2) matmul ----
    xw_all = jnp.dot(x_ref[...], wih_ref[...],
                     preferred_element_type=jnp.float32)      # (T*B, 2*G)
    xw_f = xw_all[:, :G]                                      # forward half
    xw_b = xw_all[:, G:]                                      # backward half

    whh_f = whh_ref[0]
    whh_b = whh_ref[1]
    b_f = b_ref[0]
    b_b = b_ref[1]

    def cell(xw_t, h, c, whh_d, b_d):
        # One gate-fused recurrent matmul per step/direction; gate order [i,f,o,g].
        pre = xw_t + jnp.dot(h, whh_d, preferred_element_type=jnp.float32) + b_d
        sig = jax.nn.sigmoid(pre[:, :3 * H2])                 # i, f, o in one call
        i_g = sig[:, :H2]
        f_g = sig[:, H2:2 * H2]
        o_g = sig[:, 2 * H2:3 * H2]
        g_g = jnp.tanh(pre[:, 3 * H2:])
        c_new = f_g * c + i_g * g_g
        h_new = o_g * jnp.tanh(c_new)
        return h_new, c_new

    # ---- fused bidirectional recurrence (one unrolled time loop) -------------
    # TODO(synk): on v7x the two independent directions could be split across
    # the 2 TensorCores via pl.core_map; kept single-core for v5e/v6e portability.
    h_f = h0_ref[0].astype(jnp.float32)
    c_f = c0_ref[0].astype(jnp.float32)
    h_b = h0_ref[1].astype(jnp.float32)
    c_b = c0_ref[1].astype(jnp.float32)
    for t in range(T):
        h_f, c_f = cell(xw_f[t * B:(t + 1) * B, :], h_f, c_f, whh_f, b_f)
        hf_scr[pl.ds(t * B, B), :] = h_f
        tb = T - 1 - t
        h_b, c_b = cell(xw_b[tb * B:(tb + 1) * B, :], h_b, c_b, whh_b, b_b)
        hb_scr[pl.ds(tb * B, B), :] = h_b

    # ---- batched hidden2tag projection (one matmul per direction) ------------
    logits_all = (jnp.dot(hf_scr[...], wt_ref[0], preferred_element_type=jnp.float32)
                  + jnp.dot(hb_scr[...], wt_ref[1], preferred_element_type=jnp.float32)
                  + bt_ref[...])                               # (T*B, TP)
    for t in range(T):
        logits_ref[t] = logits_all[t * B:(t + 1) * B, :]

    # ---- batched Viterbi forward recursion ------------------------------------
    # v[b, j, i] = prev[b, i] + transitions[i, j]; max / first-argmax over i.
    # jnp.argmax is avoided (variadic-reduce lowering not guaranteed in Mosaic);
    # at TP=8 the iota+where+min first-argmax costs <1 vreg and 3 tiny VPU ops
    # and keeps deterministic first-index tie-breaking.
    transT = transT_ref[...]
    iota_i = jax.lax.broadcasted_iota(jnp.int32, (B, TP, TP), 2)
    prev = logits_ref[0]
    trellis_ref[0] = prev
    bp_ref[0] = jnp.zeros((B, TP), jnp.int32)
    for t in range(1, T):
        v = prev[:, None, :] + transT[None, :, :]              # (B, TP, TP)
        m = jnp.max(v, axis=-1)                                # max over i
        bp = jnp.min(jnp.where(v == m[:, :, None], iota_i, TP),
                     axis=-1).astype(jnp.int32)                # first argmax_i
        prev = logits_ref[t] + m                               # re-read from VMEM ref
        trellis_ref[t] = prev
        bp_ref[t] = bp


# ----------------------------------------------------------------------------
# Device-side forward (embedding gather + the single fused kernel), jitted
# ----------------------------------------------------------------------------
@jax.jit
def _device_forward(params, sentences):
    emb = jnp.take(params["embedding"], sentences.T, axis=0)   # (T, B, E)
    T, B, E = emb.shape
    x_flat = emb.astype(jnp.float32).reshape(T * B, E)         # row = t*B + b
    TP = params["transT_pad"].shape[0]
    H2 = params["h0"].shape[-1]
    return pl.pallas_call(
        bilstm_crf_kernel,
        out_shape=(jax.ShapeDtypeStruct((T, B, TP), jnp.float32),   # logits
                   jax.ShapeDtypeStruct((T, B, TP), jnp.float32),   # trellis
                   jax.ShapeDtypeStruct((T, B, TP), jnp.int32)),    # backptrs
        scratch_shapes=[pltpu.VMEM((T * B, H2), jnp.float32),       # fwd hiddens
                        pltpu.VMEM((T * B, H2), jnp.float32)],      # bwd hiddens
        compiler_params=pltpu.CompilerParams(
            vmem_limit_bytes=32 * 1024 * 1024),
    )(x_flat, params["wih_all"], params["whh"], params["b_gate"],
      params["h0"], params["c0"],
      params["wt_pad"], params["bt_pad"], params["transT_pad"])


# ----------------------------------------------------------------------------
# Parameters (mirrors the PyTorch module's initialisation)
# ----------------------------------------------------------------------------
def init_params(key, *, vocab_size, embedding_dim, hidden_dim, tag_map,
                batch_size):
    tag_size = len(tag_map)
    assert tag_size <= TAG_PAD
    H2 = hidden_dim // 2
    ks = jax.random.split(key, 16)
    kscale = 1.0 / np.sqrt(H2)

    transitions = jax.random.normal(ks[0], (tag_size, tag_size), jnp.float32)
    transitions = transitions.at[:, tag_map[START_TAG]].set(-1000.0)
    transitions = transitions.at[tag_map[STOP_TAG], :].set(-1000.0)

    # torch nn.LSTM gate order in weight rows is [i, f, g, o]; fuse as [i, f, o, g]
    order = (0, 1, 3, 2)

    def lstm_dir(k0, k1, k2, k3):
        w_ih = jax.random.uniform(k0, (4 * H2, embedding_dim), jnp.float32,
                                  -kscale, kscale)
        w_hh = jax.random.uniform(k1, (4 * H2, H2), jnp.float32,
                                  -kscale, kscale)
        b_ih = jax.random.uniform(k2, (4 * H2,), jnp.float32, -kscale, kscale)
        b_hh = jax.random.uniform(k3, (4 * H2,), jnp.float32, -kscale, kscale)

        def gsel(w):  # reorder gate blocks along dim 0
            return jnp.concatenate([w[g * H2:(g + 1) * H2] for g in order], axis=0)

        wih = gsel(w_ih).T                       # (E, 4*H2), cols [i|f|o|g]
        whh = gsel(w_hh).T                       # (H2, 4*H2)
        b = gsel(b_ih + b_hh).reshape(1, 4 * H2)
        return wih, whh, b

    wih_f, whh_f, b_f = lstm_dir(ks[2], ks[3], ks[4], ks[5])
    wih_b, whh_b, b_b = lstm_dir(ks[6], ks[7], ks[8], ks[9])

    hscale = 1.0 / np.sqrt(hidden_dim)
    w_tag = jax.random.uniform(ks[10], (tag_size, hidden_dim), jnp.float32,
                               -hscale, hscale)
    b_tag = jax.random.uniform(ks[11], (tag_size,), jnp.float32,
                               -hscale, hscale)

    # Padded tag-side parameters (padding can never win a max; sliced off on host).
    wt_pad = jnp.zeros((2, H2, TAG_PAD), jnp.float32)
    wt_pad = wt_pad.at[0, :, :tag_size].set(w_tag[:, :H2].T)
    wt_pad = wt_pad.at[1, :, :tag_size].set(w_tag[:, H2:].T)
    bt_pad = jnp.full((1, TAG_PAD), NEG_INF, jnp.float32)
    bt_pad = bt_pad.at[0, :tag_size].set(b_tag)
    transT_pad = jnp.zeros((TAG_PAD, TAG_PAD), jnp.float32)
    transT_pad = transT_pad.at[:tag_size, :tag_size].set(transitions.T)

    params = dict(
        embedding=jax.random.normal(ks[1], (vocab_size, embedding_dim),
                                    jnp.float32),
        transitions=transitions,
        wih_all=jnp.concatenate([wih_f, wih_b], axis=1),   # (E, 2*4*H2)
        whh=jnp.stack([whh_f, whh_b]),                     # (2, H2, 4*H2)
        b_gate=jnp.stack([b_f, b_b]),                      # (2, 1, 4*H2)
        wt_pad=wt_pad, bt_pad=bt_pad, transT_pad=transT_pad,
        # init_hidden(): uniform(-1, 1), shape (2*num_layer, B, H/2)
        h0=jax.random.uniform(ks[12], (2, batch_size, H2), jnp.float32, -1., 1.),
        c0=jax.random.uniform(ks[13], (2, batch_size, H2), jnp.float32, -1., 1.),
    )
    return params


# ----------------------------------------------------------------------------
# Full forward (device kernel + host backtracking / probs, matching PyTorch)
# ----------------------------------------------------------------------------
def _np_softmax(x):
    x = x - np.max(x)
    e = np.exp(x)
    return e / np.sum(e)


def bilstm_crf_forward(params, sentences, tag_size):
    B, T = sentences.shape
    logits, trellis, bp = _device_forward(params, sentences)

    # Single host round-trip for the whole batch; slice away the tag padding.
    trellis_h, bp_h = jax.device_get((trellis, bp))
    trellis_h = np.asarray(trellis_h)[:, :, :tag_size]      # (T, B, tag)
    bp_h = np.asarray(bp_h)[:, :, :tag_size]

    scores, paths, all_probs = [], [], []
    for b in range(B):
        tr = trellis_h[:, b, :]
        bpb = bp_h[:, b, :]
        # TODO(synk): data-dependent Viterbi back-tracking stays on the host.
        path = [int(np.argmax(tr[-1]))]
        for row in bpb[1:][::-1]:
            path.append(int(row[path[-1]]))
        path.reverse()
        probs_b = [float(_np_softmax(tr[i])[path[i]]) for i in range(T)]
        scores.append(float(np.max(tr[-1])))
        paths.append(path)
        all_probs.append(probs_b)

    # The reference module returns only the *last* sentence's probs (its
    # `probs` is overwritten inside the loop); keep that behavior.
    probs = all_probs[-1]
    return scores, paths, probs, (logits, trellis, bp)


# ----------------------------------------------------------------------------
# Main
# ----------------------------------------------------------------------------
if __name__ == "__main__":
    tag_map = {"B": 0, "I": 1, "O": 2, START_TAG: 3, STOP_TAG: 4}
    batch_size = 2
    seq_len = 8
    vocab_size = 20
    embedding_dim = 16
    hidden_dim = 32
    tag_size = len(tag_map)

    key = jax.random.PRNGKey(0)
    k_param, k_sent = jax.random.split(key)
    params = init_params(k_param, vocab_size=vocab_size,
                         embedding_dim=embedding_dim, hidden_dim=hidden_dim,
                         tag_map=tag_map, batch_size=batch_size)
    sentences = jax.random.randint(k_sent, (batch_size, seq_len), 0,
                                   vocab_size, dtype=jnp.int32)

    scores, paths, probs, device_arrays = bilstm_crf_forward(
        params, sentences, tag_size)
    jax.block_until_ready(device_arrays)

    assert len(scores) == batch_size
    assert len(paths) == batch_size and all(len(p) == seq_len for p in paths)
    assert all(0 <= t < tag_size for p in paths for t in p)
    assert len(probs) == seq_len
    print("KERNEL_OK")
</pallas_src>

<mosaic_0001>
module attributes {stable_mosaic.version = 11 : i64} {
  func.func @bilstm_crf_kernel(%arg0: memref<16x16xf32, #tpu.memory_space<vmem>>, %arg1: memref<16x128xf32, #tpu.memory_space<vmem>>, %arg2: memref<2x16x64xf32, #tpu.memory_space<vmem>>, %arg3: memref<2x1x64xf32, #tpu.memory_space<vmem>>, %arg4: memref<2x2x16xf32, #tpu.memory_space<vmem>>, %arg5: memref<2x2x16xf32, #tpu.memory_space<vmem>>, %arg6: memref<2x16x8xf32, #tpu.memory_space<vmem>>, %arg7: memref<1x8xf32, #tpu.memory_space<vmem>>, %arg8: memref<8x8xf32, #tpu.memory_space<vmem>>, %arg9: memref<8x2x8xf32, #tpu.memory_space<vmem>>, %arg10: memref<8x2x8xf32, #tpu.memory_space<vmem>>, %arg11: memref<8x2x8xi32, #tpu.memory_space<vmem>>, %arg12: memref<16x16xf32, #tpu.memory_space<vmem>>, %arg13: memref<16x16xf32, #tpu.memory_space<vmem>>) attributes {dimension_semantics = [], scalar_prefetch = 0 : i64, scratch_operands = 2 : i64, tpu.core_type = #tpu.core_type<tc>} {
    %c0 = arith.constant 0 : index
    %c0_0 = arith.constant 0 : index
    %0 = vector.load %arg0[%c0, %c0_0] : memref<16x16xf32, #tpu.memory_space<vmem>>, vector<16x16xf32>
    %c0_1 = arith.constant 0 : index
    %c0_2 = arith.constant 0 : index
    %1 = vector.load %arg1[%c0_1, %c0_2] : memref<16x128xf32, #tpu.memory_space<vmem>>, vector<16x128xf32>
    %cst = arith.constant dense<0.000000e+00> : vector<16x128xf32>
    %2 = tpu.matmul %0, %1, %cst {dimension_numbers = #tpu.dot_dimension_numbers<[1], [0], [0], [1], [0, 0, 1, 1], [], []>} : vector<16x16xf32>, vector<16x128xf32>, vector<16x128xf32> -> vector<16x128xf32>
    %3 = vector.extract_strided_slice %2 {offsets = [0, 0], sizes = [16, 64], strides = [1, 1]} : vector<16x128xf32> to vector<16x64xf32>
    %4 = vector.extract_strided_slice %2 {offsets = [0, 64], sizes = [16, 64], strides = [1, 1]} : vector<16x128xf32> to vector<16x64xf32>
    %c0_3 = arith.constant 0 : index
    %c0_4 = arith.constant 0 : index
    %c0_5 = arith.constant 0 : index
    %5 = vector.load %arg2[%c0_3, %c0_4, %c0_5] : memref<2x16x64xf32, #tpu.memory_space<vmem>>, vector<1x16x64xf32>
    %6 = vector.shape_cast %5 : vector<1x16x64xf32> to vector<16x64xf32>
    %c1 = arith.constant 1 : index
    %c0_6 = arith.constant 0 : index
    %c0_7 = arith.constant 0 : index
    %7 = vector.load %arg2[%c1, %c0_6, %c0_7] : memref<2x16x64xf32, #tpu.memory_space<vmem>>, vector<1x16x64xf32>
    %8 = vector.shape_cast %7 : vector<1x16x64xf32> to vector<16x64xf32>
    %c0_8 = arith.constant 0 : index
    %c0_9 = arith.constant 0 : index
    %c0_10 = arith.constant 0 : index
    %9 = vector.load %arg3[%c0_8, %c0_9, %c0_10] : memref<2x1x64xf32, #tpu.memory_space<vmem>>, vector<1x1x64xf32>
    %10 = vector.shape_cast %9 : vector<1x1x64xf32> to vector<1x64xf32>
    %c1_11 = arith.constant 1 : index
    %c0_12 = arith.constant 0 : index
    %c0_13 = arith.constant 0 : index
    %11 = vector.load %arg3[%c1_11, %c0_12, %c0_13] : memref<2x1x64xf32, #tpu.memory_space<vmem>>, vector<1x1x64xf32>
    %12 = vector.shape_cast %11 : vector<1x1x64xf32> to vector<1x64xf32>
    %c0_14 = arith.constant 0 : index
    %c0_15 = arith.constant 0 : index
    %c0_16 = arith.constant 0 : index
    %13 = vector.load %arg4[%c0_14, %c0_15, %c0_16] : memref<2x2x16xf32, #tpu.memory_space<vmem>>, vector<1x2x16xf32>
    %14 = vector.shape_cast %13 : vector<1x2x16xf32> to vector<2x16xf32>
    %c0_17 = arith.constant 0 : index
    %c0_18 = arith.constant 0 : index
    %c0_19 = arith.constant 0 : index
    %15 = vector.load %arg5[%c0_17, %c0_18, %c0_19] : memref<2x2x16xf32, #tpu.memory_space<vmem>>, vector<1x2x16xf32>
    %16 = vector.shape_cast %15 : vector<1x2x16xf32> to vector<2x16xf32>
    %c1_20 = arith.constant 1 : index
    %c0_21 = arith.constant 0 : index
    %c0_22 = arith.constant 0 : index
    %17 = vector.load %arg4[%c1_20, %c0_21, %c0_22] : memref<2x2x16xf32, #tpu.memory_space<vmem>>, vector<1x2x16xf32>
    %18 = vector.shape_cast %17 : vector<1x2x16xf32> to vector<2x16xf32>
    %c1_23 = arith.constant 1 : index
    %c0_24 = arith.constant 0 : index
    %c0_25 = arith.constant 0 : index
    %19 = vector.load %arg5[%c1_23, %c0_24, %c0_25] : memref<2x2x16xf32, #tpu.memory_space<vmem>>, vector<1x2x16xf32>
    %20 = vector.shape_cast %19 : vector<1x2x16xf32> to vector<2x16xf32>
    %21 = vector.extract_strided_slice %3 {offsets = [0, 0], sizes = [2, 64], strides = [1, 1]} : vector<16x64xf32> to vector<2x64xf32>
    %cst_26 = arith.constant dense<0.000000e+00> : vector<2x64xf32>
    %22 = tpu.matmul %14, %6, %cst_26 {dimension_numbers = #tpu.dot_dimension_numbers<[1], [0], [0], [1], [0, 0, 1, 1], [], []>} : vector<2x16xf32>, vector<16x64xf32>, vector<2x64xf32> -> vector<2x64xf32>
    %23 = arith.addf %21, %22 : vector<2x64xf32>
    %24 = vector.broadcast %10 : vector<1x64xf32> to vector<2x64xf32>
    %25 = arith.addf %23, %24 : vector<2x64xf32>
    %26 = vector.extract_strided_slice %25 {offsets = [0, 0], sizes = [2, 48], strides = [1, 1]} : vector<2x64xf32> to vector<2x48xf32>
    %27 = arith.negf %26 : vector<2x48xf32>
    %28 = math.exp %27 : vector<2x48xf32>
    %cst_27 = arith.constant 1.000000e+00 : f32
    %29 = vector.broadcast %cst_27 : f32 to vector<2x48xf32>
    %30 = arith.addf %29, %28 : vector<2x48xf32>
    %31 = arith.divf %29, %30 : vector<2x48xf32>
    %32 = vector.extract_strided_slice %31 {offsets = [0, 0], sizes = [2, 16], strides = [1, 1]} : vector<2x48xf32> to vector<2x16xf32>
    %33 = vector.extract_strided_slice %31 {offsets = [0, 16], sizes = [2, 16], strides = [1, 1]} : vector<2x48xf32> to vector<2x16xf32>
    %34 = vector.extract_strided_slice %31 {offsets = [0, 32], sizes = [2, 16], strides = [1, 1]} : vector<2x48xf32> to vector<2x16xf32>
    %35 = vector.extract_strided_slice %25 {offsets = [0, 48], sizes = [2, 16], strides = [1, 1]} : vector<2x64xf32> to vector<2x16xf32>
    %36 = math.tanh %35 : vector<2x16xf32>
    %37 = arith.mulf %33, %16 : vector<2x16xf32>
    %38 = arith.mulf %32, %36 : vector<2x16xf32>
    %39 = arith.addf %37, %38 : vector<2x16xf32>
    %40 = math.tanh %39 : vector<2x16xf32>
    %41 = arith.mulf %34, %40 : vector<2x16xf32>
    %c0_28 = arith.constant 0 : index
    %c0_29 = arith.constant 0 : index
    %42 = vector.load %arg12[%c0_28, %c0_29] : memref<16x16xf32, #tpu.memory_space<vmem>>, vector<2x16xf32>
    tpu.vector_store %arg12[%c0_28, %c0_29], %41 {strides = array<i32>} : memref<16x16xf32, #tpu.memory_space<vmem>>, vector<2x16xf32>,
    %43 = vector.extract_strided_slice %4 {offsets = [14, 0], sizes = [2, 64], strides = [1, 1]} : vector<16x64xf32> to vector<2x64xf32>
    %cst_30 = arith.constant dense<0.000000e+00> : vector<2x64xf32>
    %44 = tpu.matmul %18, %8, %cst_30 {dimension_numbers = #tpu.dot_dimension_numbers<[1], [0], [0], [1], [0, 0, 1, 1], [], []>} : vector<2x16xf32>, vector<16x64xf32>, vector<2x64xf32> -> vector<2x64xf32>
    %45 = arith.addf %43, %44 : vector<2x64xf32>
    %46 = vector.broadcast %12 : vector<1x64xf32> to vector<2x64xf32>
    %47 = arith.addf %45, %46 : vector<2x64xf32>
    %48 = vector.extract_strided_slice %47 {offsets = [0, 0], sizes = [2, 48], strides = [1, 1]} : vector<2x64xf32> to vector<2x48xf32>
    %49 = arith.negf %48 : vector<2x48xf32>
    %50 = math.exp %49 : vector<2x48xf32>
    %cst_31 = arith.constant 1.000000e+00 : f32
    %51 = vector.broadcast %cst_31 : f32 to vector<2x48xf32>
    %52 = arith.addf %51, %50 : vector<2x48xf32>
    %53 = arith.divf %51, %52 : vector<2x48xf32>
    %54 = vector.extract_strided_slice %53 {offsets = [0, 0], sizes = [2, 16], strides = [1, 1]} : vector<2x48xf32> to vector<2x16xf32>
    %55 = vector.extract_strided_slice %53 {offsets = [0, 16], sizes = [2, 16], strides = [1, 1]} : vector<2x48xf32> to vector<2x16xf32>
    %56 = vector.extract_strided_slice %53 {offsets = [0, 32], sizes = [2, 16], strides = [1, 1]} : vector<2x48xf32> to vector<2x16xf32>
    %57 = vector.extract_strided_slice %47 {offsets = [0, 48], sizes = [2, 16], strides = [1, 1]} : vector<2x64xf32> to vector<2x16xf32>
    %58 = math.tanh %57 : vector<2x16xf32>
    %59 = arith.mulf %55, %20 : vector<2x16xf32>
    %60 = arith.mulf %54, %58 : vector<2x16xf32>
    %61 = arith.addf %59, %60 : vector<2x16xf32>
    %62 = math.tanh %61 : vector<2x16xf32>
    %63 = arith.mulf %56, %62 : vector<2x16xf32>
    %c14 = arith.constant 14 : index
    %c0_32 = arith.constant 0 : index
    %64 = vector.load %arg13[%c14, %c0_32] : memref<16x16xf32, #tpu.memory_space<vmem>>, vector<2x16xf32>
    tpu.vector_store %arg13[%c14, %c0_32], %63 {strides = array<i32>} : memref<16x16xf32, #tpu.memory_space<vmem>>, vector<2x16xf32>,
    %65 = vector.extract_strided_slice %3 {offsets = [2, 0], sizes = [2, 64], strides = [1, 1]} : vector<16x64xf32> to vector<2x64xf32>
    %cst_33 = arith.constant dense<0.000000e+00> : vector<2x64xf32>
    %66 = tpu.matmul %41, %6, %cst_33 {dimension_numbers = #tpu.dot_dimension_numbers<[1], [0], [0], [1], [0, 0, 1, 1], [], []>} : vector<2x16xf32>, vector<16x64xf32>, vector<2x64xf32> -> vector<2x64xf32>
    %67 = arith.addf %65, %66 : vector<2x64xf32>
    %68 = vector.broadcast %10 : vector<1x64xf32> to vector<2x64xf32>
    %69 = arith.addf %67, %68 : vector<2x64xf32>
    %70 = vector.extract_strided_slice %69 {offsets = [0, 0], sizes = [2, 48], strides = [1, 1]} : vector<2x64xf32> to vector<2x48xf32>
    %71 = arith.negf %70 : vector<2x48xf32>
    %72 = math.exp %71 : vector<2x48xf32>
    %cst_34 = arith.constant 1.000000e+00 : f32
    %73 = vector.broadcast %cst_34 : f32 to vector<2x48xf32>
    %74 = arith.addf %73, %72 : vector<2x48xf32>
    %75 = arith.divf %73, %74 : vector<2x48xf32>
    %76 = vector.extract_strided_slice %75 {offsets = [0, 0], sizes = [2, 16], strides = [1, 1]} : vector<2x48xf32> to vector<2x16xf32>
    %77 = vector.extract_strided_slice %75 {offsets = [0, 16], sizes = [2, 16], strides = [1, 1]} : vector<2x48xf32> to vector<2x16xf32>
    %78 = vector.extract_strided_slice %75 {offsets = [0, 32], sizes = [2, 16], strides = [1, 1]} : vector<2x48xf32> to vector<2x16xf32>
    %79 = vector.extract_strided_slice %69 {offsets = [0, 48], sizes = [2, 16], strides = [1, 1]} : vector<2x64xf32> to vector<2x16xf32>
    %80 = math.tanh %79 : vector<2x16xf32>
    %81 = arith.mulf %77, %39 : vector<2x16xf32>
    %82 = arith.mulf %76, %80 : vector<2x16xf32>
    %83 = arith.addf %81, %82 : vector<2x16xf32>
    %84 = math.tanh %83 : vector<2x16xf32>
    %85 = arith.mulf %78, %84 : vector<2x16xf32>
    %c2 = arith.constant 2 : index
    %c0_35 = arith.constant 0 : index
    %86 = vector.load %arg12[%c2, %c0_35] : memref<16x16xf32, #tpu.memory_space<vmem>>, vector<2x16xf32>
    tpu.vector_store %arg12[%c2, %c0_35], %85 {strides = array<i32>} : memref<16x16xf32, #tpu.memory_space<vmem>>, vector<2x16xf32>,
    %87 = vector.extract_strided_slice %4 {offsets = [12, 0], sizes = [2, 64], strides = [1, 1]} : vector<16x64xf32> to vector<2x64xf32>
    %cst_36 = arith.constant dense<0.000000e+00> : vector<2x64xf32>
    %88 = tpu.matmul %63, %8, %cst_36 {dimension_numbers = #tpu.dot_dimension_numbers<[1], [0], [0], [1], [0, 0, 1, 1], [], []>} : vector<2x16xf32>, vector<16x64xf32>, vector<2x64xf32> -> vector<2x64xf32>
    %89 = arith.addf %87, %88 : vector<2x64xf32>
    %90 = vector.broadcast %12 : vector<1x64xf32> to vector<2x64xf32>
    %91 = arith.addf %89, %90 : vector<2x64xf32>
    %92 = vector.extract_strided_slice %91 {offsets = [0, 0], sizes = [2, 48], strides = [1, 1]} : vector<2x64xf32> to vector<2x48xf32>
    %93 = arith.negf %92 : vector<2x48xf32>
    %94 = math.exp %93 : vector<2x48xf32>
    %cst_37 = arith.constant 1.000000e+00 : f32
    %95 = vector.broadcast %cst_37 : f32 to vector<2x48xf32>
    %96 = arith.addf %95, %94 : vector<2x48xf32>
    %97 = arith.divf %95, %96 : vector<2x48xf32>
    %98 = vector.extract_strided_slice %97 {offsets = [0, 0], sizes = [2, 16], strides = [1, 1]} : vector<2x48xf32> to vector<2x16xf32>
    %99 = vector.extract_strided_slice %97 {offsets = [0, 16], sizes = [2, 16], strides = [1, 1]} : vector<2x48xf32> to vector<2x16xf32>
    %100 = vector.extract_strided_slice %97 {offsets = [0, 32], sizes = [2, 16], strides = [1, 1]} : vector<2x48xf32> to vector<2x16xf32>
    %101 = vector.extract_strided_slice %91 {offsets = [0, 48], sizes = [2, 16], strides = [1, 1]} : vector<2x64xf32> to vector<2x16xf32>
    %102 = math.tanh %101 : vector<2x16xf32>
    %103 = arith.mulf %99, %61 : vector<2x16xf32>
    %104 = arith.mulf %98, %102 : vector<2x16xf32>
    %105 = arith.addf %103, %104 : vector<2x16xf32>
    %106 = math.tanh %105 : vector<2x16xf32>
    %107 = arith.mulf %100, %106 : vector<2x16xf32>
    %c12 = arith.constant 12 : index
    %c0_38 = arith.constant 0 : index
    %108 = vector.load %arg13[%c12, %c0_38] : memref<16x16xf32, #tpu.memory_space<vmem>>, vector<2x16xf32>
    tpu.vector_store %arg13[%c12, %c0_38], %107 {strides = array<i32>} : memref<16x16xf32, #tpu.memory_space<vmem>>, vector<2x16xf32>,
    %109 = vector.extract_strided_slice %3 {offsets = [4, 0], sizes = [2, 64], strides = [1, 1]} : vector<16x64xf32> to vector<2x64xf32>
    %cst_39 = arith.constant dense<0.000000e+00> : vector<2x64xf32>
    %110 = tpu.matmul %85, %6, %cst_39 {dimension_numbers = #tpu.dot_dimension_numbers<[1], [0], [0], [1], [0, 0, 1, 1], [], []>} : vector<2x16xf32>, vector<16x64xf32>, vector<2x64xf32> -> vector<2x64xf32>
    %111 = arith.addf %109, %110 : vector<2x64xf32>
    %112 = vector.broadcast %10 : vector<1x64xf32> to vector<2x64xf32>
    %113 = arith.addf %111, %112 : vector<2x64xf32>
    %114 = vector.extract_strided_slice %113 {offsets = [0, 0], sizes = [2, 48], strides = [1, 1]} : vector<2x64xf32> to vector<2x48xf32>
    %115 = arith.negf %114 : vector<2x48xf32>
    %116 = math.exp %115 : vector<2x48xf32>
    %cst_40 = arith.constant 1.000000e+00 : f32
    %117 = vector.broadcast %cst_40 : f32 to vector<2x48xf32>
    %118 = arith.addf %117, %116 : vector<2x48xf32>
    %119 = arith.divf %117, %118 : vector<2x48xf32>
    %120 = vector.extract_strided_slice %119 {offsets = [0, 0], sizes = [2, 16], strides = [1, 1]} : vector<2x48xf32> to vector<2x16xf32>
    %121 = vector.extract_strided_slice %119 {offsets = [0, 16], sizes = [2, 16], strides = [1, 1]} : vector<2x48xf32> to vector<2x16xf32>
    %122 = vector.extract_strided_slice %119 {offsets = [0, 32], sizes = [2, 16], strides = [1, 1]} : vector<2x48xf32> to vector<2x16xf32>
    %123 = vector.extract_strided_slice %113 {offsets = [0, 48], sizes = [2, 16], strides = [1, 1]} : vector<2x64xf32> to vector<2x16xf32>
    %124 = math.tanh %123 : vector<2x16xf32>
    %125 = arith.mulf %121, %83 : vector<2x16xf32>
    %126 = arith.mulf %120, %124 : vector<2x16xf32>
    %127 = arith.addf %125, %126 : vector<2x16xf32>
    %128 = math.tanh %127 : vector<2x16xf32>
    %129 = arith.mulf %122, %128 : vector<2x16xf32>
    %c4 = arith.constant 4 : index
    %c0_41 = arith.constant 0 : index
    %130 = vector.load %arg12[%c4, %c0_41] : memref<16x16xf32, #tpu.memory_space<vmem>>, vector<2x16xf32>
    tpu.vector_store %arg12[%c4, %c0_41], %129 {strides = array<i32>} : memref<16x16xf32, #tpu.memory_space<vmem>>, vector<2x16xf32>,
    %131 = vector.extract_strided_slice %4 {offsets = [10, 0], sizes = [2, 64], strides = [1, 1]} : vector<16x64xf32> to vector<2x64xf32>
    %cst_42 = arith.constant dense<0.000000e+00> : vector<2x64xf32>
    %132 = tpu.matmul %107, %8, %cst_42 {dimension_numbers = #tpu.dot_dimension_numbers<[1], [0], [0], [1], [0, 0, 1, 1], [], []>} : vector<2x16xf32>, vector<16x64xf32>, vector<2x64xf32> -> vector<2x64xf32>
    %133 = arith.addf %131, %132 : vector<2x64xf32>
    %134 = vector.broadcast %12 : vector<1x64xf32> to vector<2x64xf32>
    %135 = arith.addf %133, %134 : vector<2x64xf32>
    %136 = vector.extract_strided_slice %135 {offsets = [0, 0], sizes = [2, 48], strides = [1, 1]} : vector<2x64xf32> to vector<2x48xf32>
    %137 = arith.negf %136 : vector<2x48xf32>
    %138 = math.exp %137 : vector<2x48xf32>
    %cst_43 = arith.constant 1.000000e+00 : f32
    %139 = vector.broadcast %cst_43 : f32 to vector<2x48xf32>
    %140 = arith.addf %139, %138 : vector<2x48xf32>
    %141 = arith.divf %139, %140 : vector<2x48xf32>
    %142 = vector.extract_strided_slice %141 {offsets = [0, 0], sizes = [2, 16], strides = [1, 1]} : vector<2x48xf32> to vector<2x16xf32>
    %143 = vector.extract_strided_slice %141 {offsets = [0, 16], sizes = [2, 16], strides = [1, 1]} : vector<2x48xf32> to vector<2x16xf32>
    %144 = vector.extract_strided_slice %141 {offsets = [0, 32], sizes = [2, 16], strides = [1, 1]} : vector<2x48xf32> to vector<2x16xf32>
    %145 = vector.extract_strided_slice %135 {offsets = [0, 48], sizes = [2, 16], strides = [1, 1]} : vector<2x64xf32> to vector<2x16xf32>
    %146 = math.tanh %145 : vector<2x16xf32>
    %147 = arith.mulf %143, %105 : vector<2x16xf32>
    %148 = arith.mulf %142, %146 : vector<2x16xf32>
    %149 = arith.addf %147, %148 : vector<2x16xf32>
    %150 = math.tanh %149 : vector<2x16xf32>
    %151 = arith.mulf %144, %150 : vector<2x16xf32>
    %c10 = arith.constant 10 : index
    %c0_44 = arith.constant 0 : index
    %152 = vector.load %arg13[%c10, %c0_44] : memref<16x16xf32, #tpu.memory_space<vmem>>, vector<2x16xf32>
    tpu.vector_store %arg13[%c10, %c0_44], %151 {strides = array<i32>} : memref<16x16xf32, #tpu.memory_space<vmem>>, vector<2x16xf32>,
    %153 = vector.extract_strided_slice %3 {offsets = [6, 0], sizes = [2, 64], strides = [1, 1]} : vector<16x64xf32> to vector<2x64xf32>
    %cst_45 = arith.constant dense<0.000000e+00> : vector<2x64xf32>
    %154 = tpu.matmul %129, %6, %cst_45 {dimension_numbers = #tpu.dot_dimension_numbers<[1], [0], [0], [1], [0, 0, 1, 1], [], []>} : vector<2x16xf32>, vector<16x64xf32>, vector<2x64xf32> -> vector<2x64xf32>
    %155 = arith.addf %153, %154 : vector<2x64xf32>
    %156 = vector.broadcast %10 : vector<1x64xf32> to vector<2x64xf32>
    %157 = arith.addf %155, %156 : vector<2x64xf32>
    %158 = vector.extract_strided_slice %157 {offsets = [0, 0], sizes = [2, 48], strides = [1, 1]} : vector<2x64xf32> to vector<2x48xf32>
    %159 = arith.negf %158 : vector<2x48xf32>
    %160 = math.exp %159 : vector<2x48xf32>
    %cst_46 = arith.constant 1.000000e+00 : f32
    %161 = vector.broadcast %cst_46 : f32 to vector<2x48xf32>
    %162 = arith.addf %161, %160 : vector<2x48xf32>
    %163 = arith.divf %161, %162 : vector<2x48xf32>
    %164 = vector.extract_strided_slice %163 {offsets = [0, 0], sizes = [2, 16], strides = [1, 1]} : vector<2x48xf32> to vector<2x16xf32>
    %165 = vector.extract_strided_slice %163 {offsets = [0, 16], sizes = [2, 16], strides = [1, 1]} : vector<2x48xf32> to vector<2x16xf32>
    %166 = vector.extract_strided_slice %163 {offsets = [0, 32], sizes = [2, 16], strides = [1, 1]} : vector<2x48xf32> to vector<2x16xf32>
    %167 = vector.extract_strided_slice %157 {offsets = [0, 48], sizes = [2, 16], strides = [1, 1]} : vector<2x64xf32> to vector<2x16xf32>
    %168 = math.tanh %167 : vector<2x16xf32>
    %169 = arith.mulf %165, %127 : vector<2x16xf32>
    %170 = arith.mulf %164, %168 : vector<2x16xf32>
    %171 = arith.addf %169, %170 : vector<2x16xf32>
    %172 = math.tanh %171 : vector<2x16xf32>
    %173 = arith.mulf %166, %172 : vector<2x16xf32>
    %c6 = arith.constant 6 : index
    %c0_47 = arith.constant 0 : index
    %174 = vector.load %arg12[%c6, %c0_47] : memref<16x16xf32, #tpu.memory_space<vmem>>, vector<2x16xf32>
    tpu.vector_store %arg12[%c6, %c0_47], %173 {strides = array<i32>} : memref<16x16xf32, #tpu.memory_space<vmem>>, vector<2x16xf32>,
    %175 = vector.extract_strided_slice %4 {offsets = [8, 0], sizes = [2, 64], strides = [1, 1]} : vector<16x64xf32> to vector<2x64xf32>
    %cst_48 = arith.constant dense<0.000000e+00> : vector<2x64xf32>
    %176 = tpu.matmul %151, %8, %cst_48 {dimension_numbers = #tpu.dot_dimension_numbers<[1], [0], [0], [1], [0, 0, 1, 1], [], []>} : vector<2x16xf32>, vector<16x64xf32>, vector<2x64xf32> -> vector<2x64xf32>
    %177 = arith.addf %175, %176 : vector<2x64xf32>
    %178 = vector.broadcast %12 : vector<1x64xf32> to vector<2x64xf32>
    %179 = arith.addf %177, %178 : vector<2x64xf32>
    %180 = vector.extract_strided_slice %179 {offsets = [0, 0], sizes = [2, 48], strides = [1, 1]} : vector<2x64xf32> to vector<2x48xf32>
    %181 = arith.negf %180 : vector<2x48xf32>
    %182 = math.exp %181 : vector<2x48xf32>
    %cst_49 = arith.constant 1.000000e+00 : f32
    %183 = vector.broadcast %cst_49 : f32 to vector<2x48xf32>
    %184 = arith.addf %183, %182 : vector<2x48xf32>
    %185 = arith.divf %183, %184 : vector<2x48xf32>
    %186 = vector.extract_strided_slice %185 {offsets = [0, 0], sizes = [2, 16], strides = [1, 1]} : vector<2x48xf32> to vector<2x16xf32>
    %187 = vector.extract_strided_slice %185 {offsets = [0, 16], sizes = [2, 16], strides = [1, 1]} : vector<2x48xf32> to vector<2x16xf32>
    %188 = vector.extract_strided_slice %185 {offsets = [0, 32], sizes = [2, 16], strides = [1, 1]} : vector<2x48xf32> to vector<2x16xf32>
    %189 = vector.extract_strided_slice %179 {offsets = [0, 48], sizes = [2, 16], strides = [1, 1]} : vector<2x64xf32> to vector<2x16xf32>
    %190 = math.tanh %189 : vector<2x16xf32>
    %191 = arith.mulf %187, %149 : vector<2x16xf32>
    %192 = arith.mulf %186, %190 : vector<2x16xf32>
    %193 = arith.addf %191, %192 : vector<2x16xf32>
    %194 = math.tanh %193 : vector<2x16xf32>
    %195 = arith.mulf %188, %194 : vector<2x16xf32>
    %c8 = arith.constant 8 : index
    %c0_50 = arith.constant 0 : index
    %196 = vector.load %arg13[%c8, %c0_50] : memref<16x16xf32, #tpu.memory_space<vmem>>, vector<2x16xf32>
    tpu.vector_store %arg13[%c8, %c0_50], %195 {strides = array<i32>} : memref<16x16xf32, #tpu.memory_space<vmem>>, vector<2x16xf32>,
    %197 = vector.extract_strided_slice %3 {offsets = [8, 0], sizes = [2, 64], strides = [1, 1]} : vector<16x64xf32> to vector<2x64xf32>
    %cst_51 = arith.constant dense<0.000000e+00> : vector<2x64xf32>
    %198 = tpu.matmul %173, %6, %cst_51 {dimension_numbers = #tpu.dot_dimension_numbers<[1], [0], [0], [1], [0, 0, 1, 1], [], []>} : vector<2x16xf32>, vector<16x64xf32>, vector<2x64xf32> -> vector<2x64xf32>
    %199 = arith.addf %197, %198 : vector<2x64xf32>
    %200 = vector.broadcast %10 : vector<1x64xf32> to vector<2x64xf32>
    %201 = arith.addf %199, %200 : vector<2x64xf32>
    %202 = vector.extract_strided_slice %201 {offsets = [0, 0], sizes = [2, 48], strides = [1, 1]} : vector<2x64xf32> to vector<2x48xf32>
    %203 = arith.negf %202 : vector<2x48xf32>
    %204 = math.exp %203 : vector<2x48xf32>
    %cst_52 = arith.constant 1.000000e+00 : f32
    %205 = vector.broadcast %cst_52 : f32 to vector<2x48xf32>
    %206 = arith.addf %205, %204 : vector<2x48xf32>
    %207 = arith.divf %205, %206 : vector<2x48xf32>
    %208 = vector.extract_strided_slice %207 {offsets = [0, 0], sizes = [2, 16], strides = [1, 1]} : vector<2x48xf32> to vector<2x16xf32>
    %209 = vector.extract_strided_slice %207 {offsets = [0, 16], sizes = [2, 16], strides = [1, 1]} : vector<2x48xf32> to vector<2x16xf32>
    %210 = vector.extract_strided_slice %207 {offsets = [0, 32], sizes = [2, 16], strides = [1, 1]} : vector<2x48xf32> to vector<2x16xf32>
    %211 = vector.extract_strided_slice %201 {offsets = [0, 48], sizes = [2, 16], strides = [1, 1]} : vector<2x64xf32> to vector<2x16xf32>
    %212 = math.tanh %211 : vector<2x16xf32>
    %213 = arith.mulf %209, %171 : vector<2x16xf32>
    %214 = arith.mulf %208, %212 : vector<2x16xf32>
    %215 = arith.addf %213, %214 : vector<2x16xf32>
    %216 = math.tanh %215 : vector<2x16xf32>
    %217 = arith.mulf %210, %216 : vector<2x16xf32>
    %c8_53 = arith.constant 8 : index
    %c0_54 = arith.constant 0 : index
    %218 = vector.load %arg12[%c8_53, %c0_54] : memref<16x16xf32, #tpu.memory_space<vmem>>, vector<2x16xf32>
    tpu.vector_store %arg12[%c8_53, %c0_54], %217 {strides = array<i32>} : memref<16x16xf32, #tpu.memory_space<vmem>>, vector<2x16xf32>,
    %219 = vector.extract_strided_slice %4 {offsets = [6, 0], sizes = [2, 64], strides = [1, 1]} : vector<16x64xf32> to vector<2x64xf32>
    %cst_55 = arith.constant dense<0.000000e+00> : vector<2x64xf32>
    %220 = tpu.matmul %195, %8, %cst_55 {dimension_numbers = #tpu.dot_dimension_numbers<[1], [0], [0], [1], [0, 0, 1, 1], [], []>} : vector<2x16xf32>, vector<16x64xf32>, vector<2x64xf32> -> vector<2x64xf32>
    %221 = arith.addf %219, %220 : vector<2x64xf32>
    %222 = vector.broadcast %12 : vector<1x64xf32> to vector<2x64xf32>
    %223 = arith.addf %221, %222 : vector<2x64xf32>
    %224 = vector.extract_strided_slice %223 {offsets = [0, 0], sizes = [2, 48], strides = [1, 1]} : vector<2x64xf32> to vector<2x48xf32>
    %225 = arith.negf %224 : vector<2x48xf32>
    %226 = math.exp %225 : vector<2x48xf32>
    %cst_56 = arith.constant 1.000000e+00 : f32
    %227 = vector.broadcast %cst_56 : f32 to vector<2x48xf32>
    %228 = arith.addf %227, %226 : vector<2x48xf32>
    %229 = arith.divf %227, %228 : vector<2x48xf32>
    %230 = vector.extract_strided_slice %229 {offsets = [0, 0], sizes = [2, 16], strides = [1, 1]} : vector<2x48xf32> to vector<2x16xf32>
    %231 = vector.extract_strided_slice %229 {offsets = [0, 16], sizes = [2, 16], strides = [1, 1]} : vector<2x48xf32> to vector<2x16xf32>
    %232 = vector.extract_strided_slice %229 {offsets = [0, 32], sizes = [2, 16], strides = [1, 1]} : vector<2x48xf32> to vector<2x16xf32>
    %233 = vector.extract_strided_slice %223 {offsets = [0, 48], sizes = [2, 16], strides = [1, 1]} : vector<2x64xf32> to vector<2x16xf32>
    %234 = math.tanh %233 : vector<2x16xf32>
    %235 = arith.mulf %231, %193 : vector<2x16xf32>
    %236 = arith.mulf %230, %234 : vector<2x16xf32>
    %237 = arith.addf %235, %236 : vector<2x16xf32>
    %238 = math.tanh %237 : vector<2x16xf32>
    %239 = arith.mulf %232, %238 : vector<2x16xf32>
    %c6_57 = arith.constant 6 : index
    %c0_58 = arith.constant 0 : index
    %240 = vector.load %arg13[%c6_57, %c0_58] : memref<16x16xf32, #tpu.memory_space<vmem>>, vector<2x16xf32>
    tpu.vector_store %arg13[%c6_57, %c0_58], %239 {strides = array<i32>} : memref<16x16xf32, #tpu.memory_space<vmem>>, vector<2x16xf32>,
    %241 = vector.extract_strided_slice %3 {offsets = [10, 0], sizes = [2, 64], strides = [1, 1]} : vector<16x64xf32> to vector<2x64xf32>
    %cst_59 = arith.constant dense<0.000000e+00> : vector<2x64xf32>
    %242 = tpu.matmul %217, %6, %cst_59 {dimension_numbers = #tpu.dot_dimension_numbers<[1], [0], [0], [1], [0, 0, 1, 1], [], []>} : vector<2x16xf32>, vector<16x64xf32>, vector<2x64xf32> -> vector<2x64xf32>
    %243 = arith.addf %241, %242 : vector<2x64xf32>
    %244 = vector.broadcast %10 : vector<1x64xf32> to vector<2x64xf32>
    %245 = arith.addf %243, %244 : vector<2x64xf32>
    %246 = vector.extract_strided_slice %245 {offsets = [0, 0], sizes = [2, 48], strides = [1, 1]} : vector<2x64xf32> to vector<2x48xf32>
    %247 = arith.negf %246 : vector<2x48xf32>
    %248 = math.exp %247 : vector<2x48xf32>
    %cst_60 = arith.constant 1.000000e+00 : f32
    %249 = vector.broadcast %cst_60 : f32 to vector<2x48xf32>
    %250 = arith.addf %249, %248 : vector<2x48xf32>
    %251 = arith.divf %249, %250 : vector<2x48xf32>
    %252 = vector.extract_strided_slice %251 {offsets = [0, 0], sizes = [2, 16], strides = [1, 1]} : vector<2x48xf32> to vector<2x16xf32>
    %253 = vector.extract_strided_slice %251 {offsets = [0, 16], sizes = [2, 16], strides = [1, 1]} : vector<2x48xf32> to vector<2x16xf32>
    %254 = vector.extract_strided_slice %251 {offsets = [0, 32], sizes = [2, 16], strides = [1, 1]} : vector<2x48xf32> to vector<2x16xf32>
    %255 = vector.extract_strided_slice %245 {offsets = [0, 48], sizes = [2, 16], strides = [1, 1]} : vector<2x64xf32> to vector<2x16xf32>
    %256 = math.tanh %255 : vector<2x16xf32>
    %257 = arith.mulf %253, %215 : vector<2x16xf32>
    %258 = arith.mulf %252, %256 : vector<2x16xf32>
    %259 = arith.addf %257, %258 : vector<2x16xf32>
    %260 = math.tanh %259 : vector<2x16xf32>
    %261 = arith.mulf %254, %260 : vector<2x16xf32>
    %c10_61 = arith.constant 10 : index
    %c0_62 = arith.constant 0 : index
    %262 = vector.load %arg12[%c10_61, %c0_62] : memref<16x16xf32, #tpu.memory_space<vmem>>, vector<2x16xf32>
    tpu.vector_store %arg12[%c10_61, %c0_62], %261 {strides = array<i32>} : memref<16x16xf32, #tpu.memory_space<vmem>>, vector<2x16xf32>,
    %263 = vector.extract_strided_slice %4 {offsets = [4, 0], sizes = [2, 64], strides = [1, 1]} : vector<16x64xf32> to vector<2x64xf32>
    %cst_63 = arith.constant dense<0.000000e+00> : vector<2x64xf32>
    %264 = tpu.matmul %239, %8, %cst_63 {dimension_numbers = #tpu.dot_dimension_numbers<[1], [0], [0], [1], [0, 0, 1, 1], [], []>} : vector<2x16xf32>, vector<16x64xf32>, vector<2x64xf32> -> vector<2x64xf32>
    %265 = arith.addf %263, %264 : vector<2x64xf32>
    %266 = vector.broadcast %12 : vector<1x64xf32> to vector<2x64xf32>
    %267 = arith.addf %265, %266 : vector<2x64xf32>
    %268 = vector.extract_strided_slice %267 {offsets = [0, 0], sizes = [2, 48], strides = [1, 1]} : vector<2x64xf32> to vector<2x48xf32>
    %269 = arith.negf %268 : vector<2x48xf32>
    %270 = math.exp %269 : vector<2x48xf32>
    %cst_64 = arith.constant 1.000000e+00 : f32
    %271 = vector.broadcast %cst_64 : f32 to vector<2x48xf32>
    %272 = arith.addf %271, %270 : vector<2x48xf32>
    %273 = arith.divf %271, %272 : vector<2x48xf32>
    %274 = vector.extract_strided_slice %273 {offsets = [0, 0], sizes = [2, 16], strides = [1, 1]} : vector<2x48xf32> to vector<2x16xf32>
    %275 = vector.extract_strided_slice %273 {offsets = [0, 16], sizes = [2, 16], strides = [1, 1]} : vector<2x48xf32> to vector<2x16xf32>
    %276 = vector.extract_strided_slice %273 {offsets = [0, 32], sizes = [2, 16], strides = [1, 1]} : vector<2x48xf32> to vector<2x16xf32>
    %277 = vector.extract_strided_slice %267 {offsets = [0, 48], sizes = [2, 16], strides = [1, 1]} : vector<2x64xf32> to vector<2x16xf32>
    %278 = math.tanh %277 : vector<2x16xf32>
    %279 = arith.mulf %275, %237 : vector<2x16xf32>
    %280 = arith.mulf %274, %278 : vector<2x16xf32>
    %281 = arith.addf %279, %280 : vector<2x16xf32>
    %282 = math.tanh %281 : vector<2x16xf32>
    %283 = arith.mulf %276, %282 : vector<2x16xf32>
    %c4_65 = arith.constant 4 : index
    %c0_66 = arith.constant 0 : index
    %284 = vector.load %arg13[%c4_65, %c0_66] : memref<16x16xf32, #tpu.memory_space<vmem>>, vector<2x16xf32>
    tpu.vector_store %arg13[%c4_65, %c0_66], %283 {strides = array<i32>} : memref<16x16xf32, #tpu.memory_space<vmem>>, vector<2x16xf32>,
    %285 = vector.extract_strided_slice %3 {offsets = [12, 0], sizes = [2, 64], strides = [1, 1]} : vector<16x64xf32> to vector<2x64xf32>
    %cst_67 = arith.constant dense<0.000000e+00> : vector<2x64xf32>
    %286 = tpu.matmul %261, %6, %cst_67 {dimension_numbers = #tpu.dot_dimension_numbers<[1], [0], [0], [1], [0, 0, 1, 1], [], []>} : vector<2x16xf32>, vector<16x64xf32>, vector<2x64xf32> -> vector<2x64xf32>
    %287 = arith.addf %285, %286 : vector<2x64xf32>
    %288 = vector.broadcast %10 : vector<1x64xf32> to vector<2x64xf32>
    %289 = arith.addf %287, %288 : vector<2x64xf32>
    %290 = vector.extract_strided_slice %289 {offsets = [0, 0], sizes = [2, 48], strides = [1, 1]} : vector<2x64xf32> to vector<2x48xf32>
    %291 = arith.negf %290 : vector<2x48xf32>
    %292 = math.exp %291 : vector<2x48xf32>
    %cst_68 = arith.constant 1.000000e+00 : f32
    %293 = vector.broadcast %cst_68 : f32 to vector<2x48xf32>
    %294 = arith.addf %293, %292 : vector<2x48xf32>
    %295 = arith.divf %293, %294 : vector<2x48xf32>
    %296 = vector.extract_strided_slice %295 {offsets = [0, 0], sizes = [2, 16], strides = [1, 1]} : vector<2x48xf32> to vector<2x16xf32>
    %297 = vector.extract_strided_slice %295 {offsets = [0, 16], sizes = [2, 16], strides = [1, 1]} : vector<2x48xf32> to vector<2x16xf32>
    %298 = vector.extract_strided_slice %295 {offsets = [0, 32], sizes = [2, 16], strides = [1, 1]} : vector<2x48xf32> to vector<2x16xf32>
    %299 = vector.extract_strided_slice %289 {offsets = [0, 48], sizes = [2, 16], strides = [1, 1]} : vector<2x64xf32> to vector<2x16xf32>
    %300 = math.tanh %299 : vector<2x16xf32>
    %301 = arith.mulf %297, %259 : vector<2x16xf32>
    %302 = arith.mulf %296, %300 : vector<2x16xf32>
    %303 = arith.addf %301, %302 : vector<2x16xf32>
    %304 = math.tanh %303 : vector<2x16xf32>
    %305 = arith.mulf %298, %304 : vector<2x16xf32>
    %c12_69 = arith.constant 12 : index
    %c0_70 = arith.constant 0 : index
    %306 = vector.load %arg12[%c12_69, %c0_70] : memref<16x16xf32, #tpu.memory_space<vmem>>, vector<2x16xf32>
    tpu.vector_store %arg12[%c12_69, %c0_70], %305 {strides = array<i32>} : memref<16x16xf32, #tpu.memory_space<vmem>>, vector<2x16xf32>,
    %307 = vector.extract_strided_slice %4 {offsets = [2, 0], sizes = [2, 64], strides = [1, 1]} : vector<16x64xf32> to vector<2x64xf32>
    %cst_71 = arith.constant dense<0.000000e+00> : vector<2x64xf32>
    %308 = tpu.matmul %283, %8, %cst_71 {dimension_numbers = #tpu.dot_dimension_numbers<[1], [0], [0], [1], [0, 0, 1, 1], [], []>} : vector<2x16xf32>, vector<16x64xf32>, vector<2x64xf32> -> vector<2x64xf32>
    %309 = arith.addf %307, %308 : vector<2x64xf32>
    %310 = vector.broadcast %12 : vector<1x64xf32> to vector<2x64xf32>
    %311 = arith.addf %309, %310 : vector<2x64xf32>
    %312 = vector.extract_strided_slice %311 {offsets = [0, 0], sizes = [2, 48], strides = [1, 1]} : vector<2x64xf32> to vector<2x48xf32>
    %313 = arith.negf %312 : vector<2x48xf32>
    %314 = math.exp %313 : vector<2x48xf32>
    %cst_72 = arith.constant 1.000000e+00 : f32
    %315 = vector.broadcast %cst_72 : f32 to vector<2x48xf32>
    %316 = arith.addf %315, %314 : vector<2x48xf32>
    %317 = arith.divf %315, %316 : vector<2x48xf32>
    %318 = vector.extract_strided_slice %317 {offsets = [0, 0], sizes = [2, 16], strides = [1, 1]} : vector<2x48xf32> to vector<2x16xf32>
    %319 = vector.extract_strided_slice %317 {offsets = [0, 16], sizes = [2, 16], strides = [1, 1]} : vector<2x48xf32> to vector<2x16xf32>
    %320 = vector.extract_strided_slice %317 {offsets = [0, 32], sizes = [2, 16], strides = [1, 1]} : vector<2x48xf32> to vector<2x16xf32>
    %321 = vector.extract_strided_slice %311 {offsets = [0, 48], sizes = [2, 16], strides = [1, 1]} : vector<2x64xf32> to vector<2x16xf32>
    %322 = math.tanh %321 : vector<2x16xf32>
    %323 = arith.mulf %319, %281 : vector<2x16xf32>
    %324 = arith.mulf %318, %322 : vector<2x16xf32>
    %325 = arith.addf %323, %324 : vector<2x16xf32>
    %326 = math.tanh %325 : vector<2x16xf32>
    %327 = arith.mulf %320, %326 : vector<2x16xf32>
    %c2_73 = arith.constant 2 : index
    %c0_74 = arith.constant 0 : index
    %328 = vector.load %arg13[%c2_73, %c0_74] : memref<16x16xf32, #tpu.memory_space<vmem>>, vector<2x16xf32>
    tpu.vector_store %arg13[%c2_73, %c0_74], %327 {strides = array<i32>} : memref<16x16xf32, #tpu.memory_space<vmem>>, vector<2x16xf32>,
    %329 = vector.extract_strided_slice %3 {offsets = [14, 0], sizes = [2, 64], strides = [1, 1]} : vector<16x64xf32> to vector<2x64xf32>
    %cst_75 = arith.constant dense<0.000000e+00> : vector<2x64xf32>
    %330 = tpu.matmul %305, %6, %cst_75 {dimension_numbers = #tpu.dot_dimension_numbers<[1], [0], [0], [1], [0, 0, 1, 1], [], []>} : vector<2x16xf32>, vector<16x64xf32>, vector<2x64xf32> -> vector<2x64xf32>
    %331 = arith.addf %329, %330 : vector<2x64xf32>
    %332 = vector.broadcast %10 : vector<1x64xf32> to vector<2x64xf32>
    %333 = arith.addf %331, %332 : vector<2x64xf32>
    %334 = vector.extract_strided_slice %333 {offsets = [0, 0], sizes = [2, 48], strides = [1, 1]} : vector<2x64xf32> to vector<2x48xf32>
    %335 = arith.negf %334 : vector<2x48xf32>
    %336 = math.exp %335 : vector<2x48xf32>
    %cst_76 = arith.constant 1.000000e+00 : f32
    %337 = vector.broadcast %cst_76 : f32 to vector<2x48xf32>
    %338 = arith.addf %337, %336 : vector<2x48xf32>
    %339 = arith.divf %337, %338 : vector<2x48xf32>
    %340 = vector.extract_strided_slice %339 {offsets = [0, 0], sizes = [2, 16], strides = [1, 1]} : vector<2x48xf32> to vector<2x16xf32>
    %341 = vector.extract_strided_slice %339 {offsets = [0, 16], sizes = [2, 16], strides = [1, 1]} : vector<2x48xf32> to vector<2x16xf32>
    %342 = vector.extract_strided_slice %339 {offsets = [0, 32], sizes = [2, 16], strides = [1, 1]} : vector<2x48xf32> to vector<2x16xf32>
    %343 = vector.extract_strided_slice %333 {offsets = [0, 48], sizes = [2, 16], strides = [1, 1]} : vector<2x64xf32> to vector<2x16xf32>
    %344 = math.tanh %343 : vector<2x16xf32>
    %345 = arith.mulf %341, %303 : vector<2x16xf32>
    %346 = arith.mulf %340, %344 : vector<2x16xf32>
    %347 = arith.addf %345, %346 : vector<2x16xf32>
    %348 = math.tanh %347 : vector<2x16xf32>
    %349 = arith.mulf %342, %348 : vector<2x16xf32>
    %c14_77 = arith.constant 14 : index
    %c0_78 = arith.constant 0 : index
    %350 = vector.load %arg12[%c14_77, %c0_78] : memref<16x16xf32, #tpu.memory_space<vmem>>, vector<2x16xf32>
    tpu.vector_store %arg12[%c14_77, %c0_78], %349 {strides = array<i32>} : memref<16x16xf32, #tpu.memory_space<vmem>>, vector<2x16xf32>,
    %351 = vector.extract_strided_slice %4 {offsets = [0, 0], sizes = [2, 64], strides = [1, 1]} : vector<16x64xf32> to vector<2x64xf32>
    %cst_79 = arith.constant dense<0.000000e+00> : vector<2x64xf32>
    %352 = tpu.matmul %327, %8, %cst_79 {dimension_numbers = #tpu.dot_dimension_numbers<[1], [0], [0], [1], [0, 0, 1, 1], [], []>} : vector<2x16xf32>, vector<16x64xf32>, vector<2x64xf32> -> vector<2x64xf32>
    %353 = arith.addf %351, %352 : vector<2x64xf32>
    %354 = vector.broadcast %12 : vector<1x64xf32> to vector<2x64xf32>
    %355 = arith.addf %353, %354 : vector<2x64xf32>
    %356 = vector.extract_strided_slice %355 {offsets = [0, 0], sizes = [2, 48], strides = [1, 1]} : vector<2x64xf32> to vector<2x48xf32>
    %357 = arith.negf %356 : vector<2x48xf32>
    %358 = math.exp %357 : vector<2x48xf32>
    %cst_80 = arith.constant 1.000000e+00 : f32
    %359 = vector.broadcast %cst_80 : f32 to vector<2x48xf32>
    %360 = arith.addf %359, %358 : vector<2x48xf32>
    %361 = arith.divf %359, %360 : vector<2x48xf32>
    %362 = vector.extract_strided_slice %361 {offsets = [0, 0], sizes = [2, 16], strides = [1, 1]} : vector<2x48xf32> to vector<2x16xf32>
    %363 = vector.extract_strided_slice %361 {offsets = [0, 16], sizes = [2, 16], strides = [1, 1]} : vector<2x48xf32> to vector<2x16xf32>
    %364 = vector.extract_strided_slice %361 {offsets = [0, 32], sizes = [2, 16], strides = [1, 1]} : vector<2x48xf32> to vector<2x16xf32>
    %365 = vector.extract_strided_slice %355 {offsets = [0, 48], sizes = [2, 16], strides = [1, 1]} : vector<2x64xf32> to vector<2x16xf32>
    %366 = math.tanh %365 : vector<2x16xf32>
    %367 = arith.mulf %363, %325 : vector<2x16xf32>
    %368 = arith.mulf %362, %366 : vector<2x16xf32>
    %369 = arith.addf %367, %368 : vector<2x16xf32>
    %370 = math.tanh %369 : vector<2x16xf32>
    %371 = arith.mulf %364, %370 : vector<2x16xf32>
    %c0_81 = arith.constant 0 : index
    %c0_82 = arith.constant 0 : index
    %372 = vector.load %arg13[%c0_81, %c0_82] : memref<16x16xf32, #tpu.memory_space<vmem>>, vector<2x16xf32>
    tpu.vector_store %arg13[%c0_81, %c0_82], %371 {strides = array<i32>} : memref<16x16xf32, #tpu.memory_space<vmem>>, vector<2x16xf32>,
    %c0_83 = arith.constant 0 : index
    %c0_84 = arith.constant 0 : index
    %373 = vector.load %arg12[%c0_83, %c0_84] : memref<16x16xf32, #tpu.memory_space<vmem>>, vector<16x16xf32>
    %c0_85 = arith.constant 0 : index
    %c0_86 = arith.constant 0 : index
    %c0_87 = arith.constant 0 : index
    %374 = vector.load %arg6[%c0_85, %c0_86, %c0_87] : memref<2x16x8xf32, #tpu.memory_space<vmem>>, vector<1x16x8xf32>
    %375 = vector.shape_cast %374 : vector<1x16x8xf32> to vector<16x8xf32>
    %cst_88 = arith.constant dense<0.000000e+00> : vector<16x8xf32>
    %376 = tpu.matmul %373, %375, %cst_88 {dimension_numbers = #tpu.dot_dimension_numbers<[1], [0], [0], [1], [0, 0, 1, 1], [], []>} : vector<16x16xf32>, vector<16x8xf32>, vector<16x8xf32> -> vector<16x8xf32>
    %c0_89 = arith.constant 0 : index
    %c0_90 = arith.constant 0 : index
    %377 = vector.load %arg13[%c0_89, %c0_90] : memref<16x16xf32, #tpu.memory_space<vmem>>, vector<16x16xf32>
    %c1_91 = arith.constant 1 : index
    %c0_92 = arith.constant 0 : index
    %c0_93 = arith.constant 0 : index
    %378 = vector.load %arg6[%c1_91, %c0_92, %c0_93] : memref<2x16x8xf32, #tpu.memory_space<vmem>>, vector<1x16x8xf32>
    %379 = vector.shape_cast %378 : vector<1x16x8xf32> to vector<16x8xf32>
    %cst_94 = arith.constant dense<0.000000e+00> : vector<16x8xf32>
    %380 = tpu.matmul %377, %379, %cst_94 {dimension_numbers = #tpu.dot_dimension_numbers<[1], [0], [0], [1], [0, 0, 1, 1], [], []>} : vector<16x16xf32>, vector<16x8xf32>, vector<16x8xf32> -> vector<16x8xf32>
    %381 = arith.addf %376, %380 : vector<16x8xf32>
    %c0_95 = arith.constant 0 : index
    %c0_96 = arith.constant 0 : index
    %382 = vector.load %arg7[%c0_95, %c0_96] : memref<1x8xf32, #tpu.memory_space<vmem>>, vector<1x8xf32>
    %383 = vector.broadcast %382 : vector<1x8xf32> to vector<16x8xf32>
    %384 = arith.addf %381, %383 : vector<16x8xf32>
    %385 = vector.extract_strided_slice %384 {offsets = [0, 0], sizes = [2, 8], strides = [1, 1]} : vector<16x8xf32> to vector<2x8xf32>
    %c0_97 = arith.constant 0 : index
    %c0_98 = arith.constant 0 : index
    %c0_99 = arith.constant 0 : index
    %386 = vector.load %arg9[%c0_97, %c0_98, %c0_99] : memref<8x2x8xf32, #tpu.memory_space<vmem>>, vector<1x2x8xf32>
    %387 = vector.shape_cast %386 : vector<1x2x8xf32> to vector<2x8xf32>
    %388 = vector.shape_cast %385 : vector<2x8xf32> to vector<1x2x8xf32>
    tpu.vector_store %arg9[%c0_97, %c0_98, %c0_99], %388 {strides = array<i32>} : memref<8x2x8xf32, #tpu.memory_space<vmem>>, vector<1x2x8xf32>,
    %389 = vector.extract_strided_slice %384 {offsets = [2, 0], sizes = [2, 8], strides = [1, 1]} : vector<16x8xf32> to vector<2x8xf32>
    %c1_100 = arith.constant 1 : index
    %c0_101 = arith.constant 0 : index
    %c0_102 = arith.constant 0 : index
    %390 = vector.load %arg9[%c1_100, %c0_101, %c0_102] : memref<8x2x8xf32, #tpu.memory_space<vmem>>, vector<1x2x8xf32>
    %391 = vector.shape_cast %390 : vector<1x2x8xf32> to vector<2x8xf32>
    %392 = vector.shape_cast %389 : vector<2x8xf32> to vector<1x2x8xf32>
    tpu.vector_store %arg9[%c1_100, %c0_101, %c0_102], %392 {strides = array<i32>} : memref<8x2x8xf32, #tpu.memory_space<vmem>>, vector<1x2x8xf32>,
    %393 = vector.extract_strided_slice %384 {offsets = [4, 0], sizes = [2, 8], strides = [1, 1]} : vector<16x8xf32> to vector<2x8xf32>
    %c2_103 = arith.constant 2 : index
    %c0_104 = arith.constant 0 : index
    %c0_105 = arith.constant 0 : index
    %394 = vector.load %arg9[%c2_103, %c0_104, %c0_105] : memref<8x2x8xf32, #tpu.memory_space<vmem>>, vector<1x2x8xf32>
    %395 = vector.shape_cast %394 : vector<1x2x8xf32> to vector<2x8xf32>
    %396 = vector.shape_cast %393 : vector<2x8xf32> to vector<1x2x8xf32>
    tpu.vector_store %arg9[%c2_103, %c0_104, %c0_105], %396 {strides = array<i32>} : memref<8x2x8xf32, #tpu.memory_space<vmem>>, vector<1x2x8xf32>,
    %397 = vector.extract_strided_slice %384 {offsets = [6, 0], sizes = [2, 8], strides = [1, 1]} : vector<16x8xf32> to vector<2x8xf32>
    %c3 = arith.constant 3 : index
    %c0_106 = arith.constant 0 : index
    %c0_107 = arith.constant 0 : index
    %398 = vector.load %arg9[%c3, %c0_106, %c0_107] : memref<8x2x8xf32, #tpu.memory_space<vmem>>, vector<1x2x8xf32>
    %399 = vector.shape_cast %398 : vector<1x2x8xf32> to vector<2x8xf32>
    %400 = vector.shape_cast %397 : vector<2x8xf32> to vector<1x2x8xf32>
    tpu.vector_store %arg9[%c3, %c0_106, %c0_107], %400 {strides = array<i32>} : memref<8x2x8xf32, #tpu.memory_space<vmem>>, vector<1x2x8xf32>,
    %401 = vector.extract_strided_slice %384 {offsets = [8, 0], sizes = [2, 8], strides = [1, 1]} : vector<16x8xf32> to vector<2x8xf32>
    %c4_108 = arith.constant 4 : index
    %c0_109 = arith.constant 0 : index
    %c0_110 = arith.constant 0 : index
    %402 = vector.load %arg9[%c4_108, %c0_109, %c0_110] : memref<8x2x8xf32, #tpu.memory_space<vmem>>, vector<1x2x8xf32>
    %403 = vector.shape_cast %402 : vector<1x2x8xf32> to vector<2x8xf32>
    %404 = vector.shape_cast %401 : vector<2x8xf32> to vector<1x2x8xf32>
    tpu.vector_store %arg9[%c4_108, %c0_109, %c0_110], %404 {strides = array<i32>} : memref<8x2x8xf32, #tpu.memory_space<vmem>>, vector<1x2x8xf32>,
    %405 = vector.extract_strided_slice %384 {offsets = [10, 0], sizes = [2, 8], strides = [1, 1]} : vector<16x8xf32> to vector<2x8xf32>
    %c5 = arith.constant 5 : index
    %c0_111 = arith.constant 0 : index
    %c0_112 = arith.constant 0 : index
    %406 = vector.load %arg9[%c5, %c0_111, %c0_112] : memref<8x2x8xf32, #tpu.memory_space<vmem>>, vector<1x2x8xf32>
    %407 = vector.shape_cast %406 : vector<1x2x8xf32> to vector<2x8xf32>
    %408 = vector.shape_cast %405 : vector<2x8xf32> to vector<1x2x8xf32>
    tpu.vector_store %arg9[%c5, %c0_111, %c0_112], %408 {strides = array<i32>} : memref<8x2x8xf32, #tpu.memory_space<vmem>>, vector<1x2x8xf32>,
    %409 = vector.extract_strided_slice %384 {offsets = [12, 0], sizes = [2, 8], strides = [1, 1]} : vector<16x8xf32> to vector<2x8xf32>
    %c6_113 = arith.constant 6 : index
    %c0_114 = arith.constant 0 : index
    %c0_115 = arith.constant 0 : index
    %410 = vector.load %arg9[%c6_113, %c0_114, %c0_115] : memref<8x2x8xf32, #tpu.memory_space<vmem>>, vector<1x2x8xf32>
    %411 = vector.shape_cast %410 : vector<1x2x8xf32> to vector<2x8xf32>
    %412 = vector.shape_cast %409 : vector<2x8xf32> to vector<1x2x8xf32>
    tpu.vector_store %arg9[%c6_113, %c0_114, %c0_115], %412 {strides = array<i32>} : memref<8x2x8xf32, #tpu.memory_space<vmem>>, vector<1x2x8xf32>,
    %413 = vector.extract_strided_slice %384 {offsets = [14, 0], sizes = [2, 8], strides = [1, 1]} : vector<16x8xf32> to vector<2x8xf32>
    %c7 = arith.constant 7 : index
    %c0_116 = arith.constant 0 : index
    %c0_117 = arith.constant 0 : index
    %414 = vector.load %arg9[%c7, %c0_116, %c0_117] : memref<8x2x8xf32, #tpu.memory_space<vmem>>, vector<1x2x8xf32>
    %415 = vector.shape_cast %414 : vector<1x2x8xf32> to vector<2x8xf32>
    %416 = vector.shape_cast %413 : vector<2x8xf32> to vector<1x2x8xf32>
    tpu.vector_store %arg9[%c7, %c0_116, %c0_117], %416 {strides = array<i32>} : memref<8x2x8xf32, #tpu.memory_space<vmem>>, vector<1x2x8xf32>,
    %c0_118 = arith.constant 0 : index
    %c0_119 = arith.constant 0 : index
    %417 = vector.load %arg8[%c0_118, %c0_119] : memref<8x8xf32, #tpu.memory_space<vmem>>, vector<8x8xf32>
    %418 = tpu.iota {dimensions = array<i32: 2>} : vector<2x8x8xi32>
    %c0_120 = arith.constant 0 : index
    %c0_121 = arith.constant 0 : index
    %c0_122 = arith.constant 0 : index
    %419 = vector.load %arg9[%c0_120, %c0_121, %c0_122] : memref<8x2x8xf32, #tpu.memory_space<vmem>>, vector<1x2x8xf32>
    %420 = vector.shape_cast %419 : vector<1x2x8xf32> to vector<2x8xf32>
    %c0_123 = arith.constant 0 : index
    %c0_124 = arith.constant 0 : index
    %c0_125 = arith.constant 0 : index
    %421 = vector.load %arg10[%c0_123, %c0_124, %c0_125] : memref<8x2x8xf32, #tpu.memory_space<vmem>>, vector<1x2x8xf32>
    %422 = vector.shape_cast %421 : vector<1x2x8xf32> to vector<2x8xf32>
    %423 = vector.shape_cast %420 : vector<2x8xf32> to vector<1x2x8xf32>
    tpu.vector_store %arg10[%c0_123, %c0_124, %c0_125], %423 {strides = array<i32>} : memref<8x2x8xf32, #tpu.memory_space<vmem>>, vector<1x2x8xf32>,
    %c0_i32 = arith.constant 0 : i32
    %424 = vector.broadcast %c0_i32 : i32 to vector<2x8xi32>
    %c0_126 = arith.constant 0 : index
    %c0_127 = arith.constant 0 : index
    %c0_128 = arith.constant 0 : index
    %425 = vector.load %arg11[%c0_126, %c0_127, %c0_128] : memref<8x2x8xi32, #tpu.memory_space<vmem>>, vector<1x2x8xi32>
    %426 = vector.shape_cast %425 : vector<1x2x8xi32> to vector<2x8xi32>
    %427 = vector.shape_cast %424 : vector<2x8xi32> to vector<1x2x8xi32>
    tpu.vector_store %arg11[%c0_126, %c0_127, %c0_128], %427 {strides = array<i32>} : memref<8x2x8xi32, #tpu.memory_space<vmem>>, vector<1x2x8xi32>,
    %428 = vector.shape_cast %420 : vector<2x8xf32> to vector<2x1x8xf32>
    %429 = vector.shape_cast %417 : vector<8x8xf32> to vector<1x8x8xf32>
    %430 = vector.broadcast %428 : vector<2x1x8xf32> to vector<2x8x8xf32>
    %431 = vector.broadcast %429 : vector<1x8x8xf32> to vector<2x8x8xf32>
    %432 = arith.addf %430, %431 : vector<2x8x8xf32>
    %cst_129 = arith.constant dense<0xFF800000> : vector<2x8xf32>
    %433 = vector.multi_reduction <maximumf>, %432, %cst_129 [2] : vector<2x8x8xf32> to vector<2x8xf32>
    %434 = vector.shape_cast %433 : vector<2x8xf32> to vector<2x8x1xf32>
    %435 = vector.broadcast %434 : vector<2x8x1xf32> to vector<2x8x8xf32>
    %436 = arith.cmpf oeq, %432, %435 : vector<2x8x8xf32>
    %c8_i32 = arith.constant 8 : i32
    %437 = vector.broadcast %c8_i32 : i32 to vector<2x8x8xi32>
    %438 = arith.select %436, %418, %437 : vector<2x8x8xi1>, vector<2x8x8xi32>
    %cst_130 = arith.constant dense<2147483647> : vector<2x8xi32>
    %439 = vector.multi_reduction <minsi>, %438, %cst_130 [2] : vector<2x8x8xi32> to vector<2x8xi32>
    %c1_131 = arith.constant 1 : index
    %c0_132 = arith.constant 0 : index
    %c0_133 = arith.constant 0 : index
    %440 = vector.load %arg9[%c1_131, %c0_132, %c0_133] : memref<8x2x8xf32, #tpu.memory_space<vmem>>, vector<1x2x8xf32>
    %441 = vector.shape_cast %440 : vector<1x2x8xf32> to vector<2x8xf32>
    %442 = arith.addf %441, %433 : vector<2x8xf32>
    %c1_134 = arith.constant 1 : index
    %c0_135 = arith.constant 0 : index
    %c0_136 = arith.constant 0 : index
    %443 = vector.load %arg10[%c1_134, %c0_135, %c0_136] : memref<8x2x8xf32, #tpu.memory_space<vmem>>, vector<1x2x8xf32>
    %444 = vector.shape_cast %443 : vector<1x2x8xf32> to vector<2x8xf32>
    %445 = vector.shape_cast %442 : vector<2x8xf32> to vector<1x2x8xf32>
    tpu.vector_store %arg10[%c1_134, %c0_135, %c0_136], %445 {strides = array<i32>} : memref<8x2x8xf32, #tpu.memory_space<vmem>>, vector<1x2x8xf32>,
    %c1_137 = arith.constant 1 : index
    %c0_138 = arith.constant 0 : index
    %c0_139 = arith.constant 0 : index
    %446 = vector.load %arg11[%c1_137, %c0_138, %c0_139] : memref<8x2x8xi32, #tpu.memory_space<vmem>>, vector<1x2x8xi32>
    %447 = vector.shape_cast %446 : vector<1x2x8xi32> to vector<2x8xi32>
    %448 = vector.shape_cast %439 : vector<2x8xi32> to vector<1x2x8xi32>
    tpu.vector_store %arg11[%c1_137, %c0_138, %c0_139], %448 {strides = array<i32>} : memref<8x2x8xi32, #tpu.memory_space<vmem>>, vector<1x2x8xi32>,
    %449 = vector.shape_cast %442 : vector<2x8xf32> to vector<2x1x8xf32>
    %450 = vector.shape_cast %417 : vector<8x8xf32> to vector<1x8x8xf32>
    %451 = vector.broadcast %449 : vector<2x1x8xf32> to vector<2x8x8xf32>
    %452 = vector.broadcast %450 : vector<1x8x8xf32> to vector<2x8x8xf32>
    %453 = arith.addf %451, %452 : vector<2x8x8xf32>
    %cst_140 = arith.constant dense<0xFF800000> : vector<2x8xf32>
    %454 = vector.multi_reduction <maximumf>, %453, %cst_140 [2] : vector<2x8x8xf32> to vector<2x8xf32>
    %455 = vector.shape_cast %454 : vector<2x8xf32> to vector<2x8x1xf32>
    %456 = vector.broadcast %455 : vector<2x8x1xf32> to vector<2x8x8xf32>
    %457 = arith.cmpf oeq, %453, %456 : vector<2x8x8xf32>
    %c8_i32_141 = arith.constant 8 : i32
    %458 = vector.broadcast %c8_i32_141 : i32 to vector<2x8x8xi32>
    %459 = arith.select %457, %418, %458 : vector<2x8x8xi1>, vector<2x8x8xi32>
    %cst_142 = arith.constant dense<2147483647> : vector<2x8xi32>
    %460 = vector.multi_reduction <minsi>, %459, %cst_142 [2] : vector<2x8x8xi32> to vector<2x8xi32>
    %c2_143 = arith.constant 2 : index
    %c0_144 = arith.constant 0 : index
    %c0_145 = arith.constant 0 : index
    %461 = vector.load %arg9[%c2_143, %c0_144, %c0_145] : memref<8x2x8xf32, #tpu.memory_space<vmem>>, vector<1x2x8xf32>
    %462 = vector.shape_cast %461 : vector<1x2x8xf32> to vector<2x8xf32>
    %463 = arith.addf %462, %454 : vector<2x8xf32>
    %c2_146 = arith.constant 2 : index
    %c0_147 = arith.constant 0 : index
    %c0_148 = arith.constant 0 : index
    %464 = vector.load %arg10[%c2_146, %c0_147, %c0_148] : memref<8x2x8xf32, #tpu.memory_space<vmem>>, vector<1x2x8xf32>
    %465 = vector.shape_cast %464 : vector<1x2x8xf32> to vector<2x8xf32>
    %466 = vector.shape_cast %463 : vector<2x8xf32> to vector<1x2x8xf32>
    tpu.vector_store %arg10[%c2_146, %c0_147, %c0_148], %466 {strides = array<i32>} : memref<8x2x8xf32, #tpu.memory_space<vmem>>, vector<1x2x8xf32>,
    %c2_149 = arith.constant 2 : index
    %c0_150 = arith.constant 0 : index
    %c0_151 = arith.constant 0 : index
    %467 = vector.load %arg11[%c2_149, %c0_150, %c0_151] : memref<8x2x8xi32, #tpu.memory_space<vmem>>, vector<1x2x8xi32>
    %468 = vector.shape_cast %467 : vector<1x2x8xi32> to vector<2x8xi32>
    %469 = vector.shape_cast %460 : vector<2x8xi32> to vector<1x2x8xi32>
    tpu.vector_store %arg11[%c2_149, %c0_150, %c0_151], %469 {strides = array<i32>} : memref<8x2x8xi32, #tpu.memory_space<vmem>>, vector<1x2x8xi32>,
    %470 = vector.shape_cast %463 : vector<2x8xf32> to vector<2x1x8xf32>
    %471 = vector.shape_cast %417 : vector<8x8xf32> to vector<1x8x8xf32>
    %472 = vector.broadcast %470 : vector<2x1x8xf32> to vector<2x8x8xf32>
    %473 = vector.broadcast %471 : vector<1x8x8xf32> to vector<2x8x8xf32>
    %474 = arith.addf %472, %473 : vector<2x8x8xf32>
    %cst_152 = arith.constant dense<0xFF800000> : vector<2x8xf32>
    %475 = vector.multi_reduction <maximumf>, %474, %cst_152 [2] : vector<2x8x8xf32> to vector<2x8xf32>
    %476 = vector.shape_cast %475 : vector<2x8xf32> to vector<2x8x1xf32>
    %477 = vector.broadcast %476 : vector<2x8x1xf32> to vector<2x8x8xf32>
    %478 = arith.cmpf oeq, %474, %477 : vector<2x8x8xf32>
    %c8_i32_153 = arith.constant 8 : i32
    %479 = vector.broadcast %c8_i32_153 : i32 to vector<2x8x8xi32>
    %480 = arith.select %478, %418, %479 : vector<2x8x8xi1>, vector<2x8x8xi32>
    %cst_154 = arith.constant dense<2147483647> : vector<2x8xi32>
    %481 = vector.multi_reduction <minsi>, %480, %cst_154 [2] : vector<2x8x8xi32> to vector<2x8xi32>
    %c3_155 = arith.constant 3 : index
    %c0_156 = arith.constant 0 : index
    %c0_157 = arith.constant 0 : index
    %482 = vector.load %arg9[%c3_155, %c0_156, %c0_157] : memref<8x2x8xf32, #tpu.memory_space<vmem>>, vector<1x2x8xf32>
    %483 = vector.shape_cast %482 : vector<1x2x8xf32> to vector<2x8xf32>
    %484 = arith.addf %483, %475 : vector<2x8xf32>
    %c3_158 = arith.constant 3 : index
    %c0_159 = arith.constant 0 : index
    %c0_160 = arith.constant 0 : index
    %485 = vector.load %arg10[%c3_158, %c0_159, %c0_160] : memref<8x2x8xf32, #tpu.memory_space<vmem>>, vector<1x2x8xf32>
    %486 = vector.shape_cast %485 : vector<1x2x8xf32> to vector<2x8xf32>
    %487 = vector.shape_cast %484 : vector<2x8xf32> to vector<1x2x8xf32>
    tpu.vector_store %arg10[%c3_158, %c0_159, %c0_160], %487 {strides = array<i32>} : memref<8x2x8xf32, #tpu.memory_space<vmem>>, vector<1x2x8xf32>,
    %c3_161 = arith.constant 3 : index
    %c0_162 = arith.constant 0 : index
    %c0_163 = arith.constant 0 : index
    %488 = vector.load %arg11[%c3_161, %c0_162, %c0_163] : memref<8x2x8xi32, #tpu.memory_space<vmem>>, vector<1x2x8xi32>
    %489 = vector.shape_cast %488 : vector<1x2x8xi32> to vector<2x8xi32>
    %490 = vector.shape_cast %481 : vector<2x8xi32> to vector<1x2x8xi32>
    tpu.vector_store %arg11[%c3_161, %c0_162, %c0_163], %490 {strides = array<i32>} : memref<8x2x8xi32, #tpu.memory_space<vmem>>, vector<1x2x8xi32>,
    %491 = vector.shape_cast %484 : vector<2x8xf32> to vector<2x1x8xf32>
    %492 = vector.shape_cast %417 : vector<8x8xf32> to vector<1x8x8xf32>
    %493 = vector.broadcast %491 : vector<2x1x8xf32> to vector<2x8x8xf32>
    %494 = vector.broadcast %492 : vector<1x8x8xf32> to vector<2x8x8xf32>
    %495 = arith.addf %493, %494 : vector<2x8x8xf32>
    %cst_164 = arith.constant dense<0xFF800000> : vector<2x8xf32>
    %496 = vector.multi_reduction <maximumf>, %495, %cst_164 [2] : vector<2x8x8xf32> to vector<2x8xf32>
    %497 = vector.shape_cast %496 : vector<2x8xf32> to vector<2x8x1xf32>
    %498 = vector.broadcast %497 : vector<2x8x1xf32> to vector<2x8x8xf32>
    %499 = arith.cmpf oeq, %495, %498 : vector<2x8x8xf32>
    %c8_i32_165 = arith.constant 8 : i32
    %500 = vector.broadcast %c8_i32_165 : i32 to vector<2x8x8xi32>
    %501 = arith.select %499, %418, %500 : vector<2x8x8xi1>, vector<2x8x8xi32>
    %cst_166 = arith.constant dense<2147483647> : vector<2x8xi32>
    %502 = vector.multi_reduction <minsi>, %501, %cst_166 [2] : vector<2x8x8xi32> to vector<2x8xi32>
    %c4_167 = arith.constant 4 : index
    %c0_168 = arith.constant 0 : index
    %c0_169 = arith.constant 0 : index
    %503 = vector.load %arg9[%c4_167, %c0_168, %c0_169] : memref<8x2x8xf32, #tpu.memory_space<vmem>>, vector<1x2x8xf32>
    %504 = vector.shape_cast %503 : vector<1x2x8xf32> to vector<2x8xf32>
    %505 = arith.addf %504, %496 : vector<2x8xf32>
    %c4_170 = arith.constant 4 : index
    %c0_171 = arith.constant 0 : index
    %c0_172 = arith.constant 0 : index
    %506 = vector.load %arg10[%c4_170, %c0_171, %c0_172] : memref<8x2x8xf32, #tpu.memory_space<vmem>>, vector<1x2x8xf32>
    %507 = vector.shape_cast %506 : vector<1x2x8xf32> to vector<2x8xf32>
    %508 = vector.shape_cast %505 : vector<2x8xf32> to vector<1x2x8xf32>
    tpu.vector_store %arg10[%c4_170, %c0_171, %c0_172], %508 {strides = array<i32>} : memref<8x2x8xf32, #tpu.memory_space<vmem>>, vector<1x2x8xf32>,
    %c4_173 = arith.constant 4 : index
    %c0_174 = arith.constant 0 : index
    %c0_175 = arith.constant 0 : index
    %509 = vector.load %arg11[%c4_173, %c0_174, %c0_175] : memref<8x2x8xi32, #tpu.memory_space<vmem>>, vector<1x2x8xi32>
    %510 = vector.shape_cast %509 : vector<1x2x8xi32> to vector<2x8xi32>
    %511 = vector.shape_cast %502 : vector<2x8xi32> to vector<1x2x8xi32>
    tpu.vector_store %arg11[%c4_173, %c0_174, %c0_175], %511 {strides = array<i32>} : memref<8x2x8xi32, #tpu.memory_space<vmem>>, vector<1x2x8xi32>,
    %512 = vector.shape_cast %505 : vector<2x8xf32> to vector<2x1x8xf32>
    %513 = vector.shape_cast %417 : vector<8x8xf32> to vector<1x8x8xf32>
    %514 = vector.broadcast %512 : vector<2x1x8xf32> to vector<2x8x8xf32>
    %515 = vector.broadcast %513 : vector<1x8x8xf32> to vector<2x8x8xf32>
    %516 = arith.addf %514, %515 : vector<2x8x8xf32>
    %cst_176 = arith.constant dense<0xFF800000> : vector<2x8xf32>
    %517 = vector.multi_reduction <maximumf>, %516, %cst_176 [2] : vector<2x8x8xf32> to vector<2x8xf32>
    %518 = vector.shape_cast %517 : vector<2x8xf32> to vector<2x8x1xf32>
    %519 = vector.broadcast %518 : vector<2x8x1xf32> to vector<2x8x8xf32>
    %520 = arith.cmpf oeq, %516, %519 : vector<2x8x8xf32>
    %c8_i32_177 = arith.constant 8 : i32
    %521 = vector.broadcast %c8_i32_177 : i32 to vector<2x8x8xi32>
    %522 = arith.select %520, %418, %521 : vector<2x8x8xi1>, vector<2x8x8xi32>
    %cst_178 = arith.constant dense<2147483647> : vector<2x8xi32>
    %523 = vector.multi_reduction <minsi>, %522, %cst_178 [2] : vector<2x8x8xi32> to vector<2x8xi32>
    %c5_179 = arith.constant 5 : index
    %c0_180 = arith.constant 0 : index
    %c0_181 = arith.constant 0 : index
    %524 = vector.load %arg9[%c5_179, %c0_180, %c0_181] : memref<8x2x8xf32, #tpu.memory_space<vmem>>, vector<1x2x8xf32>
    %525 = vector.shape_cast %524 : vector<1x2x8xf32> to vector<2x8xf32>
    %526 = arith.addf %525, %517 : vector<2x8xf32>
    %c5_182 = arith.constant 5 : index
    %c0_183 = arith.constant 0 : index
    %c0_184 = arith.constant 0 : index
    %527 = vector.load %arg10[%c5_182, %c0_183, %c0_184] : memref<8x2x8xf32, #tpu.memory_space<vmem>>, vector<1x2x8xf32>
    %528 = vector.shape_cast %527 : vector<1x2x8xf32> to vector<2x8xf32>
    %529 = vector.shape_cast %526 : vector<2x8xf32> to vector<1x2x8xf32>
    tpu.vector_store %arg10[%c5_182, %c0_183, %c0_184], %529 {strides = array<i32>} : memref<8x2x8xf32, #tpu.memory_space<vmem>>, vector<1x2x8xf32>,
    %c5_185 = arith.constant 5 : index
    %c0_186 = arith.constant 0 : index
    %c0_187 = arith.constant 0 : index
    %530 = vector.load %arg11[%c5_185, %c0_186, %c0_187] : memref<8x2x8xi32, #tpu.memory_space<vmem>>, vector<1x2x8xi32>
    %531 = vector.shape_cast %530 : vector<1x2x8xi32> to vector<2x8xi32>
    %532 = vector.shape_cast %523 : vector<2x8xi32> to vector<1x2x8xi32>
    tpu.vector_store %arg11[%c5_185, %c0_186, %c0_187], %532 {strides = array<i32>} : memref<8x2x8xi32, #tpu.memory_space<vmem>>, vector<1x2x8xi32>,
    %533 = vector.shape_cast %526 : vector<2x8xf32> to vector<2x1x8xf32>
    %534 = vector.shape_cast %417 : vector<8x8xf32> to vector<1x8x8xf32>
    %535 = vector.broadcast %533 : vector<2x1x8xf32> to vector<2x8x8xf32>
    %536 = vector.broadcast %534 : vector<1x8x8xf32> to vector<2x8x8xf32>
    %537 = arith.addf %535, %536 : vector<2x8x8xf32>
    %cst_188 = arith.constant dense<0xFF800000> : vector<2x8xf32>
    %538 = vector.multi_reduction <maximumf>, %537, %cst_188 [2] : vector<2x8x8xf32> to vector<2x8xf32>
    %539 = vector.shape_cast %538 : vector<2x8xf32> to vector<2x8x1xf32>
    %540 = vector.broadcast %539 : vector<2x8x1xf32> to vector<2x8x8xf32>
    %541 = arith.cmpf oeq, %537, %540 : vector<2x8x8xf32>
    %c8_i32_189 = arith.constant 8 : i32
    %542 = vector.broadcast %c8_i32_189 : i32 to vector<2x8x8xi32>
    %543 = arith.select %541, %418, %542 : vector<2x8x8xi1>, vector<2x8x8xi32>
    %cst_190 = arith.constant dense<2147483647> : vector<2x8xi32>
    %544 = vector.multi_reduction <minsi>, %543, %cst_190 [2] : vector<2x8x8xi32> to vector<2x8xi32>
    %c6_191 = arith.constant 6 : index
    %c0_192 = arith.constant 0 : index
    %c0_193 = arith.constant 0 : index
    %545 = vector.load %arg9[%c6_191, %c0_192, %c0_193] : memref<8x2x8xf32, #tpu.memory_space<vmem>>, vector<1x2x8xf32>
    %546 = vector.shape_cast %545 : vector<1x2x8xf32> to vector<2x8xf32>
    %547 = arith.addf %546, %538 : vector<2x8xf32>
    %c6_194 = arith.constant 6 : index
    %c0_195 = arith.constant 0 : index
    %c0_196 = arith.constant 0 : index
    %548 = vector.load %arg10[%c6_194, %c0_195, %c0_196] : memref<8x2x8xf32, #tpu.memory_space<vmem>>, vector<1x2x8xf32>
    %549 = vector.shape_cast %548 : vector<1x2x8xf32> to vector<2x8xf32>
    %550 = vector.shape_cast %547 : vector<2x8xf32> to vector<1x2x8xf32>
    tpu.vector_store %arg10[%c6_194, %c0_195, %c0_196], %550 {strides = array<i32>} : memref<8x2x8xf32, #tpu.memory_space<vmem>>, vector<1x2x8xf32>,
    %c6_197 = arith.constant 6 : index
    %c0_198 = arith.constant 0 : index
    %c0_199 = arith.constant 0 : index
    %551 = vector.load %arg11[%c6_197, %c0_198, %c0_199] : memref<8x2x8xi32, #tpu.memory_space<vmem>>, vector<1x2x8xi32>
    %552 = vector.shape_cast %551 : vector<1x2x8xi32> to vector<2x8xi32>
    %553 = vector.shape_cast %544 : vector<2x8xi32> to vector<1x2x8xi32>
    tpu.vector_store %arg11[%c6_197, %c0_198, %c0_199], %553 {strides = array<i32>} : memref<8x2x8xi32, #tpu.memory_space<vmem>>, vector<1x2x8xi32>,
    %554 = vector.shape_cast %547 : vector<2x8xf32> to vector<2x1x8xf32>
    %555 = vector.shape_cast %417 : vector<8x8xf32> to vector<1x8x8xf32>
    %556 = vector.broadcast %554 : vector<2x1x8xf32> to vector<2x8x8xf32>
    %557 = vector.broadcast %555 : vector<1x8x8xf32> to vector<2x8x8xf32>
    %558 = arith.addf %556, %557 : vector<2x8x8xf32>
    %cst_200 = arith.constant dense<0xFF800000> : vector<2x8xf32>
    %559 = vector.multi_reduction <maximumf>, %558, %cst_200 [2] : vector<2x8x8xf32> to vector<2x8xf32>
    %560 = vector.shape_cast %559 : vector<2x8xf32> to vector<2x8x1xf32>
    %561 = vector.broadcast %560 : vector<2x8x1xf32> to vector<2x8x8xf32>
    %562 = arith.cmpf oeq, %558, %561 : vector<2x8x8xf32>
    %c8_i32_201 = arith.constant 8 : i32
    %563 = vector.broadcast %c8_i32_201 : i32 to vector<2x8x8xi32>
    %564 = arith.select %562, %418, %563 : vector<2x8x8xi1>, vector<2x8x8xi32>
    %cst_202 = arith.constant dense<2147483647> : vector<2x8xi32>
    %565 = vector.multi_reduction <minsi>, %564, %cst_202 [2] : vector<2x8x8xi32> to vector<2x8xi32>
    %c7_203 = arith.constant 7 : index
    %c0_204 = arith.constant 0 : index
    %c0_205 = arith.constant 0 : index
    %566 = vector.load %arg9[%c7_203, %c0_204, %c0_205] : memref<8x2x8xf32, #tpu.memory_space<vmem>>, vector<1x2x8xf32>
    %567 = vector.shape_cast %566 : vector<1x2x8xf32> to vector<2x8xf32>
    %568 = arith.addf %567, %559 : vector<2x8xf32>
    %c7_206 = arith.constant 7 : index
    %c0_207 = arith.constant 0 : index
    %c0_208 = arith.constant 0 : index
    %569 = vector.load %arg10[%c7_206, %c0_207, %c0_208] : memref<8x2x8xf32, #tpu.memory_space<vmem>>, vector<1x2x8xf32>
    %570 = vector.shape_cast %569 : vector<1x2x8xf32> to vector<2x8xf32>
    %571 = vector.shape_cast %568 : vector<2x8xf32> to vector<1x2x8xf32>
    tpu.vector_store %arg10[%c7_206, %c0_207, %c0_208], %571 {strides = array<i32>} : memref<8x2x8xf32, #tpu.memory_space<vmem>>, vector<1x2x8xf32>,
    %c7_209 = arith.constant 7 : index
    %c0_210 = arith.constant 0 : index
    %c0_211 = arith.constant 0 : index
    %572 = vector.load %arg11[%c7_209, %c0_210, %c0_211] : memref<8x2x8xi32, #tpu.memory_space<vmem>>, vector<1x2x8xi32>
    %573 = vector.shape_cast %572 : vector<1x2x8xi32> to vector<2x8xi32>
    %574 = vector.shape_cast %565 : vector<2x8xi32> to vector<1x2x8xi32>
    tpu.vector_store %arg11[%c7_209, %c0_210, %c0_211], %574 {strides = array<i32>} : memref<8x2x8xi32, #tpu.memory_space<vmem>>, vector<1x2x8xi32>,
    return
  }
}

</mosaic_0001>

<llo_original>
// kernel: _device_forward.1
$region0: #{_device_forward.1}
  #allocation0 [shape = 'u32[]', space=smem, size = 0x4, offset = 0x4, fixed_abs, tag = 'smem constant byte address 0x4 - core index']
  #allocation1 [shape = 'u32[144,128]{1,0:T(1,128)}', space=vmem, size = 0x12000, scoped, tag = 'internal scratch']
  #allocation2 [shape = 'f32[16,16]{1,0:T(8,128)}', space=vmem, size = 0x2000, scoped, tag = 'scratch operand']
  #allocation3 [shape = 'f32[16,16]{1,0:T(8,128)}', space=vmem, size = 0x2000, scoped, tag = 'scratch operand']
  %s0 = inlined_call_operand.vmem [shape: f32[16,16], index: 0, kind: input, shape index: {}]
  %s1 = inlined_call_operand.vmem [shape: f32[16,128], index: 1, kind: input, shape index: {}]
  %s2 = inlined_call_operand.vmem [shape: f32[2,16,64], index: 2, kind: input, shape index: {}]
  %s3 = inlined_call_operand.vmem [shape: f32[2,1,64], index: 3, kind: input, shape index: {}]
  %s4 = inlined_call_operand.vmem [shape: f32[2,2,16], index: 4, kind: input, shape index: {}]
  %s5 = inlined_call_operand.vmem [shape: f32[2,2,16], index: 5, kind: input, shape index: {}]
  %s6 = inlined_call_operand.vmem [shape: f32[2,16,8], index: 6, kind: input, shape index: {}]
  %s7 = inlined_call_operand.vmem [shape: f32[1,8], index: 7, kind: input, shape index: {}]
  %s8 = inlined_call_operand.vmem [shape: f32[8,8], index: 8, kind: input, shape index: {}]
  %s9 = inlined_call_operand.hbm [shape: f32[8,2,8], index: 9, kind: output, shape index: {0}]
  %s10 = inlined_call_operand.hbm [shape: f32[8,2,8], index: 10, kind: output, shape index: {1}]
  %s11 = inlined_call_operand.hbm [shape: s32[8,2,8], index: 11, kind: output, shape index: {2}]
  %12 = xla_tuple %s9, %s10, %s11
  %s13 = sld [smem:[#allocation0]]
  $region62: #{_device_forward.1} parent=0
    _
  %s15 = ssub.s32 1, %s13
  %s16 = scalar_select 0, %s15, %s13
  $region1: #{_device_forward.1} parent=0
    #allocation4 [shape = 'u8[8192]{0}', space=vmem, size = 0x2000, scoped, tag = 'output window, operand 0, single buffered']
    #allocation5 [shape = 's32[1]{0}', space=sflag, size = 0x4, scoped, tag = 'scoped memory for _device_forward.1']
    #allocation6 [shape = 'u8[8192]{0}', space=vmem, size = 0x2000, scoped, tag = 'output window, operand 1, single buffered']
    #allocation7 [shape = 's32[1]{0}', space=sflag, size = 0x4, scoped, tag = 'scoped memory for _device_forward.1']
    #allocation8 [shape = 'u8[8192]{0}', space=vmem, size = 0x2000, scoped, tag = 'output window, operand 2, single buffered']
    %17 = vsyncpa [#allocation5], 0
    %18 = vsyncpa [#allocation7], 0
    // Predicated region
    $region2: #{_device_forward.1} parent=1 // pred_check
      _
    $region3: #{_device_forward.1} parent=1 // pred_check_branch
      %20 = sbr.rel (0) target = $region5
    $region4: #{_device_forward.1} parent=1 // pred_region
      _
    $region5: #{_device_forward.1} parent=1 // pred_fallthru
      _
    // Predicated region
    $region6: #{_device_forward.1} parent=1 // pred_check
      _
    $region7: #{_device_forward.1} parent=1 // pred_check_branch
      %22 = sbr.rel (0) target = $region9
    $region8: #{_device_forward.1} parent=1 // pred_region
      _
    $region9: #{_device_forward.1} parent=1 // pred_fallthru
      _
    // Predicated region
    $region10: #{_device_forward.1} parent=1 // pred_check
      _
    $region11: #{_device_forward.1} parent=1 // pred_check_branch
      %24 = sbr.rel (0) target = $region13
    $region12: #{_device_forward.1} parent=1 // pred_region
      _
    $region13: #{_device_forward.1} parent=1 // pred_fallthru
      _
    // Predicated region
    $region14: #{_device_forward.1} parent=1 // pred_check
      _
    $region15: #{_device_forward.1} parent=1 // pred_check_branch
      %26 = sbr.rel (0) target = $region17
    $region16: #{_device_forward.1} parent=1 // pred_region
      _
    $region17: #{_device_forward.1} parent=1 // pred_fallthru
      _
    // Predicated region
    $region18: #{_device_forward.1} parent=1 // pred_check
      _
    $region19: #{_device_forward.1} parent=1 // pred_check_branch
      %28 = sbr.rel (0) target = $region21
    $region20: #{_device_forward.1} parent=1 // pred_region
      _
    $region21: #{_device_forward.1} parent=1 // pred_fallthru
      _
    // Predicated region
    $region22: #{_device_forward.1} parent=1 // pred_check
      _
    $region23: #{_device_forward.1} parent=1 // pred_check_branch
      %30 = sbr.rel (0) target = $region25
    $region24: #{_device_forward.1} parent=1 // pred_region
      _
    $region25: #{_device_forward.1} parent=1 // pred_fallthru
      _
    // Predicated region
    $region26: #{_device_forward.1} parent=1 // pred_check
      _
    $region27: #{_device_forward.1} parent=1 // pred_check_branch
      %32 = sbr.rel (0) target = $region29
    $region28: #{_device_forward.1} parent=1 // pred_region
      _
    $region29: #{_device_forward.1} parent=1 // pred_fallthru
      _
    // Predicated region
    $region30: #{_device_forward.1} parent=1 // pred_check
      _
    $region31: #{_device_forward.1} parent=1 // pred_check_branch
      %34 = sbr.rel (0) target = $region33
    $region32: #{_device_forward.1} parent=1 // pred_region
      _
    $region33: #{_device_forward.1} parent=1 // pred_fallthru
      _
    // Predicated region
    $region34: #{_device_forward.1} parent=1 // pred_check
      _
    $region35: #{_device_forward.1} parent=1 // pred_check_branch
      %36 = sbr.rel (0) target = $region37
    $region36: #{_device_forward.1} parent=1 // pred_region
      _
    $region37: #{_device_forward.1} parent=1 // pred_fallthru
      _
    %v37 = vld [vmem:[%s0] sm:$0xff]
    %v38 = vld [vmem:[%s0 + $0x8] sm:$0xff]
    %v39 = vld [vmem:[%s1] sm:$0xff]
    %v40 = vld [vmem:[%s1 + $0x8] sm:$0xff]
    %vm41 = vcmask 130048
    %v43 = vsel %vm41, %v37, 0
    %v46 = vsel %vm41, %v38, 0
    %48 = vmatprep.subr.mxu0 0.0
    %49 = vmatpush1.msra.mxu0 %v39
    %50 = vmatprep.subr.mxu0 0.0
    %51 = vmatpush1.msra.mxu0 %v40
    %52 = vmatprep.subr.mxu0 0.0
    %53 = vmatpush1.msra.mxu0 0.0
    %54 = vmatprep.subr.mxu0 0.0
    %55 = vmatpush1.msra.mxu0 0.0
    %56 = vmatprep.subr.mxu0 0.0
    %57 = vmatpush1.msra.mxu0 0.0
    %58 = vmatprep.subr.mxu0 0.0
    %59 = vmatpush1.msra.mxu0 0.0
    %60 = vmatprep.subr.mxu0 0.0
    %61 = vmatpush1.msra.mxu0 0.0
    %62 = vmatprep.subr.mxu0 0.0
    %63 = vmatpush1.msra.mxu0 0.0
    %64 = vmatprep.subr.mxu0 0.0
    %65 = vmatpush1.msra.mxu0 0.0
    %66 = vmatprep.subr.mxu0 0.0
    %67 = vmatpush1.msra.mxu0 0.0
    %68 = vmatprep.subr.mxu0 0.0
    %69 = vmatpush1.msra.mxu0 0.0
    %70 = vmatprep.subr.mxu0 0.0
    %71 = vmatpush1.msra.mxu0 0.0
    %72 = vmatprep.subr.mxu0 0.0
    %73 = vmatpush1.msra.mxu0 0.0
    %74 = vmatprep.subr.mxu0 0.0
    %75 = vmatpush1.msra.mxu0 0.0
    %76 = vmatprep.subr.mxu0 0.0
    %77 = vmatpush1.msra.mxu0 0.0
    %78 = vmatprep.subr.mxu0 0.0
    %79 = vmatpush1.msra.mxu0 0.0
    %80 = vmatprep.subr.mxu0 0.0
    %81 = vmatpush1.msra.mxu0 0.0
    %82 = vmatprep.subr.mxu0 0.0
    %83 = vmatpush1.msra.mxu0 0.0
    %84 = vmatprep.subr.mxu0 0.0
    %85 = vmatpush1.msra.mxu0 0.0
    %86 = vmatprep.subr.mxu0 0.0
    %87 = vmatpush1.msra.mxu0 0.0
    %88 = vmatprep.subr.mxu0 0.0
    %89 = vmatpush1.msra.mxu0 0.0
    %90 = vmatprep.subr.mxu0 0.0
    %91 = vmatpush1.msra.mxu0 0.0
    %92 = vmatprep.subr.mxu0 0.0
    %93 = vmatpush1.msra.mxu0 0.0
    %94 = vmatprep.subr.mxu0 0.0
    %95 = vmatpush1.msra.mxu0 0.0
    %96 = vmatprep.subr.mxu0 0.0
    %97 = vmatpush1.msra.mxu0 0.0
    %98 = vmatprep.subr.mxu0 0.0
    %99 = vmatpush1.msra.mxu0 0.0
    %100 = vmatprep.subr.mxu0 0.0
    %101 = vmatpush1.msra.mxu0 0.0
    %102 = vmatprep.subr.mxu0 0.0
    %103 = vmatpush1.msra.mxu0 0.0
    %104 = vmatprep.subr.mxu0 0.0
    %105 = vmatpush1.msra.mxu0 0.0
    %106 = vmatprep.subr.mxu0 0.0
    %107 = vmatpush1.msra.mxu0 0.0
    %108 = vmatprep.subr.mxu0 0.0
    %109 = vmatpush1.msra.mxu0 0.0
    %110 = vmatprep.subr.mxu0 0.0
    %111 = vmatpush1.msra.mxu0 0.0
    %112 = vmatprep.mubr.f32.mxu0 0.0
    %113 = vmatmul.mubr.f32.gmra.mrb[0].mxu0 %v43
    %v114 = vpop.f32.mrb[0].mxu0
    %v115 = vadd.f32 0.0, %v114
    %v116 = vpop.f32.mrb[0].mxu0
    %117 = vmatprep.mubr.f32.mxu0 0.0
    %118 = vmatmul.mubr.f32.gmra.mrb[0].mxu0 %v46
    %v119 = vpop.f32.mrb[0].mxu0
    %v120 = vadd.f32 0.0, %v119
    %v121 = vpop.f32.mrb[0].mxu0
    %122 = vdwg.mxu0
    %v123 = vld [vmem:[%s2] sm:$0xff]
    %v124 = vld [vmem:[%s2 + $0x8] sm:$0xff]
    %s125 = scalar_lea.vmem %s2, 16
    %v126 = vld [vmem:[%s125] sm:$0xff]
    %v127 = vld [vmem:[%s125 + $0x8] sm:$0xff]
    %v128 = vld [vmem:[%s3] sm:$0x1]
    %s129 = scalar_lea.vmem %s3, 1
    %v130 = vld [vmem:[%s129] sm:$0x1]
    %v131 = vld [vmem:[%s4] sm:$0x3]
    %v132 = vld [vmem:[%s5] sm:$0x3]
    %s133 = scalar_lea.vmem %s4, 2
    %v134 = vld [vmem:[%s133] sm:$0x3]
    %s135 = scalar_lea.vmem %s5, 2
    %v136 = vld [vmem:[%s135] sm:$0x3]
    %v138 = vsel %vm41, %v131, 0
    %140 = vmatprep.subr.mxu0 0.0
    %141 = vmatpush1.msra.mxu0 %v123
    %142 = vmatprep.subr.mxu0 0.0
    %143 = vmatpush1.msra.mxu0 %v124
    %144 = vmatprep.subr.mxu0 0.0
    %145 = vmatpush1.msra.mxu0 0.0
    %146 = vmatprep.subr.mxu0 0.0
    %147 = vmatpush1.msra.mxu0 0.0
    %148 = vmatprep.subr.mxu0 0.0
    %149 = vmatpush1.msra.mxu0 0.0
    %150 = vmatprep.subr.mxu0 0.0
    %151 = vmatpush1.msra.mxu0 0.0
    %152 = vmatprep.subr.mxu0 0.0
    %153 = vmatpush1.msra.mxu0 0.0
    %154 = vmatprep.subr.mxu0 0.0
    %155 = vmatpush1.msra.mxu0 0.0
    %156 = vmatprep.subr.mxu0 0.0
    %157 = vmatpush1.msra.mxu0 0.0
    %158 = vmatprep.subr.mxu0 0.0
    %159 = vmatpush1.msra.mxu0 0.0
    %160 = vmatprep.subr.mxu0 0.0
    %161 = vmatpush1.msra.mxu0 0.0
    %162 = vmatprep.subr.mxu0 0.0
    %163 = vmatpush1.msra.mxu0 0.0
    %164 = vmatprep.subr.mxu0 0.0
    %165 = vmatpush1.msra.mxu0 0.0
    %166 = vmatprep.subr.mxu0 0.0
    %167 = vmatpush1.msra.mxu0 0.0
    %168 = vmatprep.subr.mxu0 0.0
    %169 = vmatpush1.msra.mxu0 0.0
    %170 = vmatprep.subr.mxu0 0.0
    %171 = vmatpush1.msra.mxu0 0.0
    %172 = vmatprep.subr.mxu0 0.0
    %173 = vmatpush1.msra.mxu0 0.0
    %174 = vmatprep.subr.mxu0 0.0
    %175 = vmatpush1.msra.mxu0 0.0
    %176 = vmatprep.subr.mxu0 0.0
    %177 = vmatpush1.msra.mxu0 0.0
    %178 = vmatprep.subr.mxu0 0.0
    %179 = vmatpush1.msra.mxu0 0.0
    %180 = vmatprep.subr.mxu0 0.0
    %181 = vmatpush1.msra.mxu0 0.0
    %182 = vmatprep.subr.mxu0 0.0
    %183 = vmatpush1.msra.mxu0 0.0
    %184 = vmatprep.subr.mxu0 0.0
    %185 = vmatpush1.msra.mxu0 0.0
    %186 = vmatprep.subr.mxu0 0.0
    %187 = vmatpush1.msra.mxu0 0.0
    %188 = vmatprep.subr.mxu0 0.0
    %189 = vmatpush1.msra.mxu0 0.0
    %190 = vmatprep.subr.mxu0 0.0
    %191 = vmatpush1.msra.mxu0 0.0
    %192 = vmatprep.subr.mxu0 0.0
    %193 = vmatpush1.msra.mxu0 0.0
    %194 = vmatprep.subr.mxu0 0.0
    %195 = vmatpush1.msra.mxu0 0.0
    %196 = vmatprep.subr.mxu0 0.0
    %197 = vmatpush1.msra.mxu0 0.0
    %198 = vmatprep.subr.mxu0 0.0
    %199 = vmatpush1.msra.mxu0 0.0
    %200 = vmatprep.subr.mxu0 0.0
    %201 = vmatpush1.msra.mxu0 0.0
    %202 = vmatprep.subr.mxu0 0.0
    %203 = vmatpush1.msra.mxu0 0.0
    %204 = vmatprep.mubr.f32.mxu0 0.0
    %205 = vmatmul.mubr.f32.gmra.mrb[0].mxu0 %v138
    %v206 = vpop.f32.mrb[0].mxu0
    %v207 = vadd.f32 0.0, %v206
    %v208 = vpop.f32.mrb[0].mxu0
    %209 = vdwg.mxu0
    %v210 = vadd.f32 %v115, %v207
    %v212 = vlaneseq
    %v213 = vshrl.u32 %v212, 7
    %v214 = vsub.s32 0, %v213
    %v215 = vrot.slane %v128, %v214
    %v217 = vadd.f32 %v210, %v215
    %v218 = vxor.u32 %v217, 2147483648
    %v219 = vmul.f32 %v218, 1.442695
    %v220 = vpow.pop %v219
    %v221 = vadd.f32 %v220, 1.0
    %v222 = vrcp.pop %v221
    %v223 = vmul.f32 1.0, %v222
    %v224 = vtanh.pop %v217
    %226 = vrot.lane.b32.xlu0 %v132, 16
    %v227 = vpop.permute.xlu0 %226
    %v229 = vmul.f32 %v223, %v227
    %231 = vrot.lane.b32.xlu0 %v224, 80
    %v232 = vpop.permute.xlu0 %231
    %v234 = vmul.f32 %v223, %v232
    %236 = vrot.lane.b32.xlu0 %v234, 16
    %v237 = vpop.permute.xlu0 %236
    %v239 = vadd.f32 %v229, %v237
    %v240 = vtanh.pop %v239
    %242 = vrot.lane.b32.xlu0 %v240, 16
    %v243 = vpop.permute.xlu0 %242
    %v245 = vmul.f32 %v223, %v243
    %247 = vrot.lane.b32.xlu0 %v245, 96
    %v248 = vpop.permute.xlu0 %247
    %vm250 = vcmask 123904
    %251 = vst.msk [vmem:[#allocation2] sm:$0x3] %vm250, %v248
    %v253 = vsel %vm41, %v134, 0
    %255 = vmatprep.subr.mxu0 0.0
    %256 = vmatpush1.msra.mxu0 %v126
    %257 = vmatprep.subr.mxu0 0.0
    %258 = vmatpush1.msra.mxu0 %v127
    %259 = vmatprep.subr.mxu0 0.0
    %260 = vmatpush1.msra.mxu0 0.0
    %261 = vmatprep.subr.mxu0 0.0
    %262 = vmatpush1.msra.mxu0 0.0
    %263 = vmatprep.subr.mxu0 0.0
    %264 = vmatpush1.msra.mxu0 0.0
    %265 = vmatprep.subr.mxu0 0.0
    %266 = vmatpush1.msra.mxu0 0.0
    %267 = vmatprep.subr.mxu0 0.0
    %268 = vmatpush1.msra.mxu0 0.0
    %269 = vmatprep.subr.mxu0 0.0
    %270 = vmatpush1.msra.mxu0 0.0
    %271 = vmatprep.subr.mxu0 0.0
    %272 = vmatpush1.msra.mxu0 0.0
    %273 = vmatprep.subr.mxu0 0.0
    %274 = vmatpush1.msra.mxu0 0.0
    %275 = vmatprep.subr.mxu0 0.0
    %276 = vmatpush1.msra.mxu0 0.0
    %277 = vmatprep.subr.mxu0 0.0
    %278 = vmatpush1.msra.mxu0 0.0
    %279 = vmatprep.subr.mxu0 0.0
    %280 = vmatpush1.msra.mxu0 0.0
    %281 = vmatprep.subr.mxu0 0.0
    %282 = vmatpush1.msra.mxu0 0.0
    %283 = vmatprep.subr.mxu0 0.0
    %284 = vmatpush1.msra.mxu0 0.0
    %285 = vmatprep.subr.mxu0 0.0
    %286 = vmatpush1.msra.mxu0 0.0
    %287 = vmatprep.subr.mxu0 0.0
    %288 = vmatpush1.msra.mxu0 0.0
    %289 = vmatprep.subr.mxu0 0.0
    %290 = vmatpush1.msra.mxu0 0.0
    %291 = vmatprep.subr.mxu0 0.0
    %292 = vmatpush1.msra.mxu0 0.0
    %293 = vmatprep.subr.mxu0 0.0
    %294 = vmatpush1.msra.mxu0 0.0
    %295 = vmatprep.subr.mxu0 0.0
    %296 = vmatpush1.msra.mxu0 0.0
    %297 = vmatprep.subr.mxu0 0.0
    %298 = vmatpush1.msra.mxu0 0.0
    %299 = vmatprep.subr.mxu0 0.0
    %300 = vmatpush1.msra.mxu0 0.0
    %301 = vmatprep.subr.mxu0 0.0
    %302 = vmatpush1.msra.mxu0 0.0
    %303 = vmatprep.subr.mxu0 0.0
    %304 = vmatpush1.msra.mxu0 0.0
    %305 = vmatprep.subr.mxu0 0.0
    %306 = vmatpush1.msra.mxu0 0.0
    %307 = vmatprep.subr.mxu0 0.0
    %308 = vmatpush1.msra.mxu0 0.0
    %309 = vmatprep.subr.mxu0 0.0
    %310 = vmatpush1.msra.mxu0 0.0
    %311 = vmatprep.subr.mxu0 0.0
    %312 = vmatpush1.msra.mxu0 0.0
    %313 = vmatprep.subr.mxu0 0.0
    %314 = vmatpush1.msra.mxu0 0.0
    %315 = vmatprep.subr.mxu0 0.0
    %316 = vmatpush1.msra.mxu0 0.0
    %317 = vmatprep.subr.mxu0 0.0
    %318 = vmatpush1.msra.mxu0 0.0
    %319 = vmatprep.mubr.f32.mxu0 0.0
    %320 = vmatmul.mubr.f32.gmra.mrb[0].mxu0 %v253
    %v321 = vpop.f32.mrb[0].mxu0
    %v322 = vadd.f32 0.0, %v321
    %v323 = vpop.f32.mrb[0].mxu0
    %324 = vdwg.mxu0
    %v326 = vrot.slane %v322, 2
    %327 = vrot.lane.b32.xlu0 %v326, 64
    %v328 = vpop.permute.xlu0 %327
    %v330 = vadd.f32 %v120, %v328
    %v332 = vlaneseq
    %v333 = vshrl.u32 %v332, 7
    %v334 = vsub.s32 0, %v333
    %v335 = vrot.slane %v130, %v334
    %336 = vrot.lane.b32.xlu0 %v335, 64
    %v337 = vpop.permute.xlu0 %336
    %v339 = vadd.f32 %v330, %v337
    %v340 = vxor.u32 %v339, 2147483648
    %v341 = vmul.f32 %v340, 1.442695
    %v342 = vpow.pop %v341
    %v343 = vadd.f32 %v342, 1.0
    %v344 = vrcp.pop %v343
    %v345 = vmul.f32 1.0, %v344
    %v346 = vtanh.pop %v339
    %v348 = vrot.slane %v136, 2
    %349 = vrot.lane.b32.xlu0 %v348, 80
    %v350 = vpop.permute.xlu0 %349
    %v352 = vmul.f32 %v345, %v350
    %354 = vrot.lane.b32.xlu0 %v346, 80
    %v355 = vpop.permute.xlu0 %354
    %v357 = vmul.f32 %v345, %v355
    %359 = vrot.lane.b32.xlu0 %v357, 16
    %v360 = vpop.permute.xlu0 %359
    %v362 = vadd.f32 %v352, %v360
    %v363 = vtanh.pop %v362
    %365 = vrot.lane.b32.xlu0 %v363, 16
    %v366 = vpop.permute.xlu0 %365
    %v368 = vmul.f32 %v345, %v366
    %370 = vrot.lane.b32.xlu0 %v368, 32
    %v371 = vpop.permute.xlu0 %370
    %vm373 = vcmask 130054
    %374 = vst.msk [vmem:[#allocation3 + $0x8] sm:$0xc0] %vm373, %v371
    %v375 = vsel %vm41, %v248, 0
    %377 = vmatprep.subr.mxu0 0.0
    %378 = vmatpush1.msra.mxu0 %v123
    %379 = vmatprep.subr.mxu0 0.0
    %380 = vmatpush1.msra.mxu0 %v124
    %381 = vmatprep.subr.mxu0 0.0
    %382 = vmatpush1.msra.mxu0 0.0
    %383 = vmatprep.subr.mxu0 0.0
    %384 = vmatpush1.msra.mxu0 0.0
    %385 = vmatprep.subr.mxu0 0.0
    %386 = vmatpush1.msra.mxu0 0.0
    %387 = vmatprep.subr.mxu0 0.0
    %388 = vmatpush1.msra.mxu0 0.0
    %389 = vmatprep.subr.mxu0 0.0
    %390 = vmatpush1.msra.mxu0 0.0
    %391 = vmatprep.subr.mxu0 0.0
    %392 = vmatpush1.msra.mxu0 0.0
    %393 = vmatprep.subr.mxu0 0.0
    %394 = vmatpush1.msra.mxu0 0.0
    %395 = vmatprep.subr.mxu0 0.0
    %396 = vmatpush1.msra.mxu0 0.0
    %397 = vmatprep.subr.mxu0 0.0
    %398 = vmatpush1.msra.mxu0 0.0
    %399 = vmatprep.subr.mxu0 0.0
    %400 = vmatpush1.msra.mxu0 0.0
    %401 = vmatprep.subr.mxu0 0.0
    %402 = vmatpush1.msra.mxu0 0.0
    %403 = vmatprep.subr.mxu0 0.0
    %404 = vmatpush1.msra.mxu0 0.0
    %405 = vmatprep.subr.mxu0 0.0
    %406 = vmatpush1.msra.mxu0 0.0
    %407 = vmatprep.subr.mxu0 0.0
    %408 = vmatpush1.msra.mxu0 0.0
    %409 = vmatprep.subr.mxu0 0.0
    %410 = vmatpush1.msra.mxu0 0.0
    %411 = vmatprep.subr.mxu0 0.0
    %412 = vmatpush1.msra.mxu0 0.0
    %413 = vmatprep.subr.mxu0 0.0
    %414 = vmatpush1.msra.mxu0 0.0
    %415 = vmatprep.subr.mxu0 0.0
    %416 = vmatpush1.msra.mxu0 0.0
    %417 = vmatprep.subr.mxu0 0.0
    %418 = vmatpush1.msra.mxu0 0.0
    %419 = vmatprep.subr.mxu0 0.0
    %420 = vmatpush1.msra.mxu0 0.0
    %421 = vmatprep.subr.mxu0 0.0
    %422 = vmatpush1.msra.mxu0 0.0
    %423 = vmatprep.subr.mxu0 0.0
    %424 = vmatpush1.msra.mxu0 0.0
    %425 = vmatprep.subr.mxu0 0.0
    %426 = vmatpush1.msra.mxu0 0.0
    %427 = vmatprep.subr.mxu0 0.0
    %428 = vmatpush1.msra.mxu0 0.0
    %429 = vmatprep.subr.mxu0 0.0
    %430 = vmatpush1.msra.mxu0 0.0
    %431 = vmatprep.subr.mxu0 0.0
    %432 = vmatpush1.msra.mxu0 0.0
    %433 = vmatprep.subr.mxu0 0.0
    %434 = vmatpush1.msra.mxu0 0.0
    %435 = vmatprep.subr.mxu0 0.0
    %436 = vmatpush1.msra.mxu0 0.0
    %437 = vmatprep.subr.mxu0 0.0
    %438 = vmatpush1.msra.mxu0 0.0
    %439 = vmatprep.subr.mxu0 0.0
    %440 = vmatpush1.msra.mxu0 0.0
    %441 = vmatprep.mubr.f32.mxu0 0.0
    %442 = vmatmul.mubr.f32.gmra.mrb[0].mxu0 %v375
    %v443 = vpop.f32.mrb[0].mxu0
    %v444 = vadd.f32 0.0, %v443
    %v445 = vpop.f32.mrb[0].mxu0
    %446 = vdwg.mxu0
    %v448 = vrot.slane %v444, 6
    %v450 = vadd.f32 %v115, %v448
    %v451 = vadd.f32 %v450, %v215
    %v452 = vxor.u32 %v451, 2147483648
    %v453 = vmul.f32 %v452, 1.442695
    %v454 = vpow.pop %v453
    %v455 = vadd.f32 %v454, 1.0
    %v456 = vrcp.pop %v455
    %v457 = vmul.f32 1.0, %v456
    %v458 = vtanh.pop %v451
    %v460 = vrot.slane %v239, 6
    %v462 = vmul.f32 %v457, %v460
    %464 = vrot.lane.b32.xlu0 %v458, 80
    %v465 = vpop.permute.xlu0 %464
    %v467 = vmul.f32 %v457, %v465
    %469 = vrot.lane.b32.xlu0 %v467, 16
    %v470 = vpop.permute.xlu0 %469
    %v472 = vadd.f32 %v462, %v470
    %v473 = vtanh.pop %v472
    %475 = vrot.lane.b32.xlu0 %v473, 16
    %v476 = vpop.permute.xlu0 %475
    %v478 = vmul.f32 %v457, %v476
    %480 = vrot.lane.b32.xlu0 %v478, 96
    %v481 = vpop.permute.xlu0 %480
    %vm483 = vcmask 125954
    %484 = vst.msk [vmem:[#allocation2] sm:$0xc] %vm483, %v481
    %v485 = vrot.slane %v368, 6
    %486 = vrot.lane.b32.xlu0 %v485, 32
    %v487 = vpop.permute.xlu0 %486
    %v488 = vsel %vm41, %v487, 0
    %490 = vmatprep.subr.mxu0 0.0
    %491 = vmatpush1.msra.mxu0 %v126
    %492 = vmatprep.subr.mxu0 0.0
    %493 = vmatpush1.msra.mxu0 %v127
    %494 = vmatprep.subr.mxu0 0.0
    %495 = vmatpush1.msra.mxu0 0.0
    %496 = vmatprep.subr.mxu0 0.0
    %497 = vmatpush1.msra.mxu0 0.0
    %498 = vmatprep.subr.mxu0 0.0
    %499 = vmatpush1.msra.mxu0 0.0
    %500 = vmatprep.subr.mxu0 0.0
    %501 = vmatpush1.msra.mxu0 0.0
    %502 = vmatprep.subr.mxu0 0.0
    %503 = vmatpush1.msra.mxu0 0.0
    %504 = vmatprep.subr.mxu0 0.0
    %505 = vmatpush1.msra.mxu0 0.0
    %506 = vmatprep.subr.mxu0 0.0
    %507 = vmatpush1.msra.mxu0 0.0
    %508 = vmatprep.subr.mxu0 0.0
    %509 = vmatpush1.msra.mxu0 0.0
    %510 = vmatprep.subr.mxu0 0.0
    %511 = vmatpush1.msra.mxu0 0.0
    %512 = vmatprep.subr.mxu0 0.0
    %513 = vmatpush1.msra.mxu0 0.0
    %514 = vmatprep.subr.mxu0 0.0
    %515 = vmatpush1.msra.mxu0 0.0
    %516 = vmatprep.subr.mxu0 0.0
    %517 = vmatpush1.msra.mxu0 0.0
    %518 = vmatprep.subr.mxu0 0.0
    %519 = vmatpush1.msra.mxu0 0.0
    %520 = vmatprep.subr.mxu0 0.0
    %521 = vmatpush1.msra.mxu0 0.0
    %522 = vmatprep.subr.mxu0 0.0
    %523 = vmatpush1.msra.mxu0 0.0
    %524 = vmatprep.subr.mxu0 0.0
    %525 = vmatpush1.msra.mxu0 0.0
    %526 = vmatprep.subr.mxu0 0.0
    %527 = vmatpush1.msra.mxu0 0.0
    %528 = vmatprep.subr.mxu0 0.0
    %529 = vmatpush1.msra.mxu0 0.0
    %530 = vmatprep.subr.mxu0 0.0
    %531 = vmatpush1.msra.mxu0 0.0
    %532 = vmatprep.subr.mxu0 0.0
    %533 = vmatpush1.msra.mxu0 0.0
    %534 = vmatprep.subr.mxu0 0.0
    %535 = vmatpush1.msra.mxu0 0.0
    %536 = vmatprep.subr.mxu0 0.0
    %537 = vmatpush1.msra.mxu0 0.0
    %538 = vmatprep.subr.mxu0 0.0
    %539 = vmatpush1.msra.mxu0 0.0
    %540 = vmatprep.subr.mxu0 0.0
    %541 = vmatpush1.msra.mxu0 0.0
    %542 = vmatprep.subr.mxu0 0.0
    %543 = vmatpush1.msra.mxu0 0.0
    %544 = vmatprep.subr.mxu0 0.0
    %545 = vmatpush1.msra.mxu0 0.0
    %546 = vmatprep.subr.mxu0 0.0
    %547 = vmatpush1.msra.mxu0 0.0
    %548 = vmatprep.subr.mxu0 0.0
    %549 = vmatpush1.msra.mxu0 0.0
    %550 = vmatprep.subr.mxu0 0.0
    %551 = vmatpush1.msra.mxu0 0.0
    %552 = vmatprep.subr.mxu0 0.0
    %553 = vmatpush1.msra.mxu0 0.0
    %554 = vmatprep.mubr.f32.mxu0 0.0
    %555 = vmatmul.mubr.f32.gmra.mrb[0].mxu0 %v488
    %v556 = vpop.f32.mrb[0].mxu0
    %v557 = vadd.f32 0.0, %v556
    %v558 = vpop.f32.mrb[0].mxu0
    %559 = vdwg.mxu0
    %v561 = vrot.slane %v557, 4
    %562 = vrot.lane.b32.xlu0 %v561, 64
    %v563 = vpop.permute.xlu0 %562
    %v565 = vadd.f32 %v120, %v563
    %v566 = vadd.f32 %v565, %v337
    %v567 = vxor.u32 %v566, 2147483648
    %v568 = vmul.f32 %v567, 1.442695
    %v569 = vpow.pop %v568
    %v570 = vadd.f32 %v569, 1.0
    %v571 = vrcp.pop %v570
    %v572 = vmul.f32 1.0, %v571
    %v573 = vtanh.pop %v566
    %v575 = vrot.slane %v362, 2
    %v577 = vmul.f32 %v572, %v575
    %579 = vrot.lane.b32.xlu0 %v573, 80
    %v580 = vpop.permute.xlu0 %579
    %v582 = vmul.f32 %v572, %v580
    %584 = vrot.lane.b32.xlu0 %v582, 16
    %v585 = vpop.permute.xlu0 %584
    %v587 = vadd.f32 %v577, %v585
    %v588 = vtanh.pop %v587
    %590 = vrot.lane.b32.xlu0 %v588, 16
    %v591 = vpop.permute.xlu0 %590
    %v593 = vmul.f32 %v572, %v591
    %595 = vrot.lane.b32.xlu0 %v593, 32
    %v596 = vpop.permute.xlu0 %595
    %vm598 = vcmask 128004
    %599 = vst.msk [vmem:[#allocation3 + $0x8] sm:$0x30] %vm598, %v596
    %v600 = vrot.slane %v478, 2
    %601 = vrot.lane.b32.xlu0 %v600, 96
    %v602 = vpop.permute.xlu0 %601
    %v603 = vsel %vm41, %v602, 0
    %605 = vmatprep.subr.mxu0 0.0
    %606 = vmatpush1.msra.mxu0 %v123
    %607 = vmatprep.subr.mxu0 0.0
    %608 = vmatpush1.msra.mxu0 %v124
    %609 = vmatprep.subr.mxu0 0.0
    %610 = vmatpush1.msra.mxu0 0.0
    %611 = vmatprep.subr.mxu0 0.0
    %612 = vmatpush1.msra.mxu0 0.0
    %613 = vmatprep.subr.mxu0 0.0
    %614 = vmatpush1.msra.mxu0 0.0
    %615 = vmatprep.subr.mxu0 0.0
    %616 = vmatpush1.msra.mxu0 0.0
    %617 = vmatprep.subr.mxu0 0.0
    %618 = vmatpush1.msra.mxu0 0.0
    %619 = vmatprep.subr.mxu0 0.0
    %620 = vmatpush1.msra.mxu0 0.0
    %621 = vmatprep.subr.mxu0 0.0
    %622 = vmatpush1.msra.mxu0 0.0
    %623 = vmatprep.subr.mxu0 0.0
    %624 = vmatpush1.msra.mxu0 0.0
    %625 = vmatprep.subr.mxu0 0.0
    %626 = vmatpush1.msra.mxu0 0.0
    %627 = vmatprep.subr.mxu0 0.0
    %628 = vmatpush1.msra.mxu0 0.0
    %629 = vmatprep.subr.mxu0 0.0
    %630 = vmatpush1.msra.mxu0 0.0
    %631 = vmatprep.subr.mxu0 0.0
    %632 = vmatpush1.msra.mxu0 0.0
    %633 = vmatprep.subr.mxu0 0.0
    %634 = vmatpush1.msra.mxu0 0.0
    %635 = vmatprep.subr.mxu0 0.0
    %636 = vmatpush1.msra.mxu0 0.0
    %637 = vmatprep.subr.mxu0 0.0
    %638 = vmatpush1.msra.mxu0 0.0
    %639 = vmatprep.subr.mxu0 0.0
    %640 = vmatpush1.msra.mxu0 0.0
    %641 = vmatprep.subr.mxu0 0.0
    %642 = vmatpush1.msra.mxu0 0.0
    %643 = vmatprep.subr.mxu0 0.0
    %644 = vmatpush1.msra.mxu0 0.0
    %645 = vmatprep.subr.mxu0 0.0
    %646 = vmatpush1.msra.mxu0 0.0
    %647 = vmatprep.subr.mxu0 0.0
    %648 = vmatpush1.msra.mxu0 0.0
    %649 = vmatprep.subr.mxu0 0.0
    %650 = vmatpush1.msra.mxu0 0.0
    %651 = vmatprep.subr.mxu0 0.0
    %652 = vmatpush1.msra.mxu0 0.0
    %653 = vmatprep.subr.mxu0 0.0
    %654 = vmatpush1.msra.mxu0 0.0
    %655 = vmatprep.subr.mxu0 0.0
    %656 = vmatpush1.msra.mxu0 0.0
    %657 = vmatprep.subr.mxu0 0.0
    %658 = vmatpush1.msra.mxu0 0.0
    %659 = vmatprep.subr.mxu0 0.0
    %660 = vmatpush1.msra.mxu0 0.0
    %661 = vmatprep.subr.mxu0 0.0
    %662 = vmatpush1.msra.mxu0 0.0
    %663 = vmatprep.subr.mxu0 0.0
    %664 = vmatpush1.msra.mxu0 0.0
    %665 = vmatprep.subr.mxu0 0.0
    %666 = vmatpush1.msra.mxu0 0.0
    %667 = vmatprep.subr.mxu0 0.0
    %668 = vmatpush1.msra.mxu0 0.0
    %669 = vmatprep.mubr.f32.mxu0 0.0
    %670 = vmatmul.mubr.f32.gmra.mrb[0].mxu0 %v603
    %v671 = vpop.f32.mrb[0].mxu0
    %v672 = vadd.f32 0.0, %v671
    %v673 = vpop.f32.mrb[0].mxu0
    %674 = vdwg.mxu0
    %v676 = vrot.slane %v672, 4
    %v678 = vadd.f32 %v115, %v676
    %v679 = vadd.f32 %v678, %v215
    %v680 = vxor.u32 %v679, 2147483648
    %v681 = vmul.f32 %v680, 1.442695
    %v682 = vpow.pop %v681
    %v683 = vadd.f32 %v682, 1.0
    %v684 = vrcp.pop %v683
    %v685 = vmul.f32 1.0, %v684
    %v686 = vtanh.pop %v679
    %v688 = vrot.slane %v472, 6
    %v690 = vmul.f32 %v685, %v688
    %692 = vrot.lane.b32.xlu0 %v686, 80
    %v693 = vpop.permute.xlu0 %692
    %v695 = vmul.f32 %v685, %v693
    %697 = vrot.lane.b32.xlu0 %v695, 16
    %v698 = vpop.permute.xlu0 %697
    %v700 = vadd.f32 %v690, %v698
    %v701 = vtanh.pop %v700
    %703 = vrot.lane.b32.xlu0 %v701, 16
    %v704 = vpop.permute.xlu0 %703
    %v706 = vmul.f32 %v685, %v704
    %708 = vrot.lane.b32.xlu0 %v706, 96
    %v709 = vpop.permute.xlu0 %708
    %711 = vst.msk [vmem:[#allocation2] sm:$0x30] %vm598, %v709
    %v712 = vrot.slane %v593, 4
    %713 = vrot.lane.b32.xlu0 %v712, 32
    %v714 = vpop.permute.xlu0 %713
    %v715 = vsel %vm41, %v714, 0
    %717 = vmatprep.subr.mxu0 0.0
    %718 = vmatpush1.msra.mxu0 %v126
    %719 = vmatprep.subr.mxu0 0.0
    %720 = vmatpush1.msra.mxu0 %v127
    %721 = vmatprep.subr.mxu0 0.0
    %722 = vmatpush1.msra.mxu0 0.0
    %723 = vmatprep.subr.mxu0 0.0
    %724 = vmatpush1.msra.mxu0 0.0
    %725 = vmatprep.subr.mxu0 0.0
    %726 = vmatpush1.msra.mxu0 0.0
    %727 = vmatprep.subr.mxu0 0.0
    %728 = vmatpush1.msra.mxu0 0.0
    %729 = vmatprep.subr.mxu0 0.0
    %730 = vmatpush1.msra.mxu0 0.0
    %731 = vmatprep.subr.mxu0 0.0
    %732 = vmatpush1.msra.mxu0 0.0
    %733 = vmatprep.subr.mxu0 0.0
    %734 = vmatpush1.msra.mxu0 0.0
    %735 = vmatprep.subr.mxu0 0.0
    %736 = vmatpush1.msra.mxu0 0.0
    %737 = vmatprep.subr.mxu0 0.0
    %738 = vmatpush1.msra.mxu0 0.0
    %739 = vmatprep.subr.mxu0 0.0
    %740 = vmatpush1.msra.mxu0 0.0
    %741 = vmatprep.subr.mxu0 0.0
    %742 = vmatpush1.msra.mxu0 0.0
    %743 = vmatprep.subr.mxu0 0.0
    %744 = vmatpush1.msra.mxu0 0.0
    %745 = vmatprep.subr.mxu0 0.0
    %746 = vmatpush1.msra.mxu0 0.0
    %747 = vmatprep.subr.mxu0 0.0
    %748 = vmatpush1.msra.mxu0 0.0
    %749 = vmatprep.subr.mxu0 0.0
    %750 = vmatpush1.msra.mxu0 0.0
    %751 = vmatprep.subr.mxu0 0.0
    %752 = vmatpush1.msra.mxu0 0.0
    %753 = vmatprep.subr.mxu0 0.0
    %754 = vmatpush1.msra.mxu0 0.0
    %755 = vmatprep.subr.mxu0 0.0
    %756 = vmatpush1.msra.mxu0 0.0
    %757 = vmatprep.subr.mxu0 0.0
    %758 = vmatpush1.msra.mxu0 0.0
    %759 = vmatprep.subr.mxu0 0.0
    %760 = vmatpush1.msra.mxu0 0.0
    %761 = vmatprep.subr.mxu0 0.0
    %762 = vmatpush1.msra.mxu0 0.0
    %763 = vmatprep.subr.mxu0 0.0
    %764 = vmatpush1.msra.mxu0 0.0
    %765 = vmatprep.subr.mxu0 0.0
    %766 = vmatpush1.msra.mxu0 0.0
    %767 = vmatprep.subr.mxu0 0.0
    %768 = vmatpush1.msra.mxu0 0.0
    %769 = vmatprep.subr.mxu0 0.0
    %770 = vmatpush1.msra.mxu0 0.0
    %771 = vmatprep.subr.mxu0 0.0
    %772 = vmatpush1.msra.mxu0 0.0
    %773 = vmatprep.subr.mxu0 0.0
    %774 = vmatpush1.msra.mxu0 0.0
    %775 = vmatprep.subr.mxu0 0.0
    %776 = vmatpush1.msra.mxu0 0.0
    %777 = vmatprep.subr.mxu0 0.0
    %778 = vmatpush1.msra.mxu0 0.0
    %779 = vmatprep.subr.mxu0 0.0
    %780 = vmatpush1.msra.mxu0 0.0
    %781 = vmatprep.mubr.f32.mxu0 0.0
    %782 = vmatmul.mubr.f32.gmra.mrb[0].mxu0 %v715
    %v783 = vpop.f32.mrb[0].mxu0
    %v784 = vadd.f32 0.0, %v783
    %v785 = vpop.f32.mrb[0].mxu0
    %786 = vdwg.mxu0
    %v788 = vrot.slane %v784, 6
    %789 = vrot.lane.b32.xlu0 %v788, 64
    %v790 = vpop.permute.xlu0 %789
    %v792 = vadd.f32 %v120, %v790
    %v793 = vadd.f32 %v792, %v337
    %v794 = vxor.u32 %v793, 2147483648
    %v795 = vmul.f32 %v794, 1.442695
    %v796 = vpow.pop %v795
    %v797 = vadd.f32 %v796, 1.0
    %v798 = vrcp.pop %v797
    %v799 = vmul.f32 1.0, %v798
    %v800 = vtanh.pop %v793
    %v802 = vrot.slane %v587, 2
    %v804 = vmul.f32 %v799, %v802
    %806 = vrot.lane.b32.xlu0 %v800, 80
    %v807 = vpop.permute.xlu0 %806
    %v809 = vmul.f32 %v799, %v807
    %811 = vrot.lane.b32.xlu0 %v809, 16
    %v812 = vpop.permute.xlu0 %811
    %v814 = vadd.f32 %v804, %v812
    %v815 = vtanh.pop %v814
    %817 = vrot.lane.b32.xlu0 %v815, 16
    %v818 = vpop.permute.xlu0 %817
    %v820 = vmul.f32 %v799, %v818
    %822 = vrot.lane.b32.xlu0 %v820, 32
    %v823 = vpop.permute.xlu0 %822
    %825 = vst.msk [vmem:[#allocation3 + $0x8] sm:$0xc] %vm483, %v823
    %v826 = vrot.slane %v706, 4
    %827 = vrot.lane.b32.xlu0 %v826, 96
    %v828 = vpop.permute.xlu0 %827
    %v829 = vsel %vm41, %v828, 0
    %831 = vmatprep.subr.mxu0 0.0
    %832 = vmatpush1.msra.mxu0 %v123
    %833 = vmatprep.subr.mxu0 0.0
    %834 = vmatpush1.msra.mxu0 %v124
    %835 = vmatprep.subr.mxu0 0.0
    %836 = vmatpush1.msra.mxu0 0.0
    %837 = vmatprep.subr.mxu0 0.0
    %838 = vmatpush1.msra.mxu0 0.0
    %839 = vmatprep.subr.mxu0 0.0
    %840 = vmatpush1.msra.mxu0 0.0
    %841 = vmatprep.subr.mxu0 0.0
    %842 = vmatpush1.msra.mxu0 0.0
    %843 = vmatprep.subr.mxu0 0.0
    %844 = vmatpush1.msra.mxu0 0.0
    %845 = vmatprep.subr.mxu0 0.0
    %846 = vmatpush1.msra.mxu0 0.0
    %847 = vmatprep.subr.mxu0 0.0
    %848 = vmatpush1.msra.mxu0 0.0
    %849 = vmatprep.subr.mxu0 0.0
    %850 = vmatpush1.msra.mxu0 0.0
    %851 = vmatprep.subr.mxu0 0.0
    %852 = vmatpush1.msra.mxu0 0.0
    %853 = vmatprep.subr.mxu0 0.0
    %854 = vmatpush1.msra.mxu0 0.0
    %855 = vmatprep.subr.mxu0 0.0
    %856 = vmatpush1.msra.mxu0 0.0
    %857 = vmatprep.subr.mxu0 0.0
    %858 = vmatpush1.msra.mxu0 0.0
    %859 = vmatprep.subr.mxu0 0.0
    %860 = vmatpush1.msra.mxu0 0.0
    %861 = vmatprep.subr.mxu0 0.0
    %862 = vmatpush1.msra.mxu0 0.0
    %863 = vmatprep.subr.mxu0 0.0
    %864 = vmatpush1.msra.mxu0 0.0
    %865 = vmatprep.subr.mxu0 0.0
    %866 = vmatpush1.msra.mxu0 0.0
    %867 = vmatprep.subr.mxu0 0.0
    %868 = vmatpush1.msra.mxu0 0.0
    %869 = vmatprep.subr.mxu0 0.0
    %870 = vmatpush1.msra.mxu0 0.0
    %871 = vmatprep.subr.mxu0 0.0
    %872 = vmatpush1.msra.mxu0 0.0
    %873 = vmatprep.subr.mxu0 0.0
    %874 = vmatpush1.msra.mxu0 0.0
    %875 = vmatprep.subr.mxu0 0.0
    %876 = vmatpush1.msra.mxu0 0.0
    %877 = vmatprep.subr.mxu0 0.0
    %878 = vmatpush1.msra.mxu0 0.0
    %879 = vmatprep.subr.mxu0 0.0
    %880 = vmatpush1.msra.mxu0 0.0
    %881 = vmatprep.subr.mxu0 0.0
    %882 = vmatpush1.msra.mxu0 0.0
    %883 = vmatprep.subr.mxu0 0.0
    %884 = vmatpush1.msra.mxu0 0.0
    %885 = vmatprep.subr.mxu0 0.0
    %886 = vmatpush1.msra.mxu0 0.0
    %887 = vmatprep.subr.mxu0 0.0
    %888 = vmatpush1.msra.mxu0 0.0
    %889 = vmatprep.subr.mxu0 0.0
    %890 = vmatpush1.msra.mxu0 0.0
    %891 = vmatprep.subr.mxu0 0.0
    %892 = vmatpush1.msra.mxu0 0.0
    %893 = vmatprep.subr.mxu0 0.0
    %894 = vmatpush1.msra.mxu0 0.0
    %895 = vmatprep.mubr.f32.mxu0 0.0
    %896 = vmatmul.mubr.f32.gmra.mrb[0].mxu0 %v829
    %v897 = vpop.f32.mrb[0].mxu0
    %v898 = vadd.f32 0.0, %v897
    %v899 = vpop.f32.mrb[0].mxu0
    %900 = vdwg.mxu0
    %v902 = vrot.slane %v898, 2
    %v904 = vadd.f32 %v115, %v902
    %v905 = vadd.f32 %v904, %v215
    %v906 = vxor.u32 %v905, 2147483648
    %v907 = vmul.f32 %v906, 1.442695
    %v908 = vpow.pop %v907
    %v909 = vadd.f32 %v908, 1.0
    %v910 = vrcp.pop %v909
    %v911 = vmul.f32 1.0, %v910
    %v912 = vtanh.pop %v905
    %v914 = vrot.slane %v700, 6
    %v916 = vmul.f32 %v911, %v914
    %918 = vrot.lane.b32.xlu0 %v912, 80
    %v919 = vpop.permute.xlu0 %918
    %v921 = vmul.f32 %v911, %v919
    %923 = vrot.lane.b32.xlu0 %v921, 16
    %v924 = vpop.permute.xlu0 %923
    %v926 = vadd.f32 %v916, %v924
    %v927 = vtanh.pop %v926
    %929 = vrot.lane.b32.xlu0 %v927, 16
    %v930 = vpop.permute.xlu0 %929
    %v932 = vmul.f32 %v911, %v930
    %934 = vrot.lane.b32.xlu0 %v932, 96
    %v935 = vpop.permute.xlu0 %934
    %937 = vst.msk [vmem:[#allocation2] sm:$0xc0] %vm373, %v935
    %v938 = vrot.slane %v820, 2
    %939 = vrot.lane.b32.xlu0 %v938, 32
    %v940 = vpop.permute.xlu0 %939
    %v941 = vsel %vm41, %v940, 0
    %943 = vmatprep.subr.mxu0 0.0
    %944 = vmatpush1.msra.mxu0 %v126
    %945 = vmatprep.subr.mxu0 0.0
    %946 = vmatpush1.msra.mxu0 %v127
    %947 = vmatprep.subr.mxu0 0.0
    %948 = vmatpush1.msra.mxu0 0.0
    %949 = vmatprep.subr.mxu0 0.0
    %950 = vmatpush1.msra.mxu0 0.0
    %951 = vmatprep.subr.mxu0 0.0
    %952 = vmatpush1.msra.mxu0 0.0
    %953 = vmatprep.subr.mxu0 0.0
    %954 = vmatpush1.msra.mxu0 0.0
    %955 = vmatprep.subr.mxu0 0.0
    %956 = vmatpush1.msra.mxu0 0.0
    %957 = vmatprep.subr.mxu0 0.0
    %958 = vmatpush1.msra.mxu0 0.0
    %959 = vmatprep.subr.mxu0 0.0
    %960 = vmatpush1.msra.mxu0 0.0
    %961 = vmatprep.subr.mxu0 0.0
    %962 = vmatpush1.msra.mxu0 0.0
    %963 = vmatprep.subr.mxu0 0.0
    %964 = vmatpush1.msra.mxu0 0.0
    %965 = vmatprep.subr.mxu0 0.0
    %966 = vmatpush1.msra.mxu0 0.0
    %967 = vmatprep.subr.mxu0 0.0
    %968 = vmatpush1.msra.mxu0 0.0
    %969 = vmatprep.subr.mxu0 0.0
    %970 = vmatpush1.msra.mxu0 0.0
    %971 = vmatprep.subr.mxu0 0.0
    %972 = vmatpush1.msra.mxu0 0.0
    %973 = vmatprep.subr.mxu0 0.0
    %974 = vmatpush1.msra.mxu0 0.0
    %975 = vmatprep.subr.mxu0 0.0
    %976 = vmatpush1.msra.mxu0 0.0
    %977 = vmatprep.subr.mxu0 0.0
    %978 = vmatpush1.msra.mxu0 0.0
    %979 = vmatprep.subr.mxu0 0.0
    %980 = vmatpush1.msra.mxu0 0.0
    %981 = vmatprep.subr.mxu0 0.0
    %982 = vmatpush1.msra.mxu0 0.0
    %983 = vmatprep.subr.mxu0 0.0
    %984 = vmatpush1.msra.mxu0 0.0
    %985 = vmatprep.subr.mxu0 0.0
    %986 = vmatpush1.msra.mxu0 0.0
    %987 = vmatprep.subr.mxu0 0.0
    %988 = vmatpush1.msra.mxu0 0.0
    %989 = vmatprep.subr.mxu0 0.0
    %990 = vmatpush1.msra.mxu0 0.0
    %991 = vmatprep.subr.mxu0 0.0
    %992 = vmatpush1.msra.mxu0 0.0
    %993 = vmatprep.subr.mxu0 0.0
    %994 = vmatpush1.msra.mxu0 0.0
    %995 = vmatprep.subr.mxu0 0.0
    %996 = vmatpush1.msra.mxu0 0.0
    %997 = vmatprep.subr.mxu0 0.0
    %998 = vmatpush1.msra.mxu0 0.0
    %999 = vmatprep.subr.mxu0 0.0
    %1000 = vmatpush1.msra.mxu0 0.0
    %1001 = vmatprep.subr.mxu0 0.0
    %1002 = vmatpush1.msra.mxu0 0.0
    %1003 = vmatprep.subr.mxu0 0.0
    %1004 = vmatpush1.msra.mxu0 0.0
    %1005 = vmatprep.subr.mxu0 0.0
    %1006 = vmatpush1.msra.mxu0 0.0
    %1007 = vmatprep.mubr.f32.mxu0 0.0
    %1008 = vmatmul.mubr.f32.gmra.mrb[0].mxu0 %v941
    %v1009 = vpop.f32.mrb[0].mxu0
    %v1010 = vadd.f32 0.0, %v1009
    %v1011 = vpop.f32.mrb[0].mxu0
    %1012 = vdwg.mxu0
    %1014 = vrot.lane.b32.xlu0 %v1010, 64
    %v1015 = vpop.permute.xlu0 %1014
    %v1017 = vadd.f32 %v120, %v1015
    %v1018 = vadd.f32 %v1017, %v337
    %v1019 = vxor.u32 %v1018, 2147483648
    %v1020 = vmul.f32 %v1019, 1.442695
    %v1021 = vpow.pop %v1020
    %v1022 = vadd.f32 %v1021, 1.0
    %v1023 = vrcp.pop %v1022
    %v1024 = vmul.f32 1.0, %v1023
    %v1025 = vtanh.pop %v1018
    %v1027 = vrot.slane %v814, 2
    %v1029 = vmul.f32 %v1024, %v1027
    %1031 = vrot.lane.b32.xlu0 %v1025, 80
    %v1032 = vpop.permute.xlu0 %1031
    %v1034 = vmul.f32 %v1024, %v1032
    %1036 = vrot.lane.b32.xlu0 %v1034, 16
    %v1037 = vpop.permute.xlu0 %1036
    %v1039 = vadd.f32 %v1029, %v1037
    %v1040 = vtanh.pop %v1039
    %1042 = vrot.lane.b32.xlu0 %v1040, 16
    %v1043 = vpop.permute.xlu0 %1042
    %v1045 = vmul.f32 %v1024, %v1043
    %1047 = vrot.lane.b32.xlu0 %v1045, 32
    %v1048 = vpop.permute.xlu0 %1047
    %1050 = vst.msk [vmem:[#allocation3 + $0x8] sm:$0x3] %vm250, %v1048
    %v1051 = vrot.slane %v932, 6
    %1052 = vrot.lane.b32.xlu0 %v1051, 96
    %v1053 = vpop.permute.xlu0 %1052
    %v1054 = vsel %vm41, %v1053, 0
    %1056 = vmatprep.subr.mxu0 0.0
    %1057 = vmatpush1.msra.mxu0 %v123
    %1058 = vmatprep.subr.mxu0 0.0
    %1059 = vmatpush1.msra.mxu0 %v124
    %1060 = vmatprep.subr.mxu0 0.0
    %1061 = vmatpush1.msra.mxu0 0.0
    %1062 = vmatprep.subr.mxu0 0.0
    %1063 = vmatpush1.msra.mxu0 0.0
    %1064 = vmatprep.subr.mxu0 0.0
    %1065 = vmatpush1.msra.mxu0 0.0
    %1066 = vmatprep.subr.mxu0 0.0
    %1067 = vmatpush1.msra.mxu0 0.0
    %1068 = vmatprep.subr.mxu0 0.0
    %1069 = vmatpush1.msra.mxu0 0.0
    %1070 = vmatprep.subr.mxu0 0.0
    %1071 = vmatpush1.msra.mxu0 0.0
    %1072 = vmatprep.subr.mxu0 0.0
    %1073 = vmatpush1.msra.mxu0 0.0
    %1074 = vmatprep.subr.mxu0 0.0
    %1075 = vmatpush1.msra.mxu0 0.0
    %1076 = vmatprep.subr.mxu0 0.0
    %1077 = vmatpush1.msra.mxu0 0.0
    %1078 = vmatprep.subr.mxu0 0.0
    %1079 = vmatpush1.msra.mxu0 0.0
    %1080 = vmatprep.subr.mxu0 0.0
    %1081 = vmatpush1.msra.mxu0 0.0
    %1082 = vmatprep.subr.mxu0 0.0
    %1083 = vmatpush1.msra.mxu0 0.0
    %1084 = vmatprep.subr.mxu0 0.0
    %1085 = vmatpush1.msra.mxu0 0.0
    %1086 = vmatprep.subr.mxu0 0.0
    %1087 = vmatpush1.msra.mxu0 0.0
    %1088 = vmatprep.subr.mxu0 0.0
    %1089 = vmatpush1.msra.mxu0 0.0
    %1090 = vmatprep.subr.mxu0 0.0
    %1091 = vmatpush1.msra.mxu0 0.0
    %1092 = vmatprep.subr.mxu0 0.0
    %1093 = vmatpush1.msra.mxu0 0.0
    %1094 = vmatprep.subr.mxu0 0.0
    %1095 = vmatpush1.msra.mxu0 0.0
    %1096 = vmatprep.subr.mxu0 0.0
    %1097 = vmatpush1.msra.mxu0 0.0
    %1098 = vmatprep.subr.mxu0 0.0
    %1099 = vmatpush1.msra.mxu0 0.0
    %1100 = vmatprep.subr.mxu0 0.0
    %1101 = vmatpush1.msra.mxu0 0.0
    %1102 = vmatprep.subr.mxu0 0.0
    %1103 = vmatpush1.msra.mxu0 0.0
    %1104 = vmatprep.subr.mxu0 0.0
    %1105 = vmatpush1.msra.mxu0 0.0
    %1106 = vmatprep.subr.mxu0 0.0
    %1107 = vmatpush1.msra.mxu0 0.0
    %1108 = vmatprep.subr.mxu0 0.0
    %1109 = vmatpush1.msra.mxu0 0.0
    %1110 = vmatprep.subr.mxu0 0.0
    %1111 = vmatpush1.msra.mxu0 0.0
    %1112 = vmatprep.subr.mxu0 0.0
    %1113 = vmatpush1.msra.mxu0 0.0
    %1114 = vmatprep.subr.mxu0 0.0
    %1115 = vmatpush1.msra.mxu0 0.0
    %1116 = vmatprep.subr.mxu0 0.0
    %1117 = vmatpush1.msra.mxu0 0.0
    %1118 = vmatprep.subr.mxu0 0.0
    %1119 = vmatpush1.msra.mxu0 0.0
    %1120 = vmatprep.mubr.f32.mxu0 0.0
    %1121 = vmatmul.mubr.f32.gmra.mrb[0].mxu0 %v1054
    %v1122 = vpop.f32.mrb[0].mxu0
    %v1123 = vadd.f32 0.0, %v1122
    %v1124 = vpop.f32.mrb[0].mxu0
    %1125 = vdwg.mxu0
    %v1126 = vadd.f32 %v120, %v1123
    %v1127 = vadd.f32 %v1126, %v215
    %v1128 = vxor.u32 %v1127, 2147483648
    %v1129 = vmul.f32 %v1128, 1.442695
    %v1130 = vpow.pop %v1129
    %v1131 = vadd.f32 %v1130, 1.0
    %v1132 = vrcp.pop %v1131
    %v1133 = vmul.f32 1.0, %v1132
    %v1134 = vtanh.pop %v1127
    %v1136 = vrot.slane %v926, 6
    %v1138 = vmul.f32 %v1133, %v1136
    %1140 = vrot.lane.b32.xlu0 %v1134, 80
    %v1141 = vpop.permute.xlu0 %1140
    %v1143 = vmul.f32 %v1133, %v1141
    %1145 = vrot.lane.b32.xlu0 %v1143, 16
    %v1146 = vpop.permute.xlu0 %1145
    %v1148 = vadd.f32 %v1138, %v1146
    %v1149 = vtanh.pop %v1148
    %1151 = vrot.lane.b32.xlu0 %v1149, 16
    %v1152 = vpop.permute.xlu0 %1151
    %v1154 = vmul.f32 %v1133, %v1152
    %1156 = vrot.lane.b32.xlu0 %v1154, 96
    %v1157 = vpop.permute.xlu0 %1156
    %1159 = vst.msk [vmem:[#allocation2 + $0x8] sm:$0x3] %vm250, %v1157
    %v1160 = vsel %vm41, %v1048, 0
    %1162 = vmatprep.subr.mxu0 0.0
    %1163 = vmatpush1.msra.mxu0 %v126
    %1164 = vmatprep.subr.mxu0 0.0
    %1165 = vmatpush1.msra.mxu0 %v127
    %1166 = vmatprep.subr.mxu0 0.0
    %1167 = vmatpush1.msra.mxu0 0.0
    %1168 = vmatprep.subr.mxu0 0.0
    %1169 = vmatpush1.msra.mxu0 0.0
    %1170 = vmatprep.subr.mxu0 0.0
    %1171 = vmatpush1.msra.mxu0 0.0
    %1172 = vmatprep.subr.mxu0 0.0
    %1173 = vmatpush1.msra.mxu0 0.0
    %1174 = vmatprep.subr.mxu0 0.0
    %1175 = vmatpush1.msra.mxu0 0.0
    %1176 = vmatprep.subr.mxu0 0.0
    %1177 = vmatpush1.msra.mxu0 0.0
    %1178 = vmatprep.subr.mxu0 0.0
    %1179 = vmatpush1.msra.mxu0 0.0
    %1180 = vmatprep.subr.mxu0 0.0
    %1181 = vmatpush1.msra.mxu0 0.0
    %1182 = vmatprep.subr.mxu0 0.0
    %1183 = vmatpush1.msra.mxu0 0.0
    %1184 = vmatprep.subr.mxu0 0.0
    %1185 = vmatpush1.msra.mxu0 0.0
    %1186 = vmatprep.subr.mxu0 0.0
    %1187 = vmatpush1.msra.mxu0 0.0
    %1188 = vmatprep.subr.mxu0 0.0
    %1189 = vmatpush1.msra.mxu0 0.0
    %1190 = vmatprep.subr.mxu0 0.0
    %1191 = vmatpush1.msra.mxu0 0.0
    %1192 = vmatprep.subr.mxu0 0.0
    %1193 = vmatpush1.msra.mxu0 0.0
    %1194 = vmatprep.subr.mxu0 0.0
    %1195 = vmatpush1.msra.mxu0 0.0
    %1196 = vmatprep.subr.mxu0 0.0
    %1197 = vmatpush1.msra.mxu0 0.0
    %1198 = vmatprep.subr.mxu0 0.0
    %1199 = vmatpush1.msra.mxu0 0.0
    %1200 = vmatprep.subr.mxu0 0.0
    %1201 = vmatpush1.msra.mxu0 0.0
    %1202 = vmatprep.subr.mxu0 0.0
    %1203 = vmatpush1.msra.mxu0 0.0
    %1204 = vmatprep.subr.mxu0 0.0
    %1205 = vmatpush1.msra.mxu0 0.0
    %1206 = vmatprep.subr.mxu0 0.0
    %1207 = vmatpush1.msra.mxu0 0.0
    %1208 = vmatprep.subr.mxu0 0.0
    %1209 = vmatpush1.msra.mxu0 0.0
    %1210 = vmatprep.subr.mxu0 0.0
    %1211 = vmatpush1.msra.mxu0 0.0
    %1212 = vmatprep.subr.mxu0 0.0
    %1213 = vmatpush1.msra.mxu0 0.0
    %1214 = vmatprep.subr.mxu0 0.0
    %1215 = vmatpush1.msra.mxu0 0.0
    %1216 = vmatprep.subr.mxu0 0.0
    %1217 = vmatpush1.msra.mxu0 0.0
    %1218 = vmatprep.subr.mxu0 0.0
    %1219 = vmatpush1.msra.mxu0 0.0
    %1220 = vmatprep.subr.mxu0 0.0
    %1221 = vmatpush1.msra.mxu0 0.0
    %1222 = vmatprep.subr.mxu0 0.0
    %1223 = vmatpush1.msra.mxu0 0.0
    %1224 = vmatprep.subr.mxu0 0.0
    %1225 = vmatpush1.msra.mxu0 0.0
    %1226 = vmatprep.mubr.f32.mxu0 0.0
    %1227 = vmatmul.mubr.f32.gmra.mrb[0].mxu0 %v1160
    %v1228 = vpop.f32.mrb[0].mxu0
    %v1229 = vadd.f32 0.0, %v1228
    %v1230 = vpop.f32.mrb[0].mxu0
    %1231 = vdwg.mxu0
    %v1233 = vrot.slane %v1229, 2
    %1234 = vrot.lane.b32.xlu0 %v1233, 64
    %v1235 = vpop.permute.xlu0 %1234
    %v1237 = vadd.f32 %v115, %v1235
    %v1238 = vadd.f32 %v1237, %v337
    %v1239 = vxor.u32 %v1238, 2147483648
    %v1240 = vmul.f32 %v1239, 1.442695
    %v1241 = vpow.pop %v1240
    %v1242 = vadd.f32 %v1241, 1.0
    %v1243 = vrcp.pop %v1242
    %v1244 = vmul.f32 1.0, %v1243
    %v1245 = vtanh.pop %v1238
    %v1247 = vrot.slane %v1039, 2
    %v1249 = vmul.f32 %v1244, %v1247
    %1251 = vrot.lane.b32.xlu0 %v1245, 80
    %v1252 = vpop.permute.xlu0 %1251
    %v1254 = vmul.f32 %v1244, %v1252
    %1256 = vrot.lane.b32.xlu0 %v1254, 16
    %v1257 = vpop.permute.xlu0 %1256
    %v1259 = vadd.f32 %v1249, %v1257
    %v1260 = vtanh.pop %v1259
    %1262 = vrot.lane.b32.xlu0 %v1260, 16
    %v1263 = vpop.permute.xlu0 %1262
    %v1265 = vmul.f32 %v1244, %v1263
    %1267 = vrot.lane.b32.xlu0 %v1265, 32
    %v1268 = vpop.permute.xlu0 %1267
    %1270 = vst.msk [vmem:[#allocation3] sm:$0xc0] %vm373, %v1268
    %v1271 = vsel %vm41, %v1157, 0
    %1273 = vmatprep.subr.mxu0 0.0
    %1274 = vmatpush1.msra.mxu0 %v123
    %1275 = vmatprep.subr.mxu0 0.0
    %1276 = vmatpush1.msra.mxu0 %v124
    %1277 = vmatprep.subr.mxu0 0.0
    %1278 = vmatpush1.msra.mxu0 0.0
    %1279 = vmatprep.subr.mxu0 0.0
    %1280 = vmatpush1.msra.mxu0 0.0
    %1281 = vmatprep.subr.mxu0 0.0
    %1282 = vmatpush1.msra.mxu0 0.0
    %1283 = vmatprep.subr.mxu0 0.0
    %1284 = vmatpush1.msra.mxu0 0.0
    %1285 = vmatprep.subr.mxu0 0.0
    %1286 = vmatpush1.msra.mxu0 0.0
    %1287 = vmatprep.subr.mxu0 0.0
    %1288 = vmatpush1.msra.mxu0 0.0
    %1289 = vmatprep.subr.mxu0 0.0
    %1290 = vmatpush1.msra.mxu0 0.0
    %1291 = vmatprep.subr.mxu0 0.0
    %1292 = vmatpush1.msra.mxu0 0.0
    %1293 = vmatprep.subr.mxu0 0.0
    %1294 = vmatpush1.msra.mxu0 0.0
    %1295 = vmatprep.subr.mxu0 0.0
    %1296 = vmatpush1.msra.mxu0 0.0
    %1297 = vmatprep.subr.mxu0 0.0
    %1298 = vmatpush1.msra.mxu0 0.0
    %1299 = vmatprep.subr.mxu0 0.0
    %1300 = vmatpush1.msra.mxu0 0.0
    %1301 = vmatprep.subr.mxu0 0.0
    %1302 = vmatpush1.msra.mxu0 0.0
    %1303 = vmatprep.subr.mxu0 0.0
    %1304 = vmatpush1.msra.mxu0 0.0
    %1305 = vmatprep.subr.mxu0 0.0
    %1306 = vmatpush1.msra.mxu0 0.0
    %1307 = vmatprep.subr.mxu0 0.0
    %1308 = vmatpush1.msra.mxu0 0.0
    %1309 = vmatprep.subr.mxu0 0.0
    %1310 = vmatpush1.msra.mxu0 0.0
    %1311 = vmatprep.subr.mxu0 0.0
    %1312 = vmatpush1.msra.mxu0 0.0
    %1313 = vmatprep.subr.mxu0 0.0
    %1314 = vmatpush1.msra.mxu0 0.0
    %1315 = vmatprep.subr.mxu0 0.0
    %1316 = vmatpush1.msra.mxu0 0.0
    %1317 = vmatprep.subr.mxu0 0.0
    %1318 = vmatpush1.msra.mxu0 0.0
    %1319 = vmatprep.subr.mxu0 0.0
    %1320 = vmatpush1.msra.mxu0 0.0
    %1321 = vmatprep.subr.mxu0 0.0
    %1322 = vmatpush1.msra.mxu0 0.0
    %1323 = vmatprep.subr.mxu0 0.0
    %1324 = vmatpush1.msra.mxu0 0.0
    %1325 = vmatprep.subr.mxu0 0.0
    %1326 = vmatpush1.msra.mxu0 0.0
    %1327 = vmatprep.subr.mxu0 0.0
    %1328 = vmatpush1.msra.mxu0 0.0
    %1329 = vmatprep.subr.mxu0 0.0
    %1330 = vmatpush1.msra.mxu0 0.0
    %1331 = vmatprep.subr.mxu0 0.0
    %1332 = vmatpush1.msra.mxu0 0.0
    %1333 = vmatprep.subr.mxu0 0.0
    %1334 = vmatpush1.msra.mxu0 0.0
    %1335 = vmatprep.subr.mxu0 0.0
    %1336 = vmatpush1.msra.mxu0 0.0
    %1337 = vmatprep.mubr.f32.mxu0 0.0
    %1338 = vmatmul.mubr.f32.gmra.mrb[0].mxu0 %v1271
    %v1339 = vpop.f32.mrb[0].mxu0
    %v1340 = vadd.f32 0.0, %v1339
    %v1341 = vpop.f32.mrb[0].mxu0
    %1342 = vdwg.mxu0
    %v1344 = vrot.slane %v1340, 6
    %v1346 = vadd.f32 %v120, %v1344
    %v1347 = vadd.f32 %v1346, %v215
    %v1348 = vxor.u32 %v1347, 2147483648
    %v1349 = vmul.f32 %v1348, 1.442695
    %v1350 = vpow.pop %v1349
    %v1351 = vadd.f32 %v1350, 1.0
    %v1352 = vrcp.pop %v1351
    %v1353 = vmul.f32 1.0, %v1352
    %v1354 = vtanh.pop %v1347
    %v1356 = vrot.slane %v1148, 6
    %v1358 = vmul.f32 %v1353, %v1356
    %1360 = vrot.lane.b32.xlu0 %v1354, 80
    %v1361 = vpop.permute.xlu0 %1360
    %v1363 = vmul.f32 %v1353, %v1361
    %1365 = vrot.lane.b32.xlu0 %v1363, 16
    %v1366 = vpop.permute.xlu0 %1365
    %v1368 = vadd.f32 %v1358, %v1366
    %v1369 = vtanh.pop %v1368
    %1371 = vrot.lane.b32.xlu0 %v1369, 16
    %v1372 = vpop.permute.xlu0 %1371
    %v1374 = vmul.f32 %v1353, %v1372
    %1376 = vrot.lane.b32.xlu0 %v1374, 96
    %v1377 = vpop.permute.xlu0 %1376
    %1379 = vst.msk [vmem:[#allocation2 + $0x8] sm:$0xc] %vm483, %v1377
    %v1380 = vrot.slane %v1265, 6
    %1381 = vrot.lane.b32.xlu0 %v1380, 32
    %v1382 = vpop.permute.xlu0 %1381
    %v1383 = vsel %vm41, %v1382, 0
    %1385 = vmatprep.subr.mxu0 0.0
    %1386 = vmatpush1.msra.mxu0 %v126
    %1387 = vmatprep.subr.mxu0 0.0
    %1388 = vmatpush1.msra.mxu0 %v127
    %1389 = vmatprep.subr.mxu0 0.0
    %1390 = vmatpush1.msra.mxu0 0.0
    %1391 = vmatprep.subr.mxu0 0.0
    %1392 = vmatpush1.msra.mxu0 0.0
    %1393 = vmatprep.subr.mxu0 0.0
    %1394 = vmatpush1.msra.mxu0 0.0
    %1395 = vmatprep.subr.mxu0 0.0
    %1396 = vmatpush1.msra.mxu0 0.0
    %1397 = vmatprep.subr.mxu0 0.0
    %1398 = vmatpush1.msra.mxu0 0.0
    %1399 = vmatprep.subr.mxu0 0.0
    %1400 = vmatpush1.msra.mxu0 0.0
    %1401 = vmatprep.subr.mxu0 0.0
    %1402 = vmatpush1.msra.mxu0 0.0
    %1403 = vmatprep.subr.mxu0 0.0
    %1404 = vmatpush1.msra.mxu0 0.0
    %1405 = vmatprep.subr.mxu0 0.0
    %1406 = vmatpush1.msra.mxu0 0.0
    %1407 = vmatprep.subr.mxu0 0.0
    %1408 = vmatpush1.msra.mxu0 0.0
    %1409 = vmatprep.subr.mxu0 0.0
    %1410 = vmatpush1.msra.mxu0 0.0
    %1411 = vmatprep.subr.mxu0 0.0
    %1412 = vmatpush1.msra.mxu0 0.0
    %1413 = vmatprep.subr.mxu0 0.0
    %1414 = vmatpush1.msra.mxu0 0.0
    %1415 = vmatprep.subr.mxu0 0.0
    %1416 = vmatpush1.msra.mxu0 0.0
    %1417 = vmatprep.subr.mxu0 0.0
    %1418 = vmatpush1.msra.mxu0 0.0
    %1419 = vmatprep.subr.mxu0 0.0
    %1420 = vmatpush1.msra.mxu0 0.0
    %1421 = vmatprep.subr.mxu0 0.0
    %1422 = vmatpush1.msra.mxu0 0.0
    %1423 = vmatprep.subr.mxu0 0.0
    %1424 = vmatpush1.msra.mxu0 0.0
    %1425 = vmatprep.subr.mxu0 0.0
    %1426 = vmatpush1.msra.mxu0 0.0
    %1427 = vmatprep.subr.mxu0 0.0
    %1428 = vmatpush1.msra.mxu0 0.0
    %1429 = vmatprep.subr.mxu0 0.0
    %1430 = vmatpush1.msra.mxu0 0.0
    %1431 = vmatprep.subr.mxu0 0.0
    %1432 = vmatpush1.msra.mxu0 0.0
    %1433 = vmatprep.subr.mxu0 0.0
    %1434 = vmatpush1.msra.mxu0 0.0
    %1435 = vmatprep.subr.mxu0 0.0
    %1436 = vmatpush1.msra.mxu0 0.0
    %1437 = vmatprep.subr.mxu0 0.0
    %1438 = vmatpush1.msra.mxu0 0.0
    %1439 = vmatprep.subr.mxu0 0.0
    %1440 = vmatpush1.msra.mxu0 0.0
    %1441 = vmatprep.subr.mxu0 0.0
    %1442 = vmatpush1.msra.mxu0 0.0
    %1443 = vmatprep.subr.mxu0 0.0
    %1444 = vmatpush1.msra.mxu0 0.0
    %1445 = vmatprep.subr.mxu0 0.0
    %1446 = vmatpush1.msra.mxu0 0.0
    %1447 = vmatprep.subr.mxu0 0.0
    %1448 = vmatpush1.msra.mxu0 0.0
    %1449 = vmatprep.mubr.f32.mxu0 0.0
    %1450 = vmatmul.mubr.f32.gmra.mrb[0].mxu0 %v1383
    %v1451 = vpop.f32.mrb[0].mxu0
    %v1452 = vadd.f32 0.0, %v1451
    %v1453 = vpop.f32.mrb[0].mxu0
    %1454 = vdwg.mxu0
    %v1456 = vrot.slane %v1452, 4
    %1457 = vrot.lane.b32.xlu0 %v1456, 64
    %v1458 = vpop.permute.xlu0 %1457
    %v1460 = vadd.f32 %v115, %v1458
    %v1461 = vadd.f32 %v1460, %v337
    %v1462 = vxor.u32 %v1461, 2147483648
    %v1463 = vmul.f32 %v1462, 1.442695
    %v1464 = vpow.pop %v1463
    %v1465 = vadd.f32 %v1464, 1.0
    %v1466 = vrcp.pop %v1465
    %v1467 = vmul.f32 1.0, %v1466
    %v1468 = vtanh.pop %v1461
    %v1470 = vrot.slane %v1259, 2
    %v1472 = vmul.f32 %v1467, %v1470
    %1474 = vrot.lane.b32.xlu0 %v1468, 80
    %v1475 = vpop.permute.xlu0 %1474
    %v1477 = vmul.f32 %v1467, %v1475
    %1479 = vrot.lane.b32.xlu0 %v1477, 16
    %v1480 = vpop.permute.xlu0 %1479
    %v1482 = vadd.f32 %v1472, %v1480
    %v1483 = vtanh.pop %v1482
    %1485 = vrot.lane.b32.xlu0 %v1483, 16
    %v1486 = vpop.permute.xlu0 %1485
    %v1488 = vmul.f32 %v1467, %v1486
    %1490 = vrot.lane.b32.xlu0 %v1488, 32
    %v1491 = vpop.permute.xlu0 %1490
    %1493 = vst.msk [vmem:[#allocation3] sm:$0x30] %vm598, %v1491
    %v1494 = vrot.slane %v1374, 2
    %1495 = vrot.lane.b32.xlu0 %v1494, 96
    %v1496 = vpop.permute.xlu0 %1495
    %v1497 = vsel %vm41, %v1496, 0
    %1499 = vmatprep.subr.mxu0 0.0
    %1500 = vmatpush1.msra.mxu0 %v123
    %1501 = vmatprep.subr.mxu0 0.0
    %1502 = vmatpush1.msra.mxu0 %v124
    %1503 = vmatprep.subr.mxu0 0.0
    %1504 = vmatpush1.msra.mxu0 0.0
    %1505 = vmatprep.subr.mxu0 0.0
    %1506 = vmatpush1.msra.mxu0 0.0
    %1507 = vmatprep.subr.mxu0 0.0
    %1508 = vmatpush1.msra.mxu0 0.0
    %1509 = vmatprep.subr.mxu0 0.0
    %1510 = vmatpush1.msra.mxu0 0.0
    %1511 = vmatprep.subr.mxu0 0.0
    %1512 = vmatpush1.msra.mxu0 0.0
    %1513 = vmatprep.subr.mxu0 0.0
    %1514 = vmatpush1.msra.mxu0 0.0
    %1515 = vmatprep.subr.mxu0 0.0
    %1516 = vmatpush1.msra.mxu0 0.0
    %1517 = vmatprep.subr.mxu0 0.0
    %1518 = vmatpush1.msra.mxu0 0.0
    %1519 = vmatprep.subr.mxu0 0.0
    %1520 = vmatpush1.msra.mxu0 0.0
    %1521 = vmatprep.subr.mxu0 0.0
    %1522 = vmatpush1.msra.mxu0 0.0
    %1523 = vmatprep.subr.mxu0 0.0
    %1524 = vmatpush1.msra.mxu0 0.0
    %1525 = vmatprep.subr.mxu0 0.0
    %1526 = vmatpush1.msra.mxu0 0.0
    %1527 = vmatprep.subr.mxu0 0.0
    %1528 = vmatpush1.msra.mxu0 0.0
    %1529 = vmatprep.subr.mxu0 0.0
    %1530 = vmatpush1.msra.mxu0 0.0
    %1531 = vmatprep.subr.mxu0 0.0
    %1532 = vmatpush1.msra.mxu0 0.0
    %1533 = vmatprep.subr.mxu0 0.0
    %1534 = vmatpush1.msra.mxu0 0.0
    %1535 = vmatprep.subr.mxu0 0.0
    %1536 = vmatpush1.msra.mxu0 0.0
    %1537 = vmatprep.subr.mxu0 0.0
    %1538 = vmatpush1.msra.mxu0 0.0
    %1539 = vmatprep.subr.mxu0 0.0
    %1540 = vmatpush1.msra.mxu0 0.0
    %1541 = vmatprep.subr.mxu0 0.0
    %1542 = vmatpush1.msra.mxu0 0.0
    %1543 = vmatprep.subr.mxu0 0.0
    %1544 = vmatpush1.msra.mxu0 0.0
    %1545 = vmatprep.subr.mxu0 0.0
    %1546 = vmatpush1.msra.mxu0 0.0
    %1547 = vmatprep.subr.mxu0 0.0
    %1548 = vmatpush1.msra.mxu0 0.0
    %1549 = vmatprep.subr.mxu0 0.0
    %1550 = vmatpush1.msra.mxu0 0.0
    %1551 = vmatprep.subr.mxu0 0.0
    %1552 = vmatpush1.msra.mxu0 0.0
    %1553 = vmatprep.subr.mxu0 0.0
    %1554 = vmatpush1.msra.mxu0 0.0
    %1555 = vmatprep.subr.mxu0 0.0
    %1556 = vmatpush1.msra.mxu0 0.0
    %1557 = vmatprep.subr.mxu0 0.0
    %1558 = vmatpush1.msra.mxu0 0.0
    %1559 = vmatprep.subr.mxu0 0.0
    %1560 = vmatpush1.msra.mxu0 0.0
    %1561 = vmatprep.subr.mxu0 0.0
    %1562 = vmatpush1.msra.mxu0 0.0
    %1563 = vmatprep.mubr.f32.mxu0 0.0
    %1564 = vmatmul.mubr.f32.gmra.mrb[0].mxu0 %v1497
    %v1565 = vpop.f32.mrb[0].mxu0
    %v1566 = vadd.f32 0.0, %v1565
    %v1567 = vpop.f32.mrb[0].mxu0
    %1568 = vdwg.mxu0
    %v1570 = vrot.slane %v1566, 4
    %v1572 = vadd.f32 %v120, %v1570
    %v1573 = vadd.f32 %v1572, %v215
    %v1574 = vxor.u32 %v1573, 2147483648
    %v1575 = vmul.f32 %v1574, 1.442695
    %v1576 = vpow.pop %v1575
    %v1577 = vadd.f32 %v1576, 1.0
    %v1578 = vrcp.pop %v1577
    %v1579 = vmul.f32 1.0, %v1578
    %v1580 = vtanh.pop %v1573
    %v1582 = vrot.slane %v1368, 6
    %v1584 = vmul.f32 %v1579, %v1582
    %1586 = vrot.lane.b32.xlu0 %v1580, 80
    %v1587 = vpop.permute.xlu0 %1586
    %v1589 = vmul.f32 %v1579, %v1587
    %1591 = vrot.lane.b32.xlu0 %v1589, 16
    %v1592 = vpop.permute.xlu0 %1591
    %v1594 = vadd.f32 %v1584, %v1592
    %v1595 = vtanh.pop %v1594
    %1597 = vrot.lane.b32.xlu0 %v1595, 16
    %v1598 = vpop.permute.xlu0 %1597
    %v1600 = vmul.f32 %v1579, %v1598
    %1602 = vrot.lane.b32.xlu0 %v1600, 96
    %v1603 = vpop.permute.xlu0 %1602
    %1605 = vst.msk [vmem:[#allocation2 + $0x8] sm:$0x30] %vm598, %v1603
    %v1606 = vrot.slane %v1488, 4
    %1607 = vrot.lane.b32.xlu0 %v1606, 32
    %v1608 = vpop.permute.xlu0 %1607
    %v1609 = vsel %vm41, %v1608, 0
    %1611 = vmatprep.subr.mxu0 0.0
    %1612 = vmatpush1.msra.mxu0 %v126
    %1613 = vmatprep.subr.mxu0 0.0
    %1614 = vmatpush1.msra.mxu0 %v127
    %1615 = vmatprep.subr.mxu0 0.0
    %1616 = vmatpush1.msra.mxu0 0.0
    %1617 = vmatprep.subr.mxu0 0.0
    %1618 = vmatpush1.msra.mxu0 0.0
    %1619 = vmatprep.subr.mxu0 0.0
    %1620 = vmatpush1.msra.mxu0 0.0
    %1621 = vmatprep.subr.mxu0 0.0
    %1622 = vmatpush1.msra.mxu0 0.0
    %1623 = vmatprep.subr.mxu0 0.0
    %1624 = vmatpush1.msra.mxu0 0.0
    %1625 = vmatprep.subr.mxu0 0.0
    %1626 = vmatpush1.msra.mxu0 0.0
    %1627 = vmatprep.subr.mxu0 0.0
    %1628 = vmatpush1.msra.mxu0 0.0
    %1629 = vmatprep.subr.mxu0 0.0
    %1630 = vmatpush1.msra.mxu0 0.0
    %1631 = vmatprep.subr.mxu0 0.0
    %1632 = vmatpush1.msra.mxu0 0.0
    %1633 = vmatprep.subr.mxu0 0.0
    %1634 = vmatpush1.msra.mxu0 0.0
    %1635 = vmatprep.subr.mxu0 0.0
    %1636 = vmatpush1.msra.mxu0 0.0
    %1637 = vmatprep.subr.mxu0 0.0
    %1638 = vmatpush1.msra.mxu0 0.0
    %1639 = vmatprep.subr.mxu0 0.0
    %1640 = vmatpush1.msra.mxu0 0.0
    %1641 = vmatprep.subr.mxu0 0.0
    %1642 = vmatpush1.msra.mxu0 0.0
    %1643 = vmatprep.subr.mxu0 0.0
    %1644 = vmatpush1.msra.mxu0 0.0
    %1645 = vmatprep.subr.mxu0 0.0
    %1646 = vmatpush1.msra.mxu0 0.0
    %1647 = vmatprep.subr.mxu0 0.0
    %1648 = vmatpush1.msra.mxu0 0.0
    %1649 = vmatprep.subr.mxu0 0.0
    %1650 = vmatpush1.msra.mxu0 0.0
    %1651 = vmatprep.subr.mxu0 0.0
    %1652 = vmatpush1.msra.mxu0 0.0
    %1653 = vmatprep.subr.mxu0 0.0
    %1654 = vmatpush1.msra.mxu0 0.0
    %1655 = vmatprep.subr.mxu0 0.0
    %1656 = vmatpush1.msra.mxu0 0.0
    %1657 = vmatprep.subr.mxu0 0.0
    %1658 = vmatpush1.msra.mxu0 0.0
    %1659 = vmatprep.subr.mxu0 0.0
    %1660 = vmatpush1.msra.mxu0 0.0
    %1661 = vmatprep.subr.mxu0 0.0
    %1662 = vmatpush1.msra.mxu0 0.0
    %1663 = vmatprep.subr.mxu0 0.0
    %1664 = vmatpush1.msra.mxu0 0.0
    %1665 = vmatprep.subr.mxu0 0.0
    %1666 = vmatpush1.msra.mxu0 0.0
    %1667 = vmatprep.subr.mxu0 0.0
    %1668 = vmatpush1.msra.mxu0 0.0
    %1669 = vmatprep.subr.mxu0 0.0
    %1670 = vmatpush1.msra.mxu0 0.0
    %1671 = vmatprep.subr.mxu0 0.0
    %1672 = vmatpush1.msra.mxu0 0.0
    %1673 = vmatprep.subr.mxu0 0.0
    %1674 = vmatpush1.msra.mxu0 0.0
    %1675 = vmatprep.mubr.f32.mxu0 0.0
    %1676 = vmatmul.mubr.f32.gmra.mrb[0].mxu0 %v1609
    %v1677 = vpop.f32.mrb[0].mxu0
    %v1678 = vadd.f32 0.0, %v1677
    %v1679 = vpop.f32.mrb[0].mxu0
    %1680 = vdwg.mxu0
    %v1682 = vrot.slane %v1678, 6
    %1683 = vrot.lane.b32.xlu0 %v1682, 64
    %v1684 = vpop.permute.xlu0 %1683
    %v1686 = vadd.f32 %v115, %v1684
    %v1687 = vadd.f32 %v1686, %v337
    %v1688 = vxor.u32 %v1687, 2147483648
    %v1689 = vmul.f32 %v1688, 1.442695
    %v1690 = vpow.pop %v1689
    %v1691 = vadd.f32 %v1690, 1.0
    %v1692 = vrcp.pop %v1691
    %v1693 = vmul.f32 1.0, %v1692
    %v1694 = vtanh.pop %v1687
    %v1696 = vrot.slane %v1482, 2
    %v1698 = vmul.f32 %v1693, %v1696
    %1700 = vrot.lane.b32.xlu0 %v1694, 80
    %v1701 = vpop.permute.xlu0 %1700
    %v1703 = vmul.f32 %v1693, %v1701
    %1705 = vrot.lane.b32.xlu0 %v1703, 16
    %v1706 = vpop.permute.xlu0 %1705
    %v1708 = vadd.f32 %v1698, %v1706
    %v1709 = vtanh.pop %v1708
    %1711 = vrot.lane.b32.xlu0 %v1709, 16
    %v1712 = vpop.permute.xlu0 %1711
    %v1714 = vmul.f32 %v1693, %v1712
    %1716 = vrot.lane.b32.xlu0 %v1714, 32
    %v1717 = vpop.permute.xlu0 %1716
    %1719 = vst.msk [vmem:[#allocation3] sm:$0xc] %vm483, %v1717
    %v1720 = vrot.slane %v1600, 4
    %1721 = vrot.lane.b32.xlu0 %v1720, 96
    %v1722 = vpop.permute.xlu0 %1721
    %v1723 = vsel %vm41, %v1722, 0
    %1725 = vmatprep.subr.mxu0 0.0
    %1726 = vmatpush1.msra.mxu0 %v123
    %1727 = vmatprep.subr.mxu0 0.0
    %1728 = vmatpush1.msra.mxu0 %v124
    %1729 = vmatprep.subr.mxu0 0.0
    %1730 = vmatpush1.msra.mxu0 0.0
    %1731 = vmatprep.subr.mxu0 0.0
    %1732 = vmatpush1.msra.mxu0 0.0
    %1733 = vmatprep.subr.mxu0 0.0
    %1734 = vmatpush1.msra.mxu0 0.0
    %1735 = vmatprep.subr.mxu0 0.0
    %1736 = vmatpush1.msra.mxu0 0.0
    %1737 = vmatprep.subr.mxu0 0.0
    %1738 = vmatpush1.msra.mxu0 0.0
    %1739 = vmatprep.subr.mxu0 0.0
    %1740 = vmatpush1.msra.mxu0 0.0
    %1741 = vmatprep.subr.mxu0 0.0
    %1742 = vmatpush1.msra.mxu0 0.0
    %1743 = vmatprep.subr.mxu0 0.0
    %1744 = vmatpush1.msra.mxu0 0.0
    %1745 = vmatprep.subr.mxu0 0.0
    %1746 = vmatpush1.msra.mxu0 0.0
    %1747 = vmatprep.subr.mxu0 0.0
    %1748 = vmatpush1.msra.mxu0 0.0
    %1749 = vmatprep.subr.mxu0 0.0
    %1750 = vmatpush1.msra.mxu0 0.0
    %1751 = vmatprep.subr.mxu0 0.0
    %1752 = vmatpush1.msra.mxu0 0.0
    %1753 = vmatprep.subr.mxu0 0.0
    %1754 = vmatpush1.msra.mxu0 0.0
    %1755 = vmatprep.subr.mxu0 0.0
    %1756 = vmatpush1.msra.mxu0 0.0
    %1757 = vmatprep.subr.mxu0 0.0
    %1758 = vmatpush1.msra.mxu0 0.0
    %1759 = vmatprep.subr.mxu0 0.0
    %1760 = vmatpush1.msra.mxu0 0.0
    %1761 = vmatprep.subr.mxu0 0.0
    %1762 = vmatpush1.msra.mxu0 0.0
    %1763 = vmatprep.subr.mxu0 0.0
    %1764 = vmatpush1.msra.mxu0 0.0
    %1765 = vmatprep.subr.mxu0 0.0
    %1766 = vmatpush1.msra.mxu0 0.0
    %1767 = vmatprep.subr.mxu0 0.0
    %1768 = vmatpush1.msra.mxu0 0.0
    %1769 = vmatprep.subr.mxu0 0.0
    %1770 = vmatpush1.msra.mxu0 0.0
    %1771 = vmatprep.subr.mxu0 0.0
    %1772 = vmatpush1.msra.mxu0 0.0
    %1773 = vmatprep.subr.mxu0 0.0
    %1774 = vmatpush1.msra.mxu0 0.0
    %1775 = vmatprep.subr.mxu0 0.0
    %1776 = vmatpush1.msra.mxu0 0.0
    %1777 = vmatprep.subr.mxu0 0.0
    %1778 = vmatpush1.msra.mxu0 0.0
    %1779 = vmatprep.subr.mxu0 0.0
    %1780 = vmatpush1.msra.mxu0 0.0
    %1781 = vmatprep.subr.mxu0 0.0
    %1782 = vmatpush1.msra.mxu0 0.0
    %1783 = vmatprep.subr.mxu0 0.0
    %1784 = vmatpush1.msra.mxu0 0.0
    %1785 = vmatprep.subr.mxu0 0.0
    %1786 = vmatpush1.msra.mxu0 0.0
    %1787 = vmatprep.subr.mxu0 0.0
    %1788 = vmatpush1.msra.mxu0 0.0
    %1789 = vmatprep.mubr.f32.mxu0 0.0
    %1790 = vmatmul.mubr.f32.gmra.mrb[0].mxu0 %v1723
    %v1791 = vpop.f32.mrb[0].mxu0
    %v1792 = vadd.f32 0.0, %v1791
    %v1793 = vpop.f32.mrb[0].mxu0
    %1794 = vdwg.mxu0
    %v1796 = vrot.slane %v1792, 2
    %v1798 = vadd.f32 %v120, %v1796
    %v1799 = vadd.f32 %v1798, %v215
    %v1800 = vxor.u32 %v1799, 2147483648
    %v1801 = vmul.f32 %v1800, 1.442695
    %v1802 = vpow.pop %v1801
    %v1803 = vadd.f32 %v1802, 1.0
    %v1804 = vrcp.pop %v1803
    %v1805 = vmul.f32 1.0, %v1804
    %v1806 = vtanh.pop %v1799
    %v1808 = vrot.slane %v1594, 6
    %v1810 = vmul.f32 %v1805, %v1808
    %1812 = vrot.lane.b32.xlu0 %v1806, 80
    %v1813 = vpop.permute.xlu0 %1812
    %v1815 = vmul.f32 %v1805, %v1813
    %1817 = vrot.lane.b32.xlu0 %v1815, 16
    %v1818 = vpop.permute.xlu0 %1817
    %v1820 = vadd.f32 %v1810, %v1818
    %v1821 = vtanh.pop %v1820
    %1823 = vrot.lane.b32.xlu0 %v1821, 16
    %v1824 = vpop.permute.xlu0 %1823
    %v1826 = vmul.f32 %v1805, %v1824
    %1828 = vrot.lane.b32.xlu0 %v1826, 96
    %v1829 = vpop.permute.xlu0 %1828
    %1831 = vst.msk [vmem:[#allocation2 + $0x8] sm:$0xc0] %vm373, %v1829
    %v1832 = vrot.slane %v1714, 2
    %1833 = vrot.lane.b32.xlu0 %v1832, 32
    %v1834 = vpop.permute.xlu0 %1833
    %v1835 = vsel %vm41, %v1834, 0
    %1837 = vmatprep.subr.mxu0 0.0
    %1838 = vmatpush1.msra.mxu0 %v126
    %1839 = vmatprep.subr.mxu0 0.0
    %1840 = vmatpush1.msra.mxu0 %v127
    %1841 = vmatprep.subr.mxu0 0.0
    %1842 = vmatpush1.msra.mxu0 0.0
    %1843 = vmatprep.subr.mxu0 0.0
    %1844 = vmatpush1.msra.mxu0 0.0
    %1845 = vmatprep.subr.mxu0 0.0
    %1846 = vmatpush1.msra.mxu0 0.0
    %1847 = vmatprep.subr.mxu0 0.0
    %1848 = vmatpush1.msra.mxu0 0.0
    %1849 = vmatprep.subr.mxu0 0.0
    %1850 = vmatpush1.msra.mxu0 0.0
    %1851 = vmatprep.subr.mxu0 0.0
    %1852 = vmatpush1.msra.mxu0 0.0
    %1853 = vmatprep.subr.mxu0 0.0
    %1854 = vmatpush1.msra.mxu0 0.0
    %1855 = vmatprep.subr.mxu0 0.0
    %1856 = vmatpush1.msra.mxu0 0.0
    %1857 = vmatprep.subr.mxu0 0.0
    %1858 = vmatpush1.msra.mxu0 0.0
    %1859 = vmatprep.subr.mxu0 0.0
    %1860 = vmatpush1.msra.mxu0 0.0
    %1861 = vmatprep.subr.mxu0 0.0
    %1862 = vmatpush1.msra.mxu0 0.0
    %1863 = vmatprep.subr.mxu0 0.0
    %1864 = vmatpush1.msra.mxu0 0.0
    %1865 = vmatprep.subr.mxu0 0.0
    %1866 = vmatpush1.msra.mxu0 0.0
    %1867 = vmatprep.subr.mxu0 0.0
    %1868 = vmatpush1.msra.mxu0 0.0
    %1869 = vmatprep.subr.mxu0 0.0
    %1870 = vmatpush1.msra.mxu0 0.0
    %1871 = vmatprep.subr.mxu0 0.0
    %1872 = vmatpush1.msra.mxu0 0.0
    %1873 = vmatprep.subr.mxu0 0.0
    %1874 = vmatpush1.msra.mxu0 0.0
    %1875 = vmatprep.subr.mxu0 0.0
    %1876 = vmatpush1.msra.mxu0 0.0
    %1877 = vmatprep.subr.mxu0 0.0
    %1878 = vmatpush1.msra.mxu0 0.0
    %1879 = vmatprep.subr.mxu0 0.0
    %1880 = vmatpush1.msra.mxu0 0.0
    %1881 = vmatprep.subr.mxu0 0.0
    %1882 = vmatpush1.msra.mxu0 0.0
    %1883 = vmatprep.subr.mxu0 0.0
    %1884 = vmatpush1.msra.mxu0 0.0
    %1885 = vmatprep.subr.mxu0 0.0
    %1886 = vmatpush1.msra.mxu0 0.0
    %1887 = vmatprep.subr.mxu0 0.0
    %1888 = vmatpush1.msra.mxu0 0.0
    %1889 = vmatprep.subr.mxu0 0.0
    %1890 = vmatpush1.msra.mxu0 0.0
    %1891 = vmatprep.subr.mxu0 0.0
    %1892 = vmatpush1.msra.mxu0 0.0
    %1893 = vmatprep.subr.mxu0 0.0
    %1894 = vmatpush1.msra.mxu0 0.0
    %1895 = vmatprep.subr.mxu0 0.0
    %1896 = vmatpush1.msra.mxu0 0.0
    %1897 = vmatprep.subr.mxu0 0.0
    %1898 = vmatpush1.msra.mxu0 0.0
    %1899 = vmatprep.subr.mxu0 0.0
    %1900 = vmatpush1.msra.mxu0 0.0
    %1901 = vmatprep.mubr.f32.mxu0 0.0
    %1902 = vmatmul.mubr.f32.gmra.mrb[0].mxu0 %v1835
    %v1903 = vpop.f32.mrb[0].mxu0
    %v1904 = vadd.f32 0.0, %v1903
    %v1905 = vpop.f32.mrb[0].mxu0
    %1906 = vdwg.mxu0
    %1908 = vrot.lane.b32.xlu0 %v1904, 64
    %v1909 = vpop.permute.xlu0 %1908
    %v1911 = vadd.f32 %v115, %v1909
    %v1912 = vadd.f32 %v1911, %v337
    %v1913 = vxor.u32 %v1912, 2147483648
    %v1914 = vmul.f32 %v1913, 1.442695
    %v1915 = vpow.pop %v1914
    %v1916 = vadd.f32 %v1915, 1.0
    %v1917 = vrcp.pop %v1916
    %v1918 = vmul.f32 1.0, %v1917
    %v1919 = vtanh.pop %v1912
    %v1921 = vrot.slane %v1708, 2
    %v1923 = vmul.f32 %v1918, %v1921
    %1925 = vrot.lane.b32.xlu0 %v1919, 80
    %v1926 = vpop.permute.xlu0 %1925
    %v1928 = vmul.f32 %v1918, %v1926
    %1930 = vrot.lane.b32.xlu0 %v1928, 16
    %v1931 = vpop.permute.xlu0 %1930
    %v1933 = vadd.f32 %v1923, %v1931
    %v1934 = vtanh.pop %v1933
    %1936 = vrot.lane.b32.xlu0 %v1934, 16
    %v1937 = vpop.permute.xlu0 %1936
    %v1939 = vmul.f32 %v1918, %v1937
    %1941 = vrot.lane.b32.xlu0 %v1939, 32
    %v1942 = vpop.permute.xlu0 %1941
    %1944 = vst.msk [vmem:[#allocation3] sm:$0x3] %vm250, %v1942
    %v1945 = vld [vmem:[#allocation2] sm:$0xff]
    %v1946 = vld [vmem:[#allocation2 + $0x8] sm:$0xff]
    %v1947 = vld [vmem:[%s6] sm:$0xff]
    %v1948 = vld [vmem:[%s6 + $0x8] sm:$0xff]
    %v1949 = vld [vmem:[#allocation3] sm:$0xff]
    %v1950 = vld [vmem:[#allocation3 + $0x8] sm:$0xff]
    %s1951 = scalar_lea.vmem %s6, 16
    %v1952 = vld [vmem:[%s1951] sm:$0xff]
    %v1953 = vld [vmem:[%s1951 + $0x8] sm:$0xff]
    %v1955 = vsel %vm41, %v1949, 0
    %v1958 = vsel %vm41, %v1950, 0
    %1960 = vmatprep.subr.mxu0 0.0
    %1961 = vmatpush1.msra.mxu0 %v1952
    %1962 = vmatprep.subr.mxu0 0.0
    %1963 = vmatpush1.msra.mxu0 %v1953
    %1964 = vmatprep.subr.mxu0 0.0
    %1965 = vmatpush1.msra.mxu0 0.0
    %1966 = vmatprep.subr.mxu0 0.0
    %1967 = vmatpush1.msra.mxu0 0.0
    %1968 = vmatprep.subr.mxu0 0.0
    %1969 = vmatpush1.msra.mxu0 0.0
    %1970 = vmatprep.subr.mxu0 0.0
    %1971 = vmatpush1.msra.mxu0 0.0
    %1972 = vmatprep.subr.mxu0 0.0
    %1973 = vmatpush1.msra.mxu0 0.0
    %1974 = vmatprep.subr.mxu0 0.0
    %1975 = vmatpush1.msra.mxu0 0.0
    %1976 = vmatprep.subr.mxu0 0.0
    %1977 = vmatpush1.msra.mxu0 0.0
    %1978 = vmatprep.subr.mxu0 0.0
    %1979 = vmatpush1.msra.mxu0 0.0
    %1980 = vmatprep.subr.mxu0 0.0
    %1981 = vmatpush1.msra.mxu0 0.0
    %1982 = vmatprep.subr.mxu0 0.0
    %1983 = vmatpush1.msra.mxu0 0.0
    %1984 = vmatprep.subr.mxu0 0.0
    %1985 = vmatpush1.msra.mxu0 0.0
    %1986 = vmatprep.subr.mxu0 0.0
    %1987 = vmatpush1.msra.mxu0 0.0
    %1988 = vmatprep.subr.mxu0 0.0
    %1989 = vmatpush1.msra.mxu0 0.0
    %1990 = vmatprep.subr.mxu0 0.0
    %1991 = vmatpush1.msra.mxu0 0.0
    %1992 = vmatprep.subr.mxu0 0.0
    %1993 = vmatpush1.msra.mxu0 0.0
    %1994 = vmatprep.subr.mxu0 0.0
    %1995 = vmatpush1.msra.mxu0 0.0
    %1996 = vmatprep.subr.mxu0 0.0
    %1997 = vmatpush1.msra.mxu0 0.0
    %1998 = vmatprep.subr.mxu0 0.0
    %1999 = vmatpush1.msra.mxu0 0.0
    %2000 = vmatprep.subr.mxu0 0.0
    %2001 = vmatpush1.msra.mxu0 0.0
    %2002 = vmatprep.subr.mxu0 0.0
    %2003 = vmatpush1.msra.mxu0 0.0
    %2004 = vmatprep.subr.mxu0 0.0
    %2005 = vmatpush1.msra.mxu0 0.0
    %2006 = vmatprep.subr.mxu0 0.0
    %2007 = vmatpush1.msra.mxu0 0.0
    %2008 = vmatprep.subr.mxu0 0.0
    %2009 = vmatpush1.msra.mxu0 0.0
    %2010 = vmatprep.subr.mxu0 0.0
    %2011 = vmatpush1.msra.mxu0 0.0
    %2012 = vmatprep.subr.mxu0 0.0
    %2013 = vmatpush1.msra.mxu0 0.0
    %2014 = vmatprep.subr.mxu0 0.0
    %2015 = vmatpush1.msra.mxu0 0.0
    %2016 = vmatprep.subr.mxu0 0.0
    %2017 = vmatpush1.msra.mxu0 0.0
    %2018 = vmatprep.subr.mxu0 0.0
    %2019 = vmatpush1.msra.mxu0 0.0
    %2020 = vmatprep.subr.mxu0 0.0
    %2021 = vmatpush1.msra.mxu0 0.0
    %2022 = vmatprep.subr.mxu0 0.0
    %2023 = vmatpush1.msra.mxu0 0.0
    %2024 = vmatprep.mubr.f32.mxu0 0.0
    %2025 = vmatmul.mubr.f32.gmra.mrb[0].mxu0 %v1955
    %v2026 = vpop.f32.mrb[0].mxu0
    %v2027 = vadd.f32 0.0, %v2026
    %v2028 = vpop.f32.mrb[0].mxu0
    %2029 = vmatprep.mubr.f32.mxu0 0.0
    %2030 = vmatmul.mubr.f32.gmra.mrb[0].mxu0 %v1958
    %v2031 = vpop.f32.mrb[0].mxu0
    %v2032 = vadd.f32 0.0, %v2031
    %v2033 = vpop.f32.mrb[0].mxu0
    %2034 = vdwg.mxu0
    %v2036 = vsel %vm41, %v1945, 0
    %v2039 = vsel %vm41, %v1946, 0
    %2041 = vmatprep.subr.mxu0 0.0
    %2042 = vmatpush1.msra.mxu0 %v1947
    %2043 = vmatprep.subr.mxu0 0.0
    %2044 = vmatpush1.msra.mxu0 %v1948
    %2045 = vmatprep.subr.mxu0 0.0
    %2046 = vmatpush1.msra.mxu0 0.0
    %2047 = vmatprep.subr.mxu0 0.0
    %2048 = vmatpush1.msra.mxu0 0.0
    %2049 = vmatprep.subr.mxu0 0.0
    %2050 = vmatpush1.msra.mxu0 0.0
    %2051 = vmatprep.subr.mxu0 0.0
    %2052 = vmatpush1.msra.mxu0 0.0
    %2053 = vmatprep.subr.mxu0 0.0
    %2054 = vmatpush1.msra.mxu0 0.0
    %2055 = vmatprep.subr.mxu0 0.0
    %2056 = vmatpush1.msra.mxu0 0.0
    %2057 = vmatprep.subr.mxu0 0.0
    %2058 = vmatpush1.msra.mxu0 0.0
    %2059 = vmatprep.subr.mxu0 0.0
    %2060 = vmatpush1.msra.mxu0 0.0
    %2061 = vmatprep.subr.mxu0 0.0
    %2062 = vmatpush1.msra.mxu0 0.0
    %2063 = vmatprep.subr.mxu0 0.0
    %2064 = vmatpush1.msra.mxu0 0.0
    %2065 = vmatprep.subr.mxu0 0.0
    %2066 = vmatpush1.msra.mxu0 0.0
    %2067 = vmatprep.subr.mxu0 0.0
    %2068 = vmatpush1.msra.mxu0 0.0
    %2069 = vmatprep.subr.mxu0 0.0
    %2070 = vmatpush1.msra.mxu0 0.0
    %2071 = vmatprep.subr.mxu0 0.0
    %2072 = vmatpush1.msra.mxu0 0.0
    %2073 = vmatprep.subr.mxu0 0.0
    %2074 = vmatpush1.msra.mxu0 0.0
    %2075 = vmatprep.subr.mxu0 0.0
    %2076 = vmatpush1.msra.mxu0 0.0
    %2077 = vmatprep.subr.mxu0 0.0
    %2078 = vmatpush1.msra.mxu0 0.0
    %2079 = vmatprep.subr.mxu0 0.0
    %2080 = vmatpush1.msra.mxu0 0.0
    %2081 = vmatprep.subr.mxu0 0.0
    %2082 = vmatpush1.msra.mxu0 0.0
    %2083 = vmatprep.subr.mxu0 0.0
    %2084 = vmatpush1.msra.mxu0 0.0
    %2085 = vmatprep.subr.mxu0 0.0
    %2086 = vmatpush1.msra.mxu0 0.0
    %2087 = vmatprep.subr.mxu0 0.0
    %2088 = vmatpush1.msra.mxu0 0.0
    %2089 = vmatprep.subr.mxu0 0.0
    %2090 = vmatpush1.msra.mxu0 0.0
    %2091 = vmatprep.subr.mxu0 0.0
    %2092 = vmatpush1.msra.mxu0 0.0
    %2093 = vmatprep.subr.mxu0 0.0
    %2094 = vmatpush1.msra.mxu0 0.0
    %2095 = vmatprep.subr.mxu0 0.0
    %2096 = vmatpush1.msra.mxu0 0.0
    %2097 = vmatprep.subr.mxu0 0.0
    %2098 = vmatpush1.msra.mxu0 0.0
    %2099 = vmatprep.subr.mxu0 0.0
    %2100 = vmatpush1.msra.mxu0 0.0
    %2101 = vmatprep.subr.mxu0 0.0
    %2102 = vmatpush1.msra.mxu0 0.0
    %2103 = vmatprep.subr.mxu0 0.0
    %2104 = vmatpush1.msra.mxu0 0.0
    %2105 = vmatprep.mubr.f32.mxu0 0.0
    %2106 = vmatmul.mubr.f32.gmra.mrb[0].mxu0 %v2036
    %v2107 = vpop.f32.mrb[0].mxu0
    %v2108 = vadd.f32 %v2027, %v2107
    %v2109 = vpop.f32.mrb[0].mxu0
    %2110 = vmatprep.mubr.f32.mxu0 0.0
    %2111 = vmatmul.mubr.f32.gmra.mrb[0].mxu0 %v2039
    %v2112 = vpop.f32.mrb[0].mxu0
    %v2113 = vadd.f32 %v2032, %v2112
    %v2114 = vpop.f32.mrb[0].mxu0
    %2115 = vdwg.mxu0
    %v2116 = vld [vmem:[%s7] sm:$0x1]
    %v2118 = vlaneseq
    %v2119 = vshrl.u32 %v2118, 7
    %v2120 = vsub.s32 0, %v2119
    %v2121 = vrot.slane %v2116, %v2120
    %v2123 = vadd.f32 %v2108, %v2121
    %v2124 = vadd.f32 %v2113, %v2121
    %vm2125 = vcmask 58368
    %2126 = vst.msk [vmem:[#allocation4] sm:$0x3] %vm2125, %v2123
    %s2127 = scalar_lea.vmem [#allocation4], 2
    %vm2128 = vcmask 60418
    %2129 = vst.msk [vmem:[%s2127 - $0x2] sm:$0xc] %vm2128, %v2123
    %s2130 = scalar_lea.vmem [#allocation4], 4
    %vm2131 = vcmask 62468
    %2132 = vst.msk [vmem:[%s2130 - $0x4] sm:$0x30] %vm2131, %v2123
    %s2133 = scalar_lea.vmem [#allocation4], 6
    %vm2134 = vcmask 64518
    %2135 = vst.msk [vmem:[%s2133 - $0x6] sm:$0xc0] %vm2134, %v2123
    %s2136 = scalar_lea.vmem [#allocation4], 8
    %2137 = vst.msk [vmem:[%s2136] sm:$0x3] %vm2125, %v2124
    %s2138 = scalar_lea.vmem [#allocation4], 10
    %2139 = vst.msk [vmem:[%s2138 - $0x2] sm:$0xc] %vm2128, %v2124
    %s2140 = scalar_lea.vmem [#allocation4], 12
    %2141 = vst.msk [vmem:[%s2140 - $0x4] sm:$0x30] %vm2131, %v2124
    %s2142 = scalar_lea.vmem [#allocation4], 14
    %2143 = vst.msk [vmem:[%s2142 - $0x6] sm:$0xc0] %vm2134, %v2124
    %v2144 = vld [vmem:[%s8] sm:$0xff]
    %v2145 = vlaneseq
    %v2146 = vand.u32 %v2145, 127
    %v2147 = vld [vmem:[#allocation4] sm:$0x3]
    %2148 = vst.msk [vmem:[#allocation6] sm:$0x3] %vm2125, %v2147
    %2149 = vst.msk [vmem:[#allocation8] sm:$0x3] %vm2125, 0
    %v2152 = vunpack.c.l.s4 1966171168
    %v2153 = vunpack.c.0.s8 %v2152
    %v2154 = vlaneseq
    %v2155 = vshrl.u32 %v2154, 7
    %v2156 = vsub.s32 %v2153, %v2155
    %v2157 = vrot.slane %v2147, %v2156
    %v2158 = vcombine.high %v2157, %v2157
    %v2160 = vunpack.c.l.s4 1966171168
    %v2161 = vunpack.c.0.s8 %v2160
    %v2162 = vlaneseq
    %v2163 = vshrl.u32 %v2162, 7
    %v2164 = vsub.s32 %v2161, %v2163
    %v2165 = vrot.slane %v2157, %v2164
    %v2167 = vunpack.c.l.s4 1966171168
    %v2168 = vunpack.c.0.s8 %v2167
    %v2169 = vlaneseq
    %v2170 = vshrl.u32 %v2169, 7
    %v2171 = vsub.s32 %v2168, %v2170
    %v2172 = vrot.slane %v2158, %v2171
    %v2173 = vlaneseq
    %v2174 = vshrl.u32 %v2173, 7
    %v2175 = vsub.s32 0, %v2174
    %v2176 = vrot.slane %v2165, %v2175
    %v2177 = vlaneseq
    %v2178 = vshrl.u32 %v2177, 7
    %v2179 = vsub.s32 0, %v2178
    %v2180 = vrot.slane %v2172, %v2179
    %v2183 = vadd.f32 %v2176, %v2144
    %v2184 = vadd.f32 %v2180, %v2144
    %vm2185 = vcmask 64512
    %v2186 = vsel %vm2185, %v2183, -inf
    %2187 = vmax.xlane.f32.xlu0 %v2186
    %v2188 = vpop.xlane.xlu0 %2187
    %v2189 = vsel %vm2185, %v2184, -inf
    %2190 = vmax.xlane.f32.xlu0 %v2189
    %v2191 = vpop.xlane.xlu0 %2190
    %vm2192 = vcmp.eq.f32.partialorder %v2183, %v2188
    %vm2193 = vcmp.eq.f32.partialorder %v2184, %v2191
    %v2194 = vsel %vm2192, %v2146, 8
    %v2195 = vsel %vm2193, %v2146, 8
    %v2196 = vsel %vm2185, %v2194, 2147483647
    %v2197 = vand.u32 %v2196, 65535
    %v2198 = vshra.s32 %v2196, 16
    %v2199 = vcvt.s32.f32 %v2197
    %v2200 = vcvt.s32.f32 %v2198
    %2201 = vmin.xlane.f32.xlu0 %v2200
    %v2202 = vpop.xlane.xlu0 %2201
    %vm2203 = vcmp.eq.f32.partialorder %v2200, %v2202
    %v2204 = vsel %vm2203, %v2199, inf
    %2205 = vmin.xlane.f32.xlu0 %v2204
    %v2206 = vpop.xlane.xlu0 %2205
    %v2207 = vcvt.f32.s32 %v2206
    %v2208 = vcvt.f32.s32 %v2202
    %v2209 = vshll.u32 %v2208, 16
    %v2210 = vadd.s32 %v2209, %v2207
    %v2211 = vsel %vm2185, %v2195, 2147483647
    %v2212 = vand.u32 %v2211, 65535
    %v2213 = vshra.s32 %v2211, 16
    %v2214 = vcvt.s32.f32 %v2212
    %v2215 = vcvt.s32.f32 %v2213
    %2216 = vmin.xlane.f32.xlu0 %v2215
    %v2217 = vpop.xlane.xlu0 %2216
    %vm2218 = vcmp.eq.f32.partialorder %v2215, %v2217
    %v2219 = vsel %vm2218, %v2214, inf
    %2220 = vmin.xlane.f32.xlu0 %v2219
    %v2221 = vpop.xlane.xlu0 %2220
    %v2222 = vcvt.f32.s32 %v2221
    %v2223 = vcvt.f32.s32 %v2217
    %v2224 = vshll.u32 %v2223, 16
    %v2225 = vadd.s32 %v2224, %v2222
    %v2226 = vld [vmem:[%s2127] sm:$0x3]
    %v2229 = vlaneseq
    %v2230 = vshrl.u32 %v2229, 7
    %v2231 = vsub.s32 %v2146, %v2230
    %v2232 = vrot.slane %v2188, %v2231
    %v2233 = vlaneseq
    %v2234 = vshrl.u32 %v2233, 7
    %v2235 = vsub.s32 %v2146, %v2234
    %v2236 = vrot.slane %v2191, %v2235
    %vm2237 = vcmask 1041409
    %v2238 = vsel %vm2237, %v2236, %v2232
    %v2240 = vadd.f32 %v2226, %v2238
    %s2241 = scalar_lea.vmem [#allocation6], 2
    %2242 = vst.msk [vmem:[%s2241] sm:$0x3] %vm2125, %v2240
    %v2243 = vlaneseq
    %v2244 = vshrl.u32 %v2243, 7
    %v2245 = vsub.s32 %v2146, %v2244
    %v2246 = vrot.slane %v2210, %v2245
    %v2247 = vlaneseq
    %v2248 = vshrl.u32 %v2247, 7
    %v2249 = vsub.s32 %v2146, %v2248
    %v2250 = vrot.slane %v2225, %v2249
    %v2251 = vsel %vm2237, %v2250, %v2246
    %s2252 = scalar_lea.vmem [#allocation8], 2
    %2253 = vst.msk [vmem:[%s2252] sm:$0x3] %vm2125, %v2251
    %v2256 = vunpack.c.l.s4 1966171168
    %v2257 = vunpack.c.0.s8 %v2256
    %v2258 = vlaneseq
    %v2259 = vshrl.u32 %v2258, 7
    %v2260 = vsub.s32 %v2257, %v2259
    %v2261 = vrot.slane %v2240, %v2260
    %v2262 = vcombine.high %v2261, %v2261
    %v2264 = vunpack.c.l.s4 1966171168
    %v2265 = vunpack.c.0.s8 %v2264
    %v2266 = vlaneseq
    %v2267 = vshrl.u32 %v2266, 7
    %v2268 = vsub.s32 %v2265, %v2267
    %v2269 = vrot.slane %v2261, %v2268
    %v2271 = vunpack.c.l.s4 1966171168
    %v2272 = vunpack.c.0.s8 %v2271
    %v2273 = vlaneseq
    %v2274 = vshrl.u32 %v2273, 7
    %v2275 = vsub.s32 %v2272, %v2274
    %v2276 = vrot.slane %v2262, %v2275
    %v2277 = vlaneseq
    %v2278 = vshrl.u32 %v2277, 7
    %v2279 = vsub.s32 0, %v2278
    %v2280 = vrot.slane %v2269, %v2279
    %v2281 = vlaneseq
    %v2282 = vshrl.u32 %v2281, 7
    %v2283 = vsub.s32 0, %v2282
    %v2284 = vrot.slane %v2276, %v2283
    %v2287 = vadd.f32 %v2280, %v2144
    %v2288 = vadd.f32 %v2284, %v2144
    %v2289 = vsel %vm2185, %v2287, -inf
    %2290 = vmax.xlane.f32.xlu0 %v2289
    %v2291 = vpop.xlane.xlu0 %2290
    %v2292 = vsel %vm2185, %v2288, -inf
    %2293 = vmax.xlane.f32.xlu0 %v2292
    %v2294 = vpop.xlane.xlu0 %2293
    %vm2295 = vcmp.eq.f32.partialorder %v2287, %v2291
    %vm2296 = vcmp.eq.f32.partialorder %v2288, %v2294
    %v2297 = vsel %vm2295, %v2146, 8
    %v2298 = vsel %vm2296, %v2146, 8
    %v2299 = vsel %vm2185, %v2297, 2147483647
    %v2300 = vand.u32 %v2299, 65535
    %v2301 = vshra.s32 %v2299, 16
    %v2302 = vcvt.s32.f32 %v2300
    %v2303 = vcvt.s32.f32 %v2301
    %2304 = vmin.xlane.f32.xlu0 %v2303
    %v2305 = vpop.xlane.xlu0 %2304
    %vm2306 = vcmp.eq.f32.partialorder %v2303, %v2305
    %v2307 = vsel %vm2306, %v2302, inf
    %2308 = vmin.xlane.f32.xlu0 %v2307
    %v2309 = vpop.xlane.xlu0 %2308
    %v2310 = vcvt.f32.s32 %v2309
    %v2311 = vcvt.f32.s32 %v2305
    %v2312 = vshll.u32 %v2311, 16
    %v2313 = vadd.s32 %v2312, %v2310
    %v2314 = vsel %vm2185, %v2298, 2147483647
    %v2315 = vand.u32 %v2314, 65535
    %v2316 = vshra.s32 %v2314, 16
    %v2317 = vcvt.s32.f32 %v2315
    %v2318 = vcvt.s32.f32 %v2316
    %2319 = vmin.xlane.f32.xlu0 %v2318
    %v2320 = vpop.xlane.xlu0 %2319
    %vm2321 = vcmp.eq.f32.partialorder %v2318, %v2320
    %v2322 = vsel %vm2321, %v2317, inf
    %2323 = vmin.xlane.f32.xlu0 %v2322
    %v2324 = vpop.xlane.xlu0 %2323
    %v2325 = vcvt.f32.s32 %v2324
    %v2326 = vcvt.f32.s32 %v2320
    %v2327 = vshll.u32 %v2326, 16
    %v2328 = vadd.s32 %v2327, %v2325
    %v2329 = vld [vmem:[%s2130] sm:$0x3]
    %v2332 = vlaneseq
    %v2333 = vshrl.u32 %v2332, 7
    %v2334 = vsub.s32 %v2146, %v2333
    %v2335 = vrot.slane %v2291, %v2334
    %v2336 = vlaneseq
    %v2337 = vshrl.u32 %v2336, 7
    %v2338 = vsub.s32 %v2146, %v2337
    %v2339 = vrot.slane %v2294, %v2338
    %v2340 = vsel %vm2237, %v2339, %v2335
    %v2342 = vadd.f32 %v2329, %v2340
    %s2343 = scalar_lea.vmem [#allocation6], 4
    %2344 = vst.msk [vmem:[%s2343] sm:$0x3] %vm2125, %v2342
    %v2345 = vlaneseq
    %v2346 = vshrl.u32 %v2345, 7
    %v2347 = vsub.s32 %v2146, %v2346
    %v2348 = vrot.slane %v2313, %v2347
    %v2349 = vlaneseq
    %v2350 = vshrl.u32 %v2349, 7
    %v2351 = vsub.s32 %v2146, %v2350
    %v2352 = vrot.slane %v2328, %v2351
    %v2353 = vsel %vm2237, %v2352, %v2348
    %s2354 = scalar_lea.vmem [#allocation8], 4
    %2355 = vst.msk [vmem:[%s2354] sm:$0x3] %vm2125, %v2353
    %v2358 = vunpack.c.l.s4 1966171168
    %v2359 = vunpack.c.0.s8 %v2358
    %v2360 = vlaneseq
    %v2361 = vshrl.u32 %v2360, 7
    %v2362 = vsub.s32 %v2359, %v2361
    %v2363 = vrot.slane %v2342, %v2362
    %v2364 = vcombine.high %v2363, %v2363
    %v2366 = vunpack.c.l.s4 1966171168
    %v2367 = vunpack.c.0.s8 %v2366
    %v2368 = vlaneseq
    %v2369 = vshrl.u32 %v2368, 7
    %v2370 = vsub.s32 %v2367, %v2369
    %v2371 = vrot.slane %v2363, %v2370
    %v2373 = vunpack.c.l.s4 1966171168
    %v2374 = vunpack.c.0.s8 %v2373
    %v2375 = vlaneseq
    %v2376 = vshrl.u32 %v2375, 7
    %v2377 = vsub.s32 %v2374, %v2376
    %v2378 = vrot.slane %v2364, %v2377
    %v2379 = vlaneseq
    %v2380 = vshrl.u32 %v2379, 7
    %v2381 = vsub.s32 0, %v2380
    %v2382 = vrot.slane %v2371, %v2381
    %v2383 = vlaneseq
    %v2384 = vshrl.u32 %v2383, 7
    %v2385 = vsub.s32 0, %v2384
    %v2386 = vrot.slane %v2378, %v2385
    %v2389 = vadd.f32 %v2382, %v2144
    %v2390 = vadd.f32 %v2386, %v2144
    %v2391 = vsel %vm2185, %v2389, -inf
    %2392 = vmax.xlane.f32.xlu0 %v2391
    %v2393 = vpop.xlane.xlu0 %2392
    %v2394 = vsel %vm2185, %v2390, -inf
    %2395 = vmax.xlane.f32.xlu0 %v2394
    %v2396 = vpop.xlane.xlu0 %2395
    %vm2397 = vcmp.eq.f32.partialorder %v2389, %v2393
    %vm2398 = vcmp.eq.f32.partialorder %v2390, %v2396
    %v2399 = vsel %vm2397, %v2146, 8
    %v2400 = vsel %vm2398, %v2146, 8
    %v2401 = vsel %vm2185, %v2399, 2147483647
    %v2402 = vand.u32 %v2401, 65535
    %v2403 = vshra.s32 %v2401, 16
    %v2404 = vcvt.s32.f32 %v2402
    %v2405 = vcvt.s32.f32 %v2403
    %2406 = vmin.xlane.f32.xlu0 %v2405
    %v2407 = vpop.xlane.xlu0 %2406
    %vm2408 = vcmp.eq.f32.partialorder %v2405, %v2407
    %v2409 = vsel %vm2408, %v2404, inf
    %2410 = vmin.xlane.f32.xlu0 %v2409
    %v2411 = vpop.xlane.xlu0 %2410
    %v2412 = vcvt.f32.s32 %v2411
    %v2413 = vcvt.f32.s32 %v2407
    %v2414 = vshll.u32 %v2413, 16
    %v2415 = vadd.s32 %v2414, %v2412
    %v2416 = vsel %vm2185, %v2400, 2147483647
    %v2417 = vand.u32 %v2416, 65535
    %v2418 = vshra.s32 %v2416, 16
    %v2419 = vcvt.s32.f32 %v2417
    %v2420 = vcvt.s32.f32 %v2418
    %2421 = vmin.xlane.f32.xlu0 %v2420
    %v2422 = vpop.xlane.xlu0 %2421
    %vm2423 = vcmp.eq.f32.partialorder %v2420, %v2422
    %v2424 = vsel %vm2423, %v2419, inf
    %2425 = vmin.xlane.f32.xlu0 %v2424
    %v2426 = vpop.xlane.xlu0 %2425
    %v2427 = vcvt.f32.s32 %v2426
    %v2428 = vcvt.f32.s32 %v2422
    %v2429 = vshll.u32 %v2428, 16
    %v2430 = vadd.s32 %v2429, %v2427
    %v2431 = vld [vmem:[%s2133] sm:$0x3]
    %v2434 = vlaneseq
    %v2435 = vshrl.u32 %v2434, 7
    %v2436 = vsub.s32 %v2146, %v2435
    %v2437 = vrot.slane %v2393, %v2436
    %v2438 = vlaneseq
    %v2439 = vshrl.u32 %v2438, 7
    %v2440 = vsub.s32 %v2146, %v2439
    %v2441 = vrot.slane %v2396, %v2440
    %v2442 = vsel %vm2237, %v2441, %v2437
    %v2444 = vadd.f32 %v2431, %v2442
    %s2445 = scalar_lea.vmem [#allocation6], 6
    %2446 = vst.msk [vmem:[%s2445] sm:$0x3] %vm2125, %v2444
    %v2447 = vlaneseq
    %v2448 = vshrl.u32 %v2447, 7
    %v2449 = vsub.s32 %v2146, %v2448
    %v2450 = vrot.slane %v2415, %v2449
    %v2451 = vlaneseq
    %v2452 = vshrl.u32 %v2451, 7
    %v2453 = vsub.s32 %v2146, %v2452
    %v2454 = vrot.slane %v2430, %v2453
    %v2455 = vsel %vm2237, %v2454, %v2450
    %s2456 = scalar_lea.vmem [#allocation8], 6
    %2457 = vst.msk [vmem:[%s2456] sm:$0x3] %vm2125, %v2455
    %v2460 = vunpack.c.l.s4 1966171168
    %v2461 = vunpack.c.0.s8 %v2460
    %v2462 = vlaneseq
    %v2463 = vshrl.u32 %v2462, 7
    %v2464 = vsub.s32 %v2461, %v2463
    %v2465 = vrot.slane %v2444, %v2464
    %v2466 = vcombine.high %v2465, %v2465
    %v2468 = vunpack.c.l.s4 1966171168
    %v2469 = vunpack.c.0.s8 %v2468
    %v2470 = vlaneseq
    %v2471 = vshrl.u32 %v2470, 7
    %v2472 = vsub.s32 %v2469, %v2471
    %v2473 = vrot.slane %v2465, %v2472
    %v2475 = vunpack.c.l.s4 1966171168
    %v2476 = vunpack.c.0.s8 %v2475
    %v2477 = vlaneseq
    %v2478 = vshrl.u32 %v2477, 7
    %v2479 = vsub.s32 %v2476, %v2478
    %v2480 = vrot.slane %v2466, %v2479
    %v2481 = vlaneseq
    %v2482 = vshrl.u32 %v2481, 7
    %v2483 = vsub.s32 0, %v2482
    %v2484 = vrot.slane %v2473, %v2483
    %v2485 = vlaneseq
    %v2486 = vshrl.u32 %v2485, 7
    %v2487 = vsub.s32 0, %v2486
    %v2488 = vrot.slane %v2480, %v2487
    %v2491 = vadd.f32 %v2484, %v2144
    %v2492 = vadd.f32 %v2488, %v2144
    %v2493 = vsel %vm2185, %v2491, -inf
    %2494 = vmax.xlane.f32.xlu0 %v2493
    %v2495 = vpop.xlane.xlu0 %2494
    %v2496 = vsel %vm2185, %v2492, -inf
    %2497 = vmax.xlane.f32.xlu0 %v2496
    %v2498 = vpop.xlane.xlu0 %2497
    %vm2499 = vcmp.eq.f32.partialorder %v2491, %v2495
    %vm2500 = vcmp.eq.f32.partialorder %v2492, %v2498
    %v2501 = vsel %vm2499, %v2146, 8
    %v2502 = vsel %vm2500, %v2146, 8
    %v2503 = vsel %vm2185, %v2501, 2147483647
    %v2504 = vand.u32 %v2503, 65535
    %v2505 = vshra.s32 %v2503, 16
    %v2506 = vcvt.s32.f32 %v2504
    %v2507 = vcvt.s32.f32 %v2505
    %2508 = vmin.xlane.f32.xlu0 %v2507
    %v2509 = vpop.xlane.xlu0 %2508
    %vm2510 = vcmp.eq.f32.partialorder %v2507, %v2509
    %v2511 = vsel %vm2510, %v2506, inf
    %2512 = vmin.xlane.f32.xlu0 %v2511
    %v2513 = vpop.xlane.xlu0 %2512
    %v2514 = vcvt.f32.s32 %v2513
    %v2515 = vcvt.f32.s32 %v2509
    %v2516 = vshll.u32 %v2515, 16
    %v2517 = vadd.s32 %v2516, %v2514
    %v2518 = vsel %vm2185, %v2502, 2147483647
    %v2519 = vand.u32 %v2518, 65535
    %v2520 = vshra.s32 %v2518, 16
    %v2521 = vcvt.s32.f32 %v2519
    %v2522 = vcvt.s32.f32 %v2520
    %2523 = vmin.xlane.f32.xlu0 %v2522
    %v2524 = vpop.xlane.xlu0 %2523
    %vm2525 = vcmp.eq.f32.partialorder %v2522, %v2524
    %v2526 = vsel %vm2525, %v2521, inf
    %2527 = vmin.xlane.f32.xlu0 %v2526
    %v2528 = vpop.xlane.xlu0 %2527
    %v2529 = vcvt.f32.s32 %v2528
    %v2530 = vcvt.f32.s32 %v2524
    %v2531 = vshll.u32 %v2530, 16
    %v2532 = vadd.s32 %v2531, %v2529
    %v2533 = vld [vmem:[%s2136] sm:$0x3]
    %v2536 = vlaneseq
    %v2537 = vshrl.u32 %v2536, 7
    %v2538 = vsub.s32 %v2146, %v2537
    %v2539 = vrot.slane %v2495, %v2538
    %v2540 = vlaneseq
    %v2541 = vshrl.u32 %v2540, 7
    %v2542 = vsub.s32 %v2146, %v2541
    %v2543 = vrot.slane %v2498, %v2542
    %v2544 = vsel %vm2237, %v2543, %v2539
    %v2546 = vadd.f32 %v2533, %v2544
    %s2547 = scalar_lea.vmem [#allocation6], 8
    %2548 = vst.msk [vmem:[%s2547] sm:$0x3] %vm2125, %v2546
    %v2549 = vlaneseq
    %v2550 = vshrl.u32 %v2549, 7
    %v2551 = vsub.s32 %v2146, %v2550
    %v2552 = vrot.slane %v2517, %v2551
    %v2553 = vlaneseq
    %v2554 = vshrl.u32 %v2553, 7
    %v2555 = vsub.s32 %v2146, %v2554
    %v2556 = vrot.slane %v2532, %v2555
    %v2557 = vsel %vm2237, %v2556, %v2552
    %s2558 = scalar_lea.vmem [#allocation8], 8
    %2559 = vst.msk [vmem:[%s2558] sm:$0x3] %vm2125, %v2557
    %v2562 = vunpack.c.l.s4 1966171168
    %v2563 = vunpack.c.0.s8 %v2562
    %v2564 = vlaneseq
    %v2565 = vshrl.u32 %v2564, 7
    %v2566 = vsub.s32 %v2563, %v2565
    %v2567 = vrot.slane %v2546, %v2566
    %v2568 = vcombine.high %v2567, %v2567
    %v2570 = vunpack.c.l.s4 1966171168
    %v2571 = vunpack.c.0.s8 %v2570
    %v2572 = vlaneseq
    %v2573 = vshrl.u32 %v2572, 7
    %v2574 = vsub.s32 %v2571, %v2573
    %v2575 = vrot.slane %v2567, %v2574
    %v2577 = vunpack.c.l.s4 1966171168
    %v2578 = vunpack.c.0.s8 %v2577
    %v2579 = vlaneseq
    %v2580 = vshrl.u32 %v2579, 7
    %v2581 = vsub.s32 %v2578, %v2580
    %v2582 = vrot.slane %v2568, %v2581
    %v2583 = vlaneseq
    %v2584 = vshrl.u32 %v2583, 7
    %v2585 = vsub.s32 0, %v2584
    %v2586 = vrot.slane %v2575, %v2585
    %v2587 = vlaneseq
    %v2588 = vshrl.u32 %v2587, 7
    %v2589 = vsub.s32 0, %v2588
    %v2590 = vrot.slane %v2582, %v2589
    %v2593 = vadd.f32 %v2586, %v2144
    %v2594 = vadd.f32 %v2590, %v2144
    %v2595 = vsel %vm2185, %v2593, -inf
    %2596 = vmax.xlane.f32.xlu0 %v2595
    %v2597 = vpop.xlane.xlu0 %2596
    %v2598 = vsel %vm2185, %v2594, -inf
    %2599 = vmax.xlane.f32.xlu0 %v2598
    %v2600 = vpop.xlane.xlu0 %2599
    %vm2601 = vcmp.eq.f32.partialorder %v2593, %v2597
    %vm2602 = vcmp.eq.f32.partialorder %v2594, %v2600
    %v2603 = vsel %vm2601, %v2146, 8
    %v2604 = vsel %vm2602, %v2146, 8
    %v2605 = vsel %vm2185, %v2603, 2147483647
    %v2606 = vand.u32 %v2605, 65535
    %v2607 = vshra.s32 %v2605, 16
    %v2608 = vcvt.s32.f32 %v2606
    %v2609 = vcvt.s32.f32 %v2607
    %2610 = vmin.xlane.f32.xlu0 %v2609
    %v2611 = vpop.xlane.xlu0 %2610
    %vm2612 = vcmp.eq.f32.partialorder %v2609, %v2611
    %v2613 = vsel %vm2612, %v2608, inf
    %2614 = vmin.xlane.f32.xlu0 %v2613
    %v2615 = vpop.xlane.xlu0 %2614
    %v2616 = vcvt.f32.s32 %v2615
    %v2617 = vcvt.f32.s32 %v2611
    %v2618 = vshll.u32 %v2617, 16
    %v2619 = vadd.s32 %v2618, %v2616
    %v2620 = vsel %vm2185, %v2604, 2147483647
    %v2621 = vand.u32 %v2620, 65535
    %v2622 = vshra.s32 %v2620, 16
    %v2623 = vcvt.s32.f32 %v2621
    %v2624 = vcvt.s32.f32 %v2622
    %2625 = vmin.xlane.f32.xlu0 %v2624
    %v2626 = vpop.xlane.xlu0 %2625
    %vm2627 = vcmp.eq.f32.partialorder %v2624, %v2626
    %v2628 = vsel %vm2627, %v2623, inf
    %2629 = vmin.xlane.f32.xlu0 %v2628
    %v2630 = vpop.xlane.xlu0 %2629
    %v2631 = vcvt.f32.s32 %v2630
    %v2632 = vcvt.f32.s32 %v2626
    %v2633 = vshll.u32 %v2632, 16
    %v2634 = vadd.s32 %v2633, %v2631
    %v2635 = vld [vmem:[%s2138] sm:$0x3]
    %v2638 = vlaneseq
    %v2639 = vshrl.u32 %v2638, 7
    %v2640 = vsub.s32 %v2146, %v2639
    %v2641 = vrot.slane %v2597, %v2640
    %v2642 = vlaneseq
    %v2643 = vshrl.u32 %v2642, 7
    %v2644 = vsub.s32 %v2146, %v2643
    %v2645 = vrot.slane %v2600, %v2644
    %v2646 = vsel %vm2237, %v2645, %v2641
    %v2648 = vadd.f32 %v2635, %v2646
    %s2649 = scalar_lea.vmem [#allocation6], 10
    %2650 = vst.msk [vmem:[%s2649] sm:$0x3] %vm2125, %v2648
    %v2651 = vlaneseq
    %v2652 = vshrl.u32 %v2651, 7
    %v2653 = vsub.s32 %v2146, %v2652
    %v2654 = vrot.slane %v2619, %v2653
    %v2655 = vlaneseq
    %v2656 = vshrl.u32 %v2655, 7
    %v2657 = vsub.s32 %v2146, %v2656
    %v2658 = vrot.slane %v2634, %v2657
    %v2659 = vsel %vm2237, %v2658, %v2654
    %s2660 = scalar_lea.vmem [#allocation8], 10
    %2661 = vst.msk [vmem:[%s2660] sm:$0x3] %vm2125, %v2659
    %v2664 = vunpack.c.l.s4 1966171168
    %v2665 = vunpack.c.0.s8 %v2664
    %v2666 = vlaneseq
    %v2667 = vshrl.u32 %v2666, 7
    %v2668 = vsub.s32 %v2665, %v2667
    %v2669 = vrot.slane %v2648, %v2668
    %v2670 = vcombine.high %v2669, %v2669
    %v2672 = vunpack.c.l.s4 1966171168
    %v2673 = vunpack.c.0.s8 %v2672
    %v2674 = vlaneseq
    %v2675 = vshrl.u32 %v2674, 7
    %v2676 = vsub.s32 %v2673, %v2675
    %v2677 = vrot.slane %v2669, %v2676
    %v2679 = vunpack.c.l.s4 1966171168
    %v2680 = vunpack.c.0.s8 %v2679
    %v2681 = vlaneseq
    %v2682 = vshrl.u32 %v2681, 7
    %v2683 = vsub.s32 %v2680, %v2682
    %v2684 = vrot.slane %v2670, %v2683
    %v2685 = vlaneseq
    %v2686 = vshrl.u32 %v2685, 7
    %v2687 = vsub.s32 0, %v2686
    %v2688 = vrot.slane %v2677, %v2687
    %v2689 = vlaneseq
    %v2690 = vshrl.u32 %v2689, 7
    %v2691 = vsub.s32 0, %v2690
    %v2692 = vrot.slane %v2684, %v2691
    %v2695 = vadd.f32 %v2688, %v2144
    %v2696 = vadd.f32 %v2692, %v2144
    %v2697 = vsel %vm2185, %v2695, -inf
    %2698 = vmax.xlane.f32.xlu0 %v2697
    %v2699 = vpop.xlane.xlu0 %2698
    %v2700 = vsel %vm2185, %v2696, -inf
    %2701 = vmax.xlane.f32.xlu0 %v2700
    %v2702 = vpop.xlane.xlu0 %2701
    %vm2703 = vcmp.eq.f32.partialorder %v2695, %v2699
    %vm2704 = vcmp.eq.f32.partialorder %v2696, %v2702
    %v2705 = vsel %vm2703, %v2146, 8
    %v2706 = vsel %vm2704, %v2146, 8
    %v2707 = vsel %vm2185, %v2705, 2147483647
    %v2708 = vand.u32 %v2707, 65535
    %v2709 = vshra.s32 %v2707, 16
    %v2710 = vcvt.s32.f32 %v2708
    %v2711 = vcvt.s32.f32 %v2709
    %2712 = vmin.xlane.f32.xlu0 %v2711
    %v2713 = vpop.xlane.xlu0 %2712
    %vm2714 = vcmp.eq.f32.partialorder %v2711, %v2713
    %v2715 = vsel %vm2714, %v2710, inf
    %2716 = vmin.xlane.f32.xlu0 %v2715
    %v2717 = vpop.xlane.xlu0 %2716
    %v2718 = vcvt.f32.s32 %v2717
    %v2719 = vcvt.f32.s32 %v2713
    %v2720 = vshll.u32 %v2719, 16
    %v2721 = vadd.s32 %v2720, %v2718
    %v2722 = vsel %vm2185, %v2706, 2147483647
    %v2723 = vand.u32 %v2722, 65535
    %v2724 = vshra.s32 %v2722, 16
    %v2725 = vcvt.s32.f32 %v2723
    %v2726 = vcvt.s32.f32 %v2724
    %2727 = vmin.xlane.f32.xlu0 %v2726
    %v2728 = vpop.xlane.xlu0 %2727
    %vm2729 = vcmp.eq.f32.partialorder %v2726, %v2728
    %v2730 = vsel %vm2729, %v2725, inf
    %2731 = vmin.xlane.f32.xlu0 %v2730
    %v2732 = vpop.xlane.xlu0 %2731
    %v2733 = vcvt.f32.s32 %v2732
    %v2734 = vcvt.f32.s32 %v2728
    %v2735 = vshll.u32 %v2734, 16
    %v2736 = vadd.s32 %v2735, %v2733
    %v2737 = vld [vmem:[%s2140] sm:$0x3]
    %v2740 = vlaneseq
    %v2741 = vshrl.u32 %v2740, 7
    %v2742 = vsub.s32 %v2146, %v2741
    %v2743 = vrot.slane %v2699, %v2742
    %v2744 = vlaneseq
    %v2745 = vshrl.u32 %v2744, 7
    %v2746 = vsub.s32 %v2146, %v2745
    %v2747 = vrot.slane %v2702, %v2746
    %v2748 = vsel %vm2237, %v2747, %v2743
    %v2750 = vadd.f32 %v2737, %v2748
    %s2751 = scalar_lea.vmem [#allocation6], 12
    %2752 = vst.msk [vmem:[%s2751] sm:$0x3] %vm2125, %v2750
    %v2753 = vlaneseq
    %v2754 = vshrl.u32 %v2753, 7
    %v2755 = vsub.s32 %v2146, %v2754
    %v2756 = vrot.slane %v2721, %v2755
    %v2757 = vlaneseq
    %v2758 = vshrl.u32 %v2757, 7
    %v2759 = vsub.s32 %v2146, %v2758
    %v2760 = vrot.slane %v2736, %v2759
    %v2761 = vsel %vm2237, %v2760, %v2756
    %s2762 = scalar_lea.vmem [#allocation8], 12
    %2763 = vst.msk [vmem:[%s2762] sm:$0x3] %vm2125, %v2761
    %v2766 = vunpack.c.l.s4 1966171168
    %v2767 = vunpack.c.0.s8 %v2766
    %v2768 = vlaneseq
    %v2769 = vshrl.u32 %v2768, 7
    %v2770 = vsub.s32 %v2767, %v2769
    %v2771 = vrot.slane %v2750, %v2770
    %v2772 = vcombine.high %v2771, %v2771
    %v2774 = vunpack.c.l.s4 1966171168
    %v2775 = vunpack.c.0.s8 %v2774
    %v2776 = vlaneseq
    %v2777 = vshrl.u32 %v2776, 7
    %v2778 = vsub.s32 %v2775, %v2777
    %v2779 = vrot.slane %v2771, %v2778
    %v2781 = vunpack.c.l.s4 1966171168
    %v2782 = vunpack.c.0.s8 %v2781
    %v2783 = vlaneseq
    %v2784 = vshrl.u32 %v2783, 7
    %v2785 = vsub.s32 %v2782, %v2784
    %v2786 = vrot.slane %v2772, %v2785
    %v2787 = vlaneseq
    %v2788 = vshrl.u32 %v2787, 7
    %v2789 = vsub.s32 0, %v2788
    %v2790 = vrot.slane %v2779, %v2789
    %v2791 = vlaneseq
    %v2792 = vshrl.u32 %v2791, 7
    %v2793 = vsub.s32 0, %v2792
    %v2794 = vrot.slane %v2786, %v2793
    %v2797 = vadd.f32 %v2790, %v2144
    %v2798 = vadd.f32 %v2794, %v2144
    %v2799 = vsel %vm2185, %v2797, -inf
    %2800 = vmax.xlane.f32.xlu0 %v2799
    %v2801 = vpop.xlane.xlu0 %2800
    %v2802 = vsel %vm2185, %v2798, -inf
    %2803 = vmax.xlane.f32.xlu0 %v2802
    %v2804 = vpop.xlane.xlu0 %2803
    %vm2805 = vcmp.eq.f32.partialorder %v2797, %v2801
    %vm2806 = vcmp.eq.f32.partialorder %v2798, %v2804
    %v2807 = vsel %vm2805, %v2146, 8
    %v2808 = vsel %vm2806, %v2146, 8
    %v2809 = vsel %vm2185, %v2807, 2147483647
    %v2810 = vand.u32 %v2809, 65535
    %v2811 = vshra.s32 %v2809, 16
    %v2812 = vcvt.s32.f32 %v2810
    %v2813 = vcvt.s32.f32 %v2811
    %2814 = vmin.xlane.f32.xlu0 %v2813
    %v2815 = vpop.xlane.xlu0 %2814
    %vm2816 = vcmp.eq.f32.partialorder %v2813, %v2815
    %v2817 = vsel %vm2816, %v2812, inf
    %2818 = vmin.xlane.f32.xlu0 %v2817
    %v2819 = vpop.xlane.xlu0 %2818
    %v2820 = vcvt.f32.s32 %v2819
    %v2821 = vcvt.f32.s32 %v2815
    %v2822 = vshll.u32 %v2821, 16
    %v2823 = vadd.s32 %v2822, %v2820
    %v2824 = vsel %vm2185, %v2808, 2147483647
    %v2825 = vand.u32 %v2824, 65535
    %v2826 = vshra.s32 %v2824, 16
    %v2827 = vcvt.s32.f32 %v2825
    %v2828 = vcvt.s32.f32 %v2826
    %2829 = vmin.xlane.f32.xlu0 %v2828
    %v2830 = vpop.xlane.xlu0 %2829
    %vm2831 = vcmp.eq.f32.partialorder %v2828, %v2830
    %v2832 = vsel %vm2831, %v2827, inf
    %2833 = vmin.xlane.f32.xlu0 %v2832
    %v2834 = vpop.xlane.xlu0 %2833
    %v2835 = vcvt.f32.s32 %v2834
    %v2836 = vcvt.f32.s32 %v2830
    %v2837 = vshll.u32 %v2836, 16
    %v2838 = vadd.s32 %v2837, %v2835
    %v2839 = vld [vmem:[%s2142] sm:$0x3]
    %v2842 = vlaneseq
    %v2843 = vshrl.u32 %v2842, 7
    %v2844 = vsub.s32 %v2146, %v2843
    %v2845 = vrot.slane %v2801, %v2844
    %v2846 = vlaneseq
    %v2847 = vshrl.u32 %v2846, 7
    %v2848 = vsub.s32 %v2146, %v2847
    %v2849 = vrot.slane %v2804, %v2848
    %v2850 = vsel %vm2237, %v2849, %v2845
    %v2852 = vadd.f32 %v2839, %v2850
    %s2853 = scalar_lea.vmem [#allocation6], 14
    %2854 = vst.msk [vmem:[%s2853] sm:$0x3] %vm2125, %v2852
    %v2855 = vlaneseq
    %v2856 = vshrl.u32 %v2855, 7
    %v2857 = vsub.s32 %v2146, %v2856
    %v2858 = vrot.slane %v2823, %v2857
    %v2859 = vlaneseq
    %v2860 = vshrl.u32 %v2859, 7
    %v2861 = vsub.s32 %v2146, %v2860
    %v2862 = vrot.slane %v2838, %v2861
    %v2863 = vsel %vm2237, %v2862, %v2858
    %s2864 = scalar_lea.vmem [#allocation8], 14
    %2865 = vst.msk [vmem:[%s2864] sm:$0x3] %vm2125, %v2863
    // Predicated region
    $region38: #{_device_forward.1} parent=1 // pred_check
      _
    $region39: #{_device_forward.1} parent=1 // pred_check_branch
      %2867 = sbr.rel (0) target = $region41
    $region40: #{_device_forward.1} parent=1 // pred_region
      %s2869 = ssub.s32 256, 256
      %2870 = vsyncadd [#allocation5], %s2869
      %s2871 = sshll.u32 [#allocation4], 4
      %s2872 = int_to_ptr.vmem [resolvable:$true] %s2871
      %2877 = dma.vmem_to_hbm [thread:$0]  %s2872, 256, %s9, [#allocation5], 32, 32, 2
    $region41: #{_device_forward.1} parent=1 // pred_fallthru
      _
    // Predicated region
    $region42: #{_device_forward.1} parent=1 // pred_check
      _
    $region43: #{_device_forward.1} parent=1 // pred_check_branch
      %2879 = sbr.rel (0) target = $region45
    $region44: #{_device_forward.1} parent=1 // pred_region
      %s2881 = ssub.s32 256, 256
      %2882 = vsyncadd [#allocation7], %s2881
      %s2883 = sshll.u32 [#allocation6], 4
      %s2884 = int_to_ptr.vmem [resolvable:$true] %s2883
      %2889 = dma.vmem_to_hbm [thread:$0]  %s2884, 256, %s10, [#allocation7], 32, 32, 2
    $region45: #{_device_forward.1} parent=1 // pred_fallthru
      _
    // Predicated region
    $region46: #{_device_forward.1} parent=1 // pred_check
      _
    $region47: #{_device_forward.1} parent=1 // pred_check_branch
      %2891 = sbr.rel (0) target = $region49
    $region48: #{_device_forward.1} parent=1 // pred_region
      %s2893 = ssub.s32 256, 256
      %2894 = vsyncadd [#allocation7], %s2893
      %s2895 = sshll.u32 [#allocation8], 4
      %s2896 = int_to_ptr.vmem [resolvable:$true] %s2895
      %2901 = dma.vmem_to_hbm [thread:$0]  %s2896, 256, %s11, [#allocation7], 32, 32, 2
    $region49: #{_device_forward.1} parent=1 // pred_fallthru
      _
    // Predicated region
    $region50: #{_device_forward.1} parent=1 // pred_check
      _
    $region51: #{_device_forward.1} parent=1 // pred_check_branch
      %2903 = sbr.rel (0) target = $region53
    $region52: #{_device_forward.1} parent=1 // pred_region
      %2904 = dma.done [#allocation5], 256
    $region53: #{_device_forward.1} parent=1 // pred_fallthru
      _
    // Predicated region
    $region54: #{_device_forward.1} parent=1 // pred_check
      _
    $region55: #{_device_forward.1} parent=1 // pred_check_branch
      %2906 = sbr.rel (0) target = $region57
    $region56: #{_device_forward.1} parent=1 // pred_region
      %2907 = dma.done [#allocation7], 256
    $region57: #{_device_forward.1} parent=1 // pred_fallthru
      _
    // Predicated region
    $region58: #{_device_forward.1} parent=1 // pred_check
      _
    $region59: #{_device_forward.1} parent=1 // pred_check_branch
      %2909 = sbr.rel (0) target = $region61
    $region60: #{_device_forward.1} parent=1 // pred_region
      %2910 = dma.done [#allocation7], 256
    $region61: #{_device_forward.1} parent=1 // pred_fallthru
      _
    %2911 = vsyncpa [#allocation5], 1
    %2912 = vsyncpa [#allocation7], 1

</llo_original>
